<compile_context>
chip_gen: v5e
topology: v5e:2x2
jax: 0.10.0
libtpu: 0.0.40
codegen_flags: <defaults>
</compile_context>

<pallas_src>
import functools

import numpy as np
import jax
import jax.numpy as jnp
from jax import lax
from jax.experimental import pallas as pl
from jax.experimental.pallas import tpu as pltpu


_T_TILE_MAX = 256
_NEG_SLOPE = 0.1
_VMEM_LIMIT = 48 * 1024 * 1024   # headroom under v7x's 64 MiB physical VMEM


def _round_up(v, m):
    return ((v + m - 1) // m) * m


# ------------------------------ Pallas kernels ------------------------------ #

def _make_conv_kernel(*, K, S, Lp, T_tile, G, cin_g, cout_t,
                      apply_act, slope, unroll_k):
    """Grouped Conv1d tile kernel: K shifted matmuls accumulated in f32.

    Refs per grid step:
      x_ref: (1, 1, G, S*Lp, cin_g)  bf16 phase-split input window
      w_ref: (K, 1, G, cin_g, cout_t) bf16 weights (resident across t tiles)
      b_ref: (1, 1, G*cout_t)         f32 bias
      o_ref: (1, T_tile, G*cout_t)    f32 lane-dense output tile
    """

    def tap(x_ref, w_ref, g, k, row0):
        xk = x_ref[0, 0, g, pl.ds(row0, T_tile), :]       # (T_tile, cin_g) bf16
        wk = w_ref[k, 0, g]                               # (cin_g, cout_t) bf16
        if cin_g == 1:
            # contraction dim 1: do it on the VPU (broadcast outer product)
            return xk.astype(jnp.float32) * wk.astype(jnp.float32)
        return jnp.dot(xk, wk, preferred_element_type=jnp.float32)

    def kernel(x_ref, w_ref, b_ref, o_ref):
        for g in range(G):
            if unroll_k:
                acc = tap(x_ref, w_ref, g, 0, 0)
                for k in range(1, K):
                    row0 = (k % S) * Lp + k // S
                    acc = acc + tap(x_ref, w_ref, g, k, row0)
            else:
                def body(k, acc, _g=g):
                    row0 = (k % S) * Lp + k // S
                    return acc + tap(x_ref, w_ref, _g, k, row0)
                acc = lax.fori_loop(
                    0, K, body, jnp.zeros((T_tile, cout_t), jnp.float32))
            sl = slice(g * cout_t, (g + 1) * cout_t)
            y = acc + b_ref[0, :, sl]                      # bias in f32
            if apply_act:
                y = jnp.where(y > 0, y, slope * y)         # leaky_relu in f32
            o_ref[0, :, sl] = y.astype(o_ref.dtype)

    return kernel


def _post_kernel(x_ref, w_ref, b_ref, o_ref, *, K, T_tile):
    """conv_post (1024 -> 1, K taps) with time on the lane axis.

    x_ref: (1, 1, C, Lp) bf16; w_ref: (K, C) bf16; b_ref: (1, 1) f32;
    o_ref: (1, 1, 1, T_tile) f32 (lane-dense along time).
    """
    acc = jnp.zeros((1, T_tile), jnp.float32)
    for k in range(K):
        acc = acc + jnp.dot(w_ref[k][None, :],
                            x_ref[0, 0, :, k:k + T_tile],
                            preferred_element_type=jnp.float32)
    o_ref[0, 0] = acc + b_ref[...]


# ------------------------------- JAX wrappers -------------------------------- #

def _build_windows(x_bf16, *, K, S, P, T_tile, n_t, Lp, groups):
    """Phase-split tile windows (tiny halo, ~1.0-1.3x input bytes, bf16).

    xw[b, ti, g, p*Lp + j, c] == x_padded[b, ti*T_tile*S + j*S + p, g*cin_g + c]
    so inside the kernel tap k is the CONTIGUOUS row slice starting at
    (k % S) * Lp + k // S -- no strided vector loads are needed.
    """
    B, T, Cin = x_bf16.shape
    cin_g = Cin // groups
    need = (n_t - 1) * T_tile * S + Lp * S
    pad_tail = max(0, need - (T + 2 * P))
    xp = jnp.pad(x_bf16, ((0, 0), (P, P + pad_tail), (0, 0)))
    idx = (np.arange(n_t)[:, None, None] * (T_tile * S)
           + np.arange(S)[None, :, None]
           + np.arange(Lp)[None, None, :] * S).reshape(-1).astype(np.int32)
    xw = jnp.take(xp, jnp.asarray(idx), axis=1)            # (B, n_t*S*Lp, Cin)
    xw = xw.reshape(B, n_t, S * Lp, groups, cin_g)
    return xw.transpose(0, 1, 3, 2, 4)                     # (B, n_t, G, S*Lp, cin_g)


def conv1d_leaky_pallas(x, W, b, *, stride, padding, groups,
                        apply_act=True, negative_slope=_NEG_SLOPE):
    """Grouped Conv1d (+ optional LeakyReLU) on channels-last activations.

    x: (B, T, Cin) f32.  W: (Cout, Cin//groups, K) (PyTorch layout).  b: (Cout,)
    Returns (B, T_out, Cout) f32.
    """
    B, T, Cin = x.shape
    Cout, cin_g, K = W.shape
    S, P, G = stride, padding, groups
    assert Cin == cin_g * G
    cout_g = Cout // G
    T_out = (T + 2 * P - K) // S + 1

    T_tile = min(_T_TILE_MAX, _round_up(T_out, 8))
    n_t = -(-T_out // T_tile)
    T_out_pad = n_t * T_tile
    Lp = T_tile + (K - 1) // S

    # Cout blocking: grouped layers emit the full lane-dense Cout per step
    # (their weights are small); the big ungrouped layer is blocked at 256.
    cout_t = cout_g if G > 1 else (Cout if Cout <= 256 else 256)
    Wn = G * cout_t
    assert Cout % Wn == 0
    n_ct = Cout // Wn

    xw = _build_windows(x.astype(jnp.bfloat16), K=K, S=S, P=P,
                        T_tile=T_tile, n_t=n_t, Lp=Lp, groups=G)

    if G > 1:
        wk = W.reshape(G, cout_g, cin_g, K).transpose(3, 0, 2, 1)[:, None]
    else:
        wk = (W.transpose(2, 1, 0).reshape(K, Cin, n_ct, cout_t)
              .transpose(0, 2, 1, 3)[:, :, None])
    wk = wk.astype(jnp.bfloat16)                 # (K, n_ct, G, cin_g, cout_t)
    bk = b.reshape(n_ct, 1, Wn).astype(jnp.float32)

    kern = _make_conv_kernel(K=K, S=S, Lp=Lp, T_tile=T_tile, G=G, cin_g=cin_g,
                             cout_t=cout_t, apply_act=apply_act,
                             slope=negative_slope, unroll_k=(G * K <= 64))

    out = pl.pallas_call(
        kern,
        out_shape=jax.ShapeDtypeStruct((B, T_out_pad, Cout), jnp.float32),
        grid=(B, n_ct, n_t),                     # t innermost: weights stay resident
        in_specs=[
            pl.BlockSpec((1, 1, G, S * Lp, cin_g),
                         lambda bi, ni, ti: (bi, ti, 0, 0, 0)),
            pl.BlockSpec((K, 1, G, cin_g, cout_t),
                         lambda bi, ni, ti: (0, ni, 0, 0, 0)),
            pl.BlockSpec((1, 1, Wn), lambda bi, ni, ti: (ni, 0, 0)),
        ],
        out_specs=pl.BlockSpec((1, T_tile, Wn),
                               lambda bi, ni, ti: (bi, ti, ni)),
        compiler_params=pltpu.CompilerParams(
            dimension_semantics=("parallel", "parallel", "parallel"),
            vmem_limit_bytes=_VMEM_LIMIT),
    )(xw, wk, bk)
    return out[:, :T_out, :]


def conv_post_pallas(x, W, b, *, padding):
    """conv_post: (B, T, 1024) -> (B, T_out) with time on the lane axis."""
    B, T, C = x.shape
    _, _, K = W.shape
    P = padding
    T_out = T + 2 * P - K + 1
    T_tile = min(512, _round_up(T_out, 128))
    n_t = -(-T_out // T_tile)
    Lp = T_tile + K - 1
    need = (n_t - 1) * T_tile + Lp
    pad_tail = max(0, need - (T + 2 * P))
    xp = jnp.pad(x.astype(jnp.bfloat16), ((0, 0), (P, P + pad_tail), (0, 0)))
    idx = (np.arange(n_t)[:, None] * T_tile
           + np.arange(Lp)[None, :]).reshape(-1).astype(np.int32)
    xw = jnp.take(xp, jnp.asarray(idx), axis=1).reshape(B, n_t, Lp, C)
    xw = xw.transpose(0, 1, 3, 2)                          # (B, n_t, C, Lp)
    wk = W[0].transpose(1, 0).astype(jnp.bfloat16)         # (K, C)
    bk = b.reshape(1, 1).astype(jnp.float32)

    out = pl.pallas_call(
        functools.partial(_post_kernel, K=K, T_tile=T_tile),
        out_shape=jax.ShapeDtypeStruct((B, n_t, 1, T_tile), jnp.float32),
        grid=(B, n_t),
        in_specs=[
            pl.BlockSpec((1, 1, C, Lp), lambda bi, ti: (bi, ti, 0, 0)),
            pl.BlockSpec((K, C), lambda bi, ti: (0, 0)),
            pl.BlockSpec((1, 1), lambda bi, ti: (0, 0)),
        ],
        out_specs=pl.BlockSpec((1, 1, 1, T_tile), lambda bi, ti: (bi, ti, 0, 0)),
        compiler_params=pltpu.CompilerParams(
            dimension_semantics=("parallel", "parallel"),
            vmem_limit_bytes=_VMEM_LIMIT),
    )(xw, wk, bk)
    return out.reshape(B, n_t * T_tile)[:, :T_out]


# -------------------------------- model setup -------------------------------- #

_CONV_SPECS = [
    # (cin, cout, kernel, stride, groups, padding)
    (1, 128, 15, 1, 1, 7),
    (128, 128, 41, 2, 4, 20),
    (128, 256, 41, 2, 16, 20),
    (256, 512, 41, 4, 16, 20),
    (512, 1024, 41, 4, 16, 20),
    (1024, 1024, 41, 1, 16, 20),
    (1024, 1024, 5, 1, 1, 2),
]
_POST_SPEC = (1024, 1, 3, 1, 1, 1)


def init_params(key):
    # weight_norm at default init has g == ||v||, so the effective forward
    # weight equals the raw conv weight initialized here.
    def make_layer(k, spec):
        cin, cout, ks, stride, groups, pad = spec
        kw, kb = jax.random.split(k)
        fan_in = (cin // groups) * ks
        bound = 1.0 / np.sqrt(fan_in)
        w = jax.random.uniform(kw, (cout, cin // groups, ks), jnp.float32,
                               -bound, bound)
        b = jax.random.uniform(kb, (cout,), jnp.float32, -bound, bound)
        return {"w": w, "b": b, "stride": stride, "padding": pad, "groups": groups}

    keys = jax.random.split(key, len(_CONV_SPECS) + 1)
    convs = [make_layer(keys[i], s) for i, s in enumerate(_CONV_SPECS)]
    post = make_layer(keys[-1], _POST_SPEC)
    return {"convs": convs, "conv_post": post}


def scale_discriminator_forward(params, x_ncl):
    # x_ncl: (B, 1, T) like PyTorch. Returns (scores (B, T_final), fmap in NCL).
    x = jnp.transpose(x_ncl, (0, 2, 1)).astype(jnp.float32)   # (B, T, 1)
    feats = []
    for layer in params["convs"]:
        x = conv1d_leaky_pallas(x, layer["w"], layer["b"],
                                stride=layer["stride"], padding=layer["padding"],
                                groups=layer["groups"], apply_act=True,
                                negative_slope=_NEG_SLOPE)
        feats.append(x)
    post = params["conv_post"]
    score = conv_post_pallas(x, post["w"], post["b"], padding=post["padding"])
    # The conv chain stays channels-last; NCL fmap transposes are deferred here.
    fmap = [jnp.transpose(f, (0, 2, 1)) for f in feats]
    fmap.append(score[:, None, :])
    return score, fmap


# ----------------------------- pure-JAX reference ----------------------------- #

def _ref_forward(params, x_ncl):
    def q(a):   # mirror the kernels' bf16 MXU inputs (f32 accumulation in both)
        return a.astype(jnp.bfloat16).astype(jnp.float32)

    def conv(x, layer):
        y = lax.conv_general_dilated(
            q(x), q(layer["w"]), (layer["stride"],),
            [(layer["padding"], layer["padding"])],
            dimension_numbers=("NCH", "OIH", "NCH"),
            feature_group_count=layer["groups"],
            precision=lax.Precision.HIGHEST)
        return y + layer["b"][None, :, None]

    fmap = []
    x = x_ncl.astype(jnp.float32)
    for layer in params["convs"]:
        x = conv(x, layer)
        x = jnp.where(x > 0, x, 0.1 * x)
        fmap.append(x)
    x = conv(x, params["conv_post"])
    fmap.append(x)
    return x.reshape(x.shape[0], -1), fmap


# ------------------------------------ main ------------------------------------ #

if __name__ == "__main__":
    key = jax.random.PRNGKey(0)
    key, kx = jax.random.split(key)
    params = init_params(key)

    B, T = 2, 512
    x = jax.random.normal(kx, (B, 1, T), jnp.float32)   # PyTorch NCL (batch, 1, time)

    out, fmap = scale_discriminator_forward(params, x)
    out = jax.block_until_ready(out)
    fmap = [jax.block_until_ready(f) for f in fmap]

    ref_out, ref_fmap = _ref_forward(params, x)
    assert out.shape == ref_out.shape
    np.testing.assert_allclose(np.asarray(out), np.asarray(ref_out),
                               rtol=2e-2, atol=2e-4)
    for a, r in zip(fmap, ref_fmap):
        assert a.shape == r.shape
        np.testing.assert_allclose(np.asarray(a), np.asarray(r),
                                   rtol=2e-2, atol=2e-4)

    print("KERNEL_OK")
</pallas_src>

<mosaic_0001>
module attributes {stable_mosaic.version = 11 : i64} {
  func.func @kernel(%arg0: i32, %arg1: i32, %arg2: i32, %arg3: memref<1x1x1x270x1xbf16, #tpu.memory_space<vmem>>, %arg4: memref<15x1x1x1x128xbf16, #tpu.memory_space<vmem>>, %arg5: memref<1x1x128xf32, #tpu.memory_space<vmem>>, %arg6: memref<1x256x128xf32, #tpu.memory_space<vmem>>) attributes {dimension_semantics = [#tpu.dimension_semantics<parallel>, #tpu.dimension_semantics<parallel>, #tpu.dimension_semantics<parallel>], iteration_bounds = array<i64: 2, 1, 2>, scalar_prefetch = 0 : i64, scratch_operands = 0 : i64, tpu.core_type = #tpu.core_type<tc>, window_params = [{transform_indices = @transform_0, window_bounds = array<i64: 1, 1, 1, 270, 1>}, {transform_indices = @transform_1, window_bounds = array<i64: 15, 1, 1, 1, 128>}, {transform_indices = @transform_2, window_bounds = array<i64: 1, 1, 128>}, {transform_indices = @transform_3, window_bounds = array<i64: 1, 256, 128>}]} {
    %c0 = arith.constant 0 : index
    %c0_0 = arith.constant 0 : index
    %c0_1 = arith.constant 0 : index
    %c0_2 = arith.constant 0 : index
    %c0_3 = arith.constant 0 : index
    %0 = vector.load %arg3[%c0, %c0_0, %c0_1, %c0_2, %c0_3] : memref<1x1x1x270x1xbf16, #tpu.memory_space<vmem>>, vector<1x1x1x256x1xbf16>
    %1 = vector.shape_cast %0 : vector<1x1x1x256x1xbf16> to vector<256x1xbf16>
    %c0_4 = arith.constant 0 : index
    %c0_5 = arith.constant 0 : index
    %c0_6 = arith.constant 0 : index
    %c0_7 = arith.constant 0 : index
    %c0_8 = arith.constant 0 : index
    %2 = vector.load %arg4[%c0_4, %c0_5, %c0_6, %c0_7, %c0_8] : memref<15x1x1x1x128xbf16, #tpu.memory_space<vmem>>, vector<1x1x1x1x128xbf16>
    %3 = vector.shape_cast %2 : vector<1x1x1x1x128xbf16> to vector<1x128xbf16>
    %4 = arith.extf %1 : vector<256x1xbf16> to vector<256x1xf32>
    %5 = arith.extf %3 : vector<1x128xbf16> to vector<1x128xf32>
    %6 = vector.broadcast %4 : vector<256x1xf32> to vector<256x128xf32>
    %7 = vector.broadcast %5 : vector<1x128xf32> to vector<256x128xf32>
    %8 = arith.mulf %6, %7 : vector<256x128xf32>
    %c0_9 = arith.constant 0 : index
    %c0_10 = arith.constant 0 : index
    %c0_11 = arith.constant 0 : index
    %c1 = arith.constant 1 : index
    %c0_12 = arith.constant 0 : index
    %9 = vector.load %arg3[%c0_9, %c0_10, %c0_11, %c1, %c0_12] : memref<1x1x1x270x1xbf16, #tpu.memory_space<vmem>>, vector<1x1x1x256x1xbf16>
    %10 = vector.shape_cast %9 : vector<1x1x1x256x1xbf16> to vector<256x1xbf16>
    %c1_13 = arith.constant 1 : index
    %c0_14 = arith.constant 0 : index
    %c0_15 = arith.constant 0 : index
    %c0_16 = arith.constant 0 : index
    %c0_17 = arith.constant 0 : index
    %11 = vector.load %arg4[%c1_13, %c0_14, %c0_15, %c0_16, %c0_17] : memref<15x1x1x1x128xbf16, #tpu.memory_space<vmem>>, vector<1x1x1x1x128xbf16>
    %12 = vector.shape_cast %11 : vector<1x1x1x1x128xbf16> to vector<1x128xbf16>
    %13 = arith.extf %10 : vector<256x1xbf16> to vector<256x1xf32>
    %14 = arith.extf %12 : vector<1x128xbf16> to vector<1x128xf32>
    %15 = vector.broadcast %13 : vector<256x1xf32> to vector<256x128xf32>
    %16 = vector.broadcast %14 : vector<1x128xf32> to vector<256x128xf32>
    %17 = arith.mulf %15, %16 : vector<256x128xf32>
    %18 = arith.addf %8, %17 : vector<256x128xf32>
    %c0_18 = arith.constant 0 : index
    %c0_19 = arith.constant 0 : index
    %c0_20 = arith.constant 0 : index
    %c2 = arith.constant 2 : index
    %c0_21 = arith.constant 0 : index
    %19 = vector.load %arg3[%c0_18, %c0_19, %c0_20, %c2, %c0_21] : memref<1x1x1x270x1xbf16, #tpu.memory_space<vmem>>, vector<1x1x1x256x1xbf16>
    %20 = vector.shape_cast %19 : vector<1x1x1x256x1xbf16> to vector<256x1xbf16>
    %c2_22 = arith.constant 2 : index
    %c0_23 = arith.constant 0 : index
    %c0_24 = arith.constant 0 : index
    %c0_25 = arith.constant 0 : index
    %c0_26 = arith.constant 0 : index
    %21 = vector.load %arg4[%c2_22, %c0_23, %c0_24, %c0_25, %c0_26] : memref<15x1x1x1x128xbf16, #tpu.memory_space<vmem>>, vector<1x1x1x1x128xbf16>
    %22 = vector.shape_cast %21 : vector<1x1x1x1x128xbf16> to vector<1x128xbf16>
    %23 = arith.extf %20 : vector<256x1xbf16> to vector<256x1xf32>
    %24 = arith.extf %22 : vector<1x128xbf16> to vector<1x128xf32>
    %25 = vector.broadcast %23 : vector<256x1xf32> to vector<256x128xf32>
    %26 = vector.broadcast %24 : vector<1x128xf32> to vector<256x128xf32>
    %27 = arith.mulf %25, %26 : vector<256x128xf32>
    %28 = arith.addf %18, %27 : vector<256x128xf32>
    %c0_27 = arith.constant 0 : index
    %c0_28 = arith.constant 0 : index
    %c0_29 = arith.constant 0 : index
    %c3 = arith.constant 3 : index
    %c0_30 = arith.constant 0 : index
    %29 = vector.load %arg3[%c0_27, %c0_28, %c0_29, %c3, %c0_30] : memref<1x1x1x270x1xbf16, #tpu.memory_space<vmem>>, vector<1x1x1x256x1xbf16>
    %30 = vector.shape_cast %29 : vector<1x1x1x256x1xbf16> to vector<256x1xbf16>
    %c3_31 = arith.constant 3 : index
    %c0_32 = arith.constant 0 : index
    %c0_33 = arith.constant 0 : index
    %c0_34 = arith.constant 0 : index
    %c0_35 = arith.constant 0 : index
    %31 = vector.load %arg4[%c3_31, %c0_32, %c0_33, %c0_34, %c0_35] : memref<15x1x1x1x128xbf16, #tpu.memory_space<vmem>>, vector<1x1x1x1x128xbf16>
    %32 = vector.shape_cast %31 : vector<1x1x1x1x128xbf16> to vector<1x128xbf16>
    %33 = arith.extf %30 : vector<256x1xbf16> to vector<256x1xf32>
    %34 = arith.extf %32 : vector<1x128xbf16> to vector<1x128xf32>
    %35 = vector.broadcast %33 : vector<256x1xf32> to vector<256x128xf32>
    %36 = vector.broadcast %34 : vector<1x128xf32> to vector<256x128xf32>
    %37 = arith.mulf %35, %36 : vector<256x128xf32>
    %38 = arith.addf %28, %37 : vector<256x128xf32>
    %c0_36 = arith.constant 0 : index
    %c0_37 = arith.constant 0 : index
    %c0_38 = arith.constant 0 : index
    %c4 = arith.constant 4 : index
    %c0_39 = arith.constant 0 : index
    %39 = vector.load %arg3[%c0_36, %c0_37, %c0_38, %c4, %c0_39] : memref<1x1x1x270x1xbf16, #tpu.memory_space<vmem>>, vector<1x1x1x256x1xbf16>
    %40 = vector.shape_cast %39 : vector<1x1x1x256x1xbf16> to vector<256x1xbf16>
    %c4_40 = arith.constant 4 : index
    %c0_41 = arith.constant 0 : index
    %c0_42 = arith.constant 0 : index
    %c0_43 = arith.constant 0 : index
    %c0_44 = arith.constant 0 : index
    %41 = vector.load %arg4[%c4_40, %c0_41, %c0_42, %c0_43, %c0_44] : memref<15x1x1x1x128xbf16, #tpu.memory_space<vmem>>, vector<1x1x1x1x128xbf16>
    %42 = vector.shape_cast %41 : vector<1x1x1x1x128xbf16> to vector<1x128xbf16>
    %43 = arith.extf %40 : vector<256x1xbf16> to vector<256x1xf32>
    %44 = arith.extf %42 : vector<1x128xbf16> to vector<1x128xf32>
    %45 = vector.broadcast %43 : vector<256x1xf32> to vector<256x128xf32>
    %46 = vector.broadcast %44 : vector<1x128xf32> to vector<256x128xf32>
    %47 = arith.mulf %45, %46 : vector<256x128xf32>
    %48 = arith.addf %38, %47 : vector<256x128xf32>
    %c0_45 = arith.constant 0 : index
    %c0_46 = arith.constant 0 : index
    %c0_47 = arith.constant 0 : index
    %c5 = arith.constant 5 : index
    %c0_48 = arith.constant 0 : index
    %49 = vector.load %arg3[%c0_45, %c0_46, %c0_47, %c5, %c0_48] : memref<1x1x1x270x1xbf16, #tpu.memory_space<vmem>>, vector<1x1x1x256x1xbf16>
    %50 = vector.shape_cast %49 : vector<1x1x1x256x1xbf16> to vector<256x1xbf16>
    %c5_49 = arith.constant 5 : index
    %c0_50 = arith.constant 0 : index
    %c0_51 = arith.constant 0 : index
    %c0_52 = arith.constant 0 : index
    %c0_53 = arith.constant 0 : index
    %51 = vector.load %arg4[%c5_49, %c0_50, %c0_51, %c0_52, %c0_53] : memref<15x1x1x1x128xbf16, #tpu.memory_space<vmem>>, vector<1x1x1x1x128xbf16>
    %52 = vector.shape_cast %51 : vector<1x1x1x1x128xbf16> to vector<1x128xbf16>
    %53 = arith.extf %50 : vector<256x1xbf16> to vector<256x1xf32>
    %54 = arith.extf %52 : vector<1x128xbf16> to vector<1x128xf32>
    %55 = vector.broadcast %53 : vector<256x1xf32> to vector<256x128xf32>
    %56 = vector.broadcast %54 : vector<1x128xf32> to vector<256x128xf32>
    %57 = arith.mulf %55, %56 : vector<256x128xf32>
    %58 = arith.addf %48, %57 : vector<256x128xf32>
    %c0_54 = arith.constant 0 : index
    %c0_55 = arith.constant 0 : index
    %c0_56 = arith.constant 0 : index
    %c6 = arith.constant 6 : index
    %c0_57 = arith.constant 0 : index
    %59 = vector.load %arg3[%c0_54, %c0_55, %c0_56, %c6, %c0_57] : memref<1x1x1x270x1xbf16, #tpu.memory_space<vmem>>, vector<1x1x1x256x1xbf16>
    %60 = vector.shape_cast %59 : vector<1x1x1x256x1xbf16> to vector<256x1xbf16>
    %c6_58 = arith.constant 6 : index
    %c0_59 = arith.constant 0 : index
    %c0_60 = arith.constant 0 : index
    %c0_61 = arith.constant 0 : index
    %c0_62 = arith.constant 0 : index
    %61 = vector.load %arg4[%c6_58, %c0_59, %c0_60, %c0_61, %c0_62] : memref<15x1x1x1x128xbf16, #tpu.memory_space<vmem>>, vector<1x1x1x1x128xbf16>
    %62 = vector.shape_cast %61 : vector<1x1x1x1x128xbf16> to vector<1x128xbf16>
    %63 = arith.extf %60 : vector<256x1xbf16> to vector<256x1xf32>
    %64 = arith.extf %62 : vector<1x128xbf16> to vector<1x128xf32>
    %65 = vector.broadcast %63 : vector<256x1xf32> to vector<256x128xf32>
    %66 = vector.broadcast %64 : vector<1x128xf32> to vector<256x128xf32>
    %67 = arith.mulf %65, %66 : vector<256x128xf32>
    %68 = arith.addf %58, %67 : vector<256x128xf32>
    %c0_63 = arith.constant 0 : index
    %c0_64 = arith.constant 0 : index
    %c0_65 = arith.constant 0 : index
    %c7 = arith.constant 7 : index
    %c0_66 = arith.constant 0 : index
    %69 = vector.load %arg3[%c0_63, %c0_64, %c0_65, %c7, %c0_66] : memref<1x1x1x270x1xbf16, #tpu.memory_space<vmem>>, vector<1x1x1x256x1xbf16>
    %70 = vector.shape_cast %69 : vector<1x1x1x256x1xbf16> to vector<256x1xbf16>
    %c7_67 = arith.constant 7 : index
    %c0_68 = arith.constant 0 : index
    %c0_69 = arith.constant 0 : index
    %c0_70 = arith.constant 0 : index
    %c0_71 = arith.constant 0 : index
    %71 = vector.load %arg4[%c7_67, %c0_68, %c0_69, %c0_70, %c0_71] : memref<15x1x1x1x128xbf16, #tpu.memory_space<vmem>>, vector<1x1x1x1x128xbf16>
    %72 = vector.shape_cast %71 : vector<1x1x1x1x128xbf16> to vector<1x128xbf16>
    %73 = arith.extf %70 : vector<256x1xbf16> to vector<256x1xf32>
    %74 = arith.extf %72 : vector<1x128xbf16> to vector<1x128xf32>
    %75 = vector.broadcast %73 : vector<256x1xf32> to vector<256x128xf32>
    %76 = vector.broadcast %74 : vector<1x128xf32> to vector<256x128xf32>
    %77 = arith.mulf %75, %76 : vector<256x128xf32>
    %78 = arith.addf %68, %77 : vector<256x128xf32>
    %c0_72 = arith.constant 0 : index
    %c0_73 = arith.constant 0 : index
    %c0_74 = arith.constant 0 : index
    %c8 = arith.constant 8 : index
    %c0_75 = arith.constant 0 : index
    %79 = vector.load %arg3[%c0_72, %c0_73, %c0_74, %c8, %c0_75] : memref<1x1x1x270x1xbf16, #tpu.memory_space<vmem>>, vector<1x1x1x256x1xbf16>
    %80 = vector.shape_cast %79 : vector<1x1x1x256x1xbf16> to vector<256x1xbf16>
    %c8_76 = arith.constant 8 : index
    %c0_77 = arith.constant 0 : index
    %c0_78 = arith.constant 0 : index
    %c0_79 = arith.constant 0 : index
    %c0_80 = arith.constant 0 : index
    %81 = vector.load %arg4[%c8_76, %c0_77, %c0_78, %c0_79, %c0_80] : memref<15x1x1x1x128xbf16, #tpu.memory_space<vmem>>, vector<1x1x1x1x128xbf16>
    %82 = vector.shape_cast %81 : vector<1x1x1x1x128xbf16> to vector<1x128xbf16>
    %83 = arith.extf %80 : vector<256x1xbf16> to vector<256x1xf32>
    %84 = arith.extf %82 : vector<1x128xbf16> to vector<1x128xf32>
    %85 = vector.broadcast %83 : vector<256x1xf32> to vector<256x128xf32>
    %86 = vector.broadcast %84 : vector<1x128xf32> to vector<256x128xf32>
    %87 = arith.mulf %85, %86 : vector<256x128xf32>
    %88 = arith.addf %78, %87 : vector<256x128xf32>
    %c0_81 = arith.constant 0 : index
    %c0_82 = arith.constant 0 : index
    %c0_83 = arith.constant 0 : index
    %c9 = arith.constant 9 : index
    %c0_84 = arith.constant 0 : index
    %89 = vector.load %arg3[%c0_81, %c0_82, %c0_83, %c9, %c0_84] : memref<1x1x1x270x1xbf16, #tpu.memory_space<vmem>>, vector<1x1x1x256x1xbf16>
    %90 = vector.shape_cast %89 : vector<1x1x1x256x1xbf16> to vector<256x1xbf16>
    %c9_85 = arith.constant 9 : index
    %c0_86 = arith.constant 0 : index
    %c0_87 = arith.constant 0 : index
    %c0_88 = arith.constant 0 : index
    %c0_89 = arith.constant 0 : index
    %91 = vector.load %arg4[%c9_85, %c0_86, %c0_87, %c0_88, %c0_89] : memref<15x1x1x1x128xbf16, #tpu.memory_space<vmem>>, vector<1x1x1x1x128xbf16>
    %92 = vector.shape_cast %91 : vector<1x1x1x1x128xbf16> to vector<1x128xbf16>
    %93 = arith.extf %90 : vector<256x1xbf16> to vector<256x1xf32>
    %94 = arith.extf %92 : vector<1x128xbf16> to vector<1x128xf32>
    %95 = vector.broadcast %93 : vector<256x1xf32> to vector<256x128xf32>
    %96 = vector.broadcast %94 : vector<1x128xf32> to vector<256x128xf32>
    %97 = arith.mulf %95, %96 : vector<256x128xf32>
    %98 = arith.addf %88, %97 : vector<256x128xf32>
    %c0_90 = arith.constant 0 : index
    %c0_91 = arith.constant 0 : index
    %c0_92 = arith.constant 0 : index
    %c10 = arith.constant 10 : index
    %c0_93 = arith.constant 0 : index
    %99 = vector.load %arg3[%c0_90, %c0_91, %c0_92, %c10, %c0_93] : memref<1x1x1x270x1xbf16, #tpu.memory_space<vmem>>, vector<1x1x1x256x1xbf16>
    %100 = vector.shape_cast %99 : vector<1x1x1x256x1xbf16> to vector<256x1xbf16>
    %c10_94 = arith.constant 10 : index
    %c0_95 = arith.constant 0 : index
    %c0_96 = arith.constant 0 : index
    %c0_97 = arith.constant 0 : index
    %c0_98 = arith.constant 0 : index
    %101 = vector.load %arg4[%c10_94, %c0_95, %c0_96, %c0_97, %c0_98] : memref<15x1x1x1x128xbf16, #tpu.memory_space<vmem>>, vector<1x1x1x1x128xbf16>
    %102 = vector.shape_cast %101 : vector<1x1x1x1x128xbf16> to vector<1x128xbf16>
    %103 = arith.extf %100 : vector<256x1xbf16> to vector<256x1xf32>
    %104 = arith.extf %102 : vector<1x128xbf16> to vector<1x128xf32>
    %105 = vector.broadcast %103 : vector<256x1xf32> to vector<256x128xf32>
    %106 = vector.broadcast %104 : vector<1x128xf32> to vector<256x128xf32>
    %107 = arith.mulf %105, %106 : vector<256x128xf32>
    %108 = arith.addf %98, %107 : vector<256x128xf32>
    %c0_99 = arith.constant 0 : index
    %c0_100 = arith.constant 0 : index
    %c0_101 = arith.constant 0 : index
    %c11 = arith.constant 11 : index
    %c0_102 = arith.constant 0 : index
    %109 = vector.load %arg3[%c0_99, %c0_100, %c0_101, %c11, %c0_102] : memref<1x1x1x270x1xbf16, #tpu.memory_space<vmem>>, vector<1x1x1x256x1xbf16>
    %110 = vector.shape_cast %109 : vector<1x1x1x256x1xbf16> to vector<256x1xbf16>
    %c11_103 = arith.constant 11 : index
    %c0_104 = arith.constant 0 : index
    %c0_105 = arith.constant 0 : index
    %c0_106 = arith.constant 0 : index
    %c0_107 = arith.constant 0 : index
    %111 = vector.load %arg4[%c11_103, %c0_104, %c0_105, %c0_106, %c0_107] : memref<15x1x1x1x128xbf16, #tpu.memory_space<vmem>>, vector<1x1x1x1x128xbf16>
    %112 = vector.shape_cast %111 : vector<1x1x1x1x128xbf16> to vector<1x128xbf16>
    %113 = arith.extf %110 : vector<256x1xbf16> to vector<256x1xf32>
    %114 = arith.extf %112 : vector<1x128xbf16> to vector<1x128xf32>
    %115 = vector.broadcast %113 : vector<256x1xf32> to vector<256x128xf32>
    %116 = vector.broadcast %114 : vector<1x128xf32> to vector<256x128xf32>
    %117 = arith.mulf %115, %116 : vector<256x128xf32>
    %118 = arith.addf %108, %117 : vector<256x128xf32>
    %c0_108 = arith.constant 0 : index
    %c0_109 = arith.constant 0 : index
    %c0_110 = arith.constant 0 : index
    %c12 = arith.constant 12 : index
    %c0_111 = arith.constant 0 : index
    %119 = vector.load %arg3[%c0_108, %c0_109, %c0_110, %c12, %c0_111] : memref<1x1x1x270x1xbf16, #tpu.memory_space<vmem>>, vector<1x1x1x256x1xbf16>
    %120 = vector.shape_cast %119 : vector<1x1x1x256x1xbf16> to vector<256x1xbf16>
    %c12_112 = arith.constant 12 : index
    %c0_113 = arith.constant 0 : index
    %c0_114 = arith.constant 0 : index
    %c0_115 = arith.constant 0 : index
    %c0_116 = arith.constant 0 : index
    %121 = vector.load %arg4[%c12_112, %c0_113, %c0_114, %c0_115, %c0_116] : memref<15x1x1x1x128xbf16, #tpu.memory_space<vmem>>, vector<1x1x1x1x128xbf16>
    %122 = vector.shape_cast %121 : vector<1x1x1x1x128xbf16> to vector<1x128xbf16>
    %123 = arith.extf %120 : vector<256x1xbf16> to vector<256x1xf32>
    %124 = arith.extf %122 : vector<1x128xbf16> to vector<1x128xf32>
    %125 = vector.broadcast %123 : vector<256x1xf32> to vector<256x128xf32>
    %126 = vector.broadcast %124 : vector<1x128xf32> to vector<256x128xf32>
    %127 = arith.mulf %125, %126 : vector<256x128xf32>
    %128 = arith.addf %118, %127 : vector<256x128xf32>
    %c0_117 = arith.constant 0 : index
    %c0_118 = arith.constant 0 : index
    %c0_119 = arith.constant 0 : index
    %c13 = arith.constant 13 : index
    %c0_120 = arith.constant 0 : index
    %129 = vector.load %arg3[%c0_117, %c0_118, %c0_119, %c13, %c0_120] : memref<1x1x1x270x1xbf16, #tpu.memory_space<vmem>>, vector<1x1x1x256x1xbf16>
    %130 = vector.shape_cast %129 : vector<1x1x1x256x1xbf16> to vector<256x1xbf16>
    %c13_121 = arith.constant 13 : index
    %c0_122 = arith.constant 0 : index
    %c0_123 = arith.constant 0 : index
    %c0_124 = arith.constant 0 : index
    %c0_125 = arith.constant 0 : index
    %131 = vector.load %arg4[%c13_121, %c0_122, %c0_123, %c0_124, %c0_125] : memref<15x1x1x1x128xbf16, #tpu.memory_space<vmem>>, vector<1x1x1x1x128xbf16>
    %132 = vector.shape_cast %131 : vector<1x1x1x1x128xbf16> to vector<1x128xbf16>
    %133 = arith.extf %130 : vector<256x1xbf16> to vector<256x1xf32>
    %134 = arith.extf %132 : vector<1x128xbf16> to vector<1x128xf32>
    %135 = vector.broadcast %133 : vector<256x1xf32> to vector<256x128xf32>
    %136 = vector.broadcast %134 : vector<1x128xf32> to vector<256x128xf32>
    %137 = arith.mulf %135, %136 : vector<256x128xf32>
    %138 = arith.addf %128, %137 : vector<256x128xf32>
    %c0_126 = arith.constant 0 : index
    %c0_127 = arith.constant 0 : index
    %c0_128 = arith.constant 0 : index
    %c14 = arith.constant 14 : index
    %c0_129 = arith.constant 0 : index
    %139 = vector.load %arg3[%c0_126, %c0_127, %c0_128, %c14, %c0_129] : memref<1x1x1x270x1xbf16, #tpu.memory_space<vmem>>, vector<1x1x1x256x1xbf16>
    %140 = vector.shape_cast %139 : vector<1x1x1x256x1xbf16> to vector<256x1xbf16>
    %c14_130 = arith.constant 14 : index
    %c0_131 = arith.constant 0 : index
    %c0_132 = arith.constant 0 : index
    %c0_133 = arith.constant 0 : index
    %c0_134 = arith.constant 0 : index
    %141 = vector.load %arg4[%c14_130, %c0_131, %c0_132, %c0_133, %c0_134] : memref<15x1x1x1x128xbf16, #tpu.memory_space<vmem>>, vector<1x1x1x1x128xbf16>
    %142 = vector.shape_cast %141 : vector<1x1x1x1x128xbf16> to vector<1x128xbf16>
    %143 = arith.extf %140 : vector<256x1xbf16> to vector<256x1xf32>
    %144 = arith.extf %142 : vector<1x128xbf16> to vector<1x128xf32>
    %145 = vector.broadcast %143 : vector<256x1xf32> to vector<256x128xf32>
    %146 = vector.broadcast %144 : vector<1x128xf32> to vector<256x128xf32>
    %147 = arith.mulf %145, %146 : vector<256x128xf32>
    %148 = arith.addf %138, %147 : vector<256x128xf32>
    %c0_135 = arith.constant 0 : index
    %c0_136 = arith.constant 0 : index
    %c0_137 = arith.constant 0 : index
    %149 = vector.load %arg5[%c0_135, %c0_136, %c0_137] : memref<1x1x128xf32, #tpu.memory_space<vmem>>, vector<1x1x128xf32>
    %150 = vector.shape_cast %149 : vector<1x1x128xf32> to vector<1x128xf32>
    %151 = vector.broadcast %150 : vector<1x128xf32> to vector<256x128xf32>
    %152 = arith.addf %148, %151 : vector<256x128xf32>
    %cst = arith.constant 0.000000e+00 : f32
    %153 = vector.broadcast %cst : f32 to vector<256x128xf32>
    %154 = arith.cmpf ogt, %152, %153 : vector<256x128xf32>
    %cst_138 = arith.constant 1.000000e-01 : f32
    %155 = vector.broadcast %cst_138 : f32 to vector<256x128xf32>
    %156 = arith.mulf %155, %152 : vector<256x128xf32>
    %157 = arith.select %154, %152, %156 : vector<256x128xi1>, vector<256x128xf32>
    %c0_139 = arith.constant 0 : index
    %c0_140 = arith.constant 0 : index
    %c0_141 = arith.constant 0 : index
    %158 = vector.load %arg6[%c0_139, %c0_140, %c0_141] : memref<1x256x128xf32, #tpu.memory_space<vmem>>, vector<1x256x128xf32>
    %159 = vector.shape_cast %158 : vector<1x256x128xf32> to vector<256x128xf32>
    %160 = vector.shape_cast %157 : vector<256x128xf32> to vector<1x256x128xf32>
    tpu.vector_store %arg6[%c0_139, %c0_140, %c0_141], %160 {strides = array<i32>} : memref<1x256x128xf32, #tpu.memory_space<vmem>>, vector<1x256x128xf32>,
    return
  }
  func.func @transform_0(%arg0: i32, %arg1: i32, %arg2: i32) -> (i32, i32, i32, i32, i32) {
    %c0_i32 = arith.constant 0 : i32
    %c0_i32_0 = arith.constant 0 : i32
    %c0_i32_1 = arith.constant 0 : i32
    %c0_i32_2 = arith.constant 0 : i32
    return %arg0, %arg2, %c0_i32, %c0_i32_0, %c0_i32_1 : i32, i32, i32, i32, i32
  }
  func.func @transform_1(%arg0: i32, %arg1: i32, %arg2: i32) -> (i32, i32, i32, i32, i32) {
    %c0_i32 = arith.constant 0 : i32
    %c0_i32_0 = arith.constant 0 : i32
    %c0_i32_1 = arith.constant 0 : i32
    %c0_i32_2 = arith.constant 0 : i32
    %c0_i32_3 = arith.constant 0 : i32
    return %c0_i32, %arg1, %c0_i32_0, %c0_i32_1, %c0_i32_2 : i32, i32, i32, i32, i32
  }
  func.func @transform_2(%arg0: i32, %arg1: i32, %arg2: i32) -> (i32, i32, i32) {
    %c0_i32 = arith.constant 0 : i32
    %c0_i32_0 = arith.constant 0 : i32
    %c0_i32_1 = arith.constant 0 : i32
    return %arg1, %c0_i32, %c0_i32_0 : i32, i32, i32
  }
  func.func @transform_3(%arg0: i32, %arg1: i32, %arg2: i32) -> (i32, i32, i32) {
    %c0_i32 = arith.constant 0 : i32
    return %arg0, %arg2, %arg1 : i32, i32, i32
  }
}

</mosaic_0001>

<llo_original>
// kernel: tpu_custom_call.1
$region0: #{tpu_custom_call.1}
  #allocation0 [shape = 'u32[]', space=smem, size = 0x4, offset = 0x4, fixed_abs, tag = 'smem constant byte address 0x4 - core index']
  #allocation1 [shape = 'u32[72,128]{1,0:T(1,128)}', space=vmem, size = 0x9000, scoped, tag = 'internal scratch']
  %s0 = inlined_call_operand.vmem [shape: bf16[2,2,1,270,1], index: 0, kind: input, shape index: {}]
  %s1 = inlined_call_operand.vmem [shape: bf16[15,1,1,1,128], index: 1, kind: input, shape index: {}]
  %s2 = inlined_call_operand.vmem [shape: f32[1,1,128], index: 2, kind: input, shape index: {}]
  %s3 = inlined_call_operand.hbm [shape: f32[2,512,128], index: 3, kind: output, shape index: {}]
  %s4 = sld [smem:[#allocation0]]
  $region45: #{tpu_custom_call.1} parent=0
    _
  %s6 = ssub.s32 1, %s4
  %s7 = scalar_select 0, %s6, %s4
  $region1: #{tpu_custom_call.1} parent=0
    #allocation2 [shape = 'u8[262144]{0}', space=vmem, size = 0x40000, scoped, tag = 'output window, operand 0']
    #allocation3 [shape = 's32[2]{0}', space=sflag, size = 0x8, scoped, tag = 'scoped memory for tpu_custom_call.1']
    %8 = vsyncpa [#allocation3], 0
    %s9 = scalar_lea.sflag [#allocation3], 1
    %10 = vsyncpa %s9, 0
    loop: start=0, step=1, limit=6
    $region2: #{tpu_custom_call.1} parent=1 // loop_pre_header
      _
    $region3: #{tpu_custom_call.1} parent=1 // loop_header
      %s12 = sphi 0, %s16
      %p13 = scmp.ge.s32.totalorder %s12, 6
      %s19 = sphi 0, %s38
      %s20 = sphi 0, %s34
      %s21 = sphi 0, %s30
      %s22 = sphi 0, %s19
      %s23 = sphi 0, %s20
      %s24 = sphi 0, %s21
      %s25 = sphi 0, %s22
      %s26 = sphi 0, %s23
      %s27 = sphi 0, %s24
      %s43 = sphi 0, %s45
      %s46 = sphi 0, %s43
      %s47 = sphi 0, %s46
      %s63 = sphi 0, %s47
      %s69 = sphi 0, %s71
      %s72 = sphi 0, %s69
      %s73 = sphi 0, %s72
      %s89 = sphi 0, %s73
      %s95 = sphi 0, %s97
      %s98 = sphi 0, %s95
      %s99 = sphi 0, %s98
      %s115 = sphi 0, %s99
      %s125 = sphi 0, %s127
      %s128 = sphi 0, %s125
      %s129 = sphi 0, %s128
      %s145 = sphi 0, %s129
    $region4: #{tpu_custom_call.1} parent=1 // loop_header_branch
      %15 = sbr.rel (%p13) target = $region8
    $region5: #{tpu_custom_call.1} parent=1 // loop_body
      %s17 = ssub.s32 %s12, 1
      %s18 = ssub.s32 %s12, 2
      %s28 = sadd.s32 1, %s21
      %p29 = scmp.ge.s32.totalorder %s28, 2
      %s30 = scalar_select %p29, 0, %s28
      %s31 = sadd.s32 1, %s20
      %s32 = scalar_select %p29, %s31, %s20
      %p33 = scmp.ge.s32.totalorder %s32, 1
      %s34 = scalar_select %p33, 0, %s32
      %s35 = sadd.s32 1, %s19
      %s36 = scalar_select %p33, %s35, %s19
      %p37 = scmp.ge.s32.totalorder %s36, 2
      %s38 = scalar_select %p37, 0, %s36
      %s39 = ssub.s32 %s19, %s38
      %s40 = ssub.s32 %s21, %s30
      %s41 = sor.u32 %s39, %s40
      %p42 = scmp.eq.s32.totalorder %s41, 0
      %s44 = sadd.s32 %s43, 1
      %s45 = scalar_select %p42, %s43, %s44
      %p48 = pneg %p42
      %p49 = scmp.eq.s32.totalorder %s12, 3
      %p50 = por %p48, %p49
      %p51 = scmp.ne.s32.totalorder %s43, %s46
      %p52 = scmp.eq.s32.totalorder %s12, 0
      %p53 = por %p51, %p52
      %p54 = scmp.ne.s32.totalorder %s43, %s46
      %p55 = scmp.eq.s32.totalorder %s17, 3
      %p56 = por %p54, %p55
      %p57 = scmp.ne.s32.totalorder %s46, %s47
      %p58 = scmp.eq.s32.totalorder %s17, 0
      %p59 = por %p57, %p58
      %p60 = scmp.ne.s32.totalorder %s46, %s47
      %p61 = scmp.eq.s32.totalorder %s18, 3
      %p62 = por %p60, %p61
      %p64 = scmp.ne.s32.totalorder %s47, %s63
      %p65 = scmp.eq.s32.totalorder %s18, 0
      %p66 = por %p64, %p65
      %s67 = ssub.s32 %s20, %s34
      %p68 = scmp.eq.s32.totalorder %s67, 0
      %s70 = sadd.s32 %s69, 1
      %s71 = scalar_select %p68, %s69, %s70
      %p74 = pneg %p68
      %p75 = scmp.eq.s32.totalorder %s12, 3
      %p76 = por %p74, %p75
      %p77 = scmp.ne.s32.totalorder %s69, %s72
      %p78 = scmp.eq.s32.totalorder %s12, 0
      %p79 = por %p77, %p78
      %p80 = scmp.ne.s32.totalorder %s69, %s72
      %p81 = scmp.eq.s32.totalorder %s17, 3
      %p82 = por %p80, %p81
      %p83 = scmp.ne.s32.totalorder %s72, %s73
      %p84 = scmp.eq.s32.totalorder %s17, 0
      %p85 = por %p83, %p84
      %p86 = scmp.ne.s32.totalorder %s72, %s73
      %p87 = scmp.eq.s32.totalorder %s18, 3
      %p88 = por %p86, %p87
      %p90 = scmp.ne.s32.totalorder %s73, %s89
      %p91 = scmp.eq.s32.totalorder %s18, 0
      %p92 = por %p90, %p91
      %s93 = ssub.s32 %s20, %s34
      %p94 = scmp.eq.s32.totalorder %s93, 0
      %s96 = sadd.s32 %s95, 1
      %s97 = scalar_select %p94, %s95, %s96
      %p100 = pneg %p94
      %p101 = scmp.eq.s32.totalorder %s12, 3
      %p102 = por %p100, %p101
      %p103 = scmp.ne.s32.totalorder %s95, %s98
      %p104 = scmp.eq.s32.totalorder %s12, 0
      %p105 = por %p103, %p104
      %p106 = scmp.ne.s32.totalorder %s95, %s98
      %p107 = scmp.eq.s32.totalorder %s17, 3
      %p108 = por %p106, %p107
      %p109 = scmp.ne.s32.totalorder %s98, %s99
      %p110 = scmp.eq.s32.totalorder %s17, 0
      %p111 = por %p109, %p110
      %p112 = scmp.ne.s32.totalorder %s98, %s99
      %p113 = scmp.eq.s32.totalorder %s18, 3
      %p114 = por %p112, %p113
      %p116 = scmp.ne.s32.totalorder %s99, %s115
      %p117 = scmp.eq.s32.totalorder %s18, 0
      %p118 = por %p116, %p117
      %s119 = ssub.s32 %s19, %s38
      %s120 = ssub.s32 %s21, %s30
      %s121 = sor.u32 %s119, %s120
      %s122 = ssub.s32 %s20, %s34
      %s123 = sor.u32 %s121, %s122
      %p124 = scmp.eq.s32.totalorder %s123, 0
      %s126 = sadd.s32 %s125, 1
      %s127 = scalar_select %p124, %s125, %s126
      %p130 = pneg %p124
      %p131 = scmp.eq.s32.totalorder %s12, 3
      %p132 = por %p130, %p131
      %p133 = scmp.ne.s32.totalorder %s125, %s128
      %p134 = scmp.eq.s32.totalorder %s12, 0
      %p135 = por %p133, %p134
      %p136 = scmp.ne.s32.totalorder %s125, %s128
      %p137 = scmp.eq.s32.totalorder %s17, 3
      %p138 = por %p136, %p137
      %p139 = scmp.ne.s32.totalorder %s128, %s129
      %p140 = scmp.eq.s32.totalorder %s17, 0
      %p141 = por %p139, %p140
      %p142 = scmp.ne.s32.totalorder %s128, %s129
      %p143 = scmp.eq.s32.totalorder %s18, 3
      %p144 = por %p142, %p143
      %p146 = scmp.ne.s32.totalorder %s129, %s145
      %p147 = scmp.eq.s32.totalorder %s18, 0
      %p148 = por %p146, %p147
      %p149 = scmp.le.s32.totalorder 1, %s12
      %p150 = scmp.lt.s32.totalorder %s12, 5
      %p151 = pnand %p149, %p150
      %p152 = pneg %p151
      // Predicated region
      $region9: #{tpu_custom_call.1} parent=5 // pred_check
        _
      $region10: #{tpu_custom_call.1} parent=5 // pred_check_branch
        %154 = sbr.rel (%p151) target = $region12
      $region11: #{tpu_custom_call.1} parent=5 // pred_region
        %s155 = ssub.s32 %s12, 1
        // Predicated region
        $region13: #{tpu_custom_call.1} parent=11 // pred_check
          %p156 = pneg %p85
        $region14: #{tpu_custom_call.1} parent=11 // pred_check_branch
          %158 = sbr.rel (%p156) target = $region16
        $region15: #{tpu_custom_call.1} parent=11 // pred_region
          %p159 = scmp.lt.s32.totalorder %s23, 0
          %s160 = scalar_select %p159, %s23, 0
          %s161 = scalar_lea.vmem %s1, %s160
        $region16: #{tpu_custom_call.1} parent=11 // pred_fallthru
          _
        // Predicated region
        $region17: #{tpu_custom_call.1} parent=11 // pred_check
          %p162 = pneg %p111
        $region18: #{tpu_custom_call.1} parent=11 // pred_check_branch
          %164 = sbr.rel (%p162) target = $region20
        $region19: #{tpu_custom_call.1} parent=11 // pred_region
          %p165 = scmp.lt.s32.totalorder %s23, 0
          %s166 = scalar_select %p165, %s23, 0
          %s167 = scalar_lea.vmem %s2, %s166
        $region20: #{tpu_custom_call.1} parent=11 // pred_fallthru
          _
      $region12: #{tpu_custom_call.1} parent=5 // pred_fallthru
        _
      %p168 = scmp.lt.s32.totalorder %s12, 4
      // Predicated region
      $region21: #{tpu_custom_call.1} parent=5 // pred_check
        %p169 = pneg %p168
      $region22: #{tpu_custom_call.1} parent=5 // pred_check_branch
        %171 = sbr.rel (%p169) target = $region24
      $region23: #{tpu_custom_call.1} parent=5 // pred_region
        // Predicated region
        $region25: #{tpu_custom_call.1} parent=23 // pred_check
          %p172 = pneg %p53
        $region26: #{tpu_custom_call.1} parent=23 // pred_check_branch
          %174 = sbr.rel (%p172) target = $region28
        $region27: #{tpu_custom_call.1} parent=23 // pred_region
          %p175 = scmp.lt.s32.totalorder %s19, 1
          %s176 = scalar_select %p175, %s19, 1
          %p177 = scmp.lt.s32.totalorder %s21, 1
          %s178 = scalar_select %p177, %s21, 1
          %s179 = smul.addr %s178, 34
          %s180 = smul.addr %s176, 68
          %s181 = sadd.s32 %s179, %s180
          %s182 = smul.addr %s181, 4
          %s183 = scalar_lea.vmem %s0, %s182
        $region28: #{tpu_custom_call.1} parent=23 // pred_fallthru
          _
      $region24: #{tpu_custom_call.1} parent=5 // pred_fallthru
        _
      %p184 = scmp.le.s32.totalorder 1, %s12
      %p185 = scmp.lt.s32.totalorder %s12, 5
      %p186 = pnand %p184, %p185
      %p187 = pneg %p186
      // Predicated region
      $region29: #{tpu_custom_call.1} parent=5 // pred_check
        _
      $region30: #{tpu_custom_call.1} parent=5 // pred_check_branch
        %189 = sbr.rel (%p186) target = $region32
      $region31: #{tpu_custom_call.1} parent=5 // pred_region
        %s190 = ssub.s32 %s12, 1
        %p191 = scmp.lt.s32.totalorder %s22, 1
        %s192 = scalar_select %p191, %s22, 1
        %p193 = scmp.lt.s32.totalorder %s24, 1
        %s194 = scalar_select %p193, %s24, 1
        %s195 = smul.addr %s194, 34
        %s196 = smul.addr %s192, 68
        %s197 = sadd.s32 %s195, %s196
        %s198 = smul.addr %s197, 4
        %s199 = scalar_lea.vmem %s0, %s198
        %p200 = pneg %p59
        %p201 = pneg %p56
        %p202 = scmp.lt.s32.totalorder %s23, 0
        %s203 = scalar_select %p202, %s23, 0
        %s204 = scalar_lea.vmem %s1, %s203
        %p205 = pneg %p85
        %p206 = pneg %p82
        %p207 = scmp.lt.s32.totalorder %s23, 0
        %s208 = scalar_select %p207, %s23, 0
        %s209 = scalar_lea.vmem %s2, %s208
        %p210 = pneg %p111
        %p211 = pneg %p108
        %p212 = pneg %p141
        %p213 = pneg %p138
        %s214 = sand.u32 %s128, 1
        %s215 = scalar_lea.sflag [#allocation3], %s214
        %s216 = sand.u32 %s128, 1
        %s217 = smul.addr %s216, 256
        %s218 = scalar_lea.vmem [#allocation2], %s217
        %p219 = scmp.lt.s32.totalorder %s22, 1
        %s220 = scalar_select %p219, %s22, 1
        %p221 = scmp.lt.s32.totalorder %s24, 1
        %s222 = scalar_select %p221, %s24, 1
        %s223 = smul.addr %s222, 34
        %s224 = smul.addr %s220, 68
        %s225 = sadd.s32 %s223, %s224
        %s226 = smul.addr %s225, 4
        %s227 = scalar_lea.vmem %s0, %s226
        %p228 = scmp.lt.s32.totalorder %s23, 0
        %s229 = scalar_select %p228, %s23, 0
        %s230 = scalar_lea.vmem %s1, %s229
        %p231 = scmp.lt.s32.totalorder %s23, 0
        %s232 = scalar_select %p231, %s23, 0
        %s233 = scalar_lea.vmem %s2, %s232
        %s234 = smul.u32 32, %s24
        %v235 = vld [vmem:[%s227] sm:$0xf]
        %v236 = vld [vmem:[%s227 + $0x4] sm:$0xf]
        %v237 = vld [vmem:[%s227 + $0x8] sm:$0xf]
        %v238 = vld [vmem:[%s227 + $0xc] sm:$0xf]
        %v239 = vld [vmem:[%s227 + $0x10] sm:$0xf]
        %v240 = vld [vmem:[%s227 + $0x14] sm:$0xf]
        %v241 = vld [vmem:[%s227 + $0x18] sm:$0xf]
        %v242 = vld [vmem:[%s227 + $0x1c] sm:$0xf]
        %v243 = vld [vmem:[%s227 + $0x20] sm:$0xf]
        %v244 = vld [vmem:[%s227 + $0x24] sm:$0xf]
        %v245 = vld [vmem:[%s227 + $0x28] sm:$0xf]
        %v246 = vld [vmem:[%s227 + $0x2c] sm:$0xf]
        %v247 = vld [vmem:[%s227 + $0x30] sm:$0xf]
        %v248 = vld [vmem:[%s227 + $0x34] sm:$0xf]
        %v249 = vld [vmem:[%s227 + $0x38] sm:$0xf]
        %v250 = vld [vmem:[%s227 + $0x3c] sm:$0xf]
        %v251 = vld [vmem:[%s227 + $0x40] sm:$0xf]
        %v252 = vld [vmem:[%s227 + $0x44] sm:$0xf]
        %v253 = vld [vmem:[%s227 + $0x48] sm:$0xf]
        %v254 = vld [vmem:[%s227 + $0x4c] sm:$0xf]
        %v255 = vld [vmem:[%s227 + $0x50] sm:$0xf]
        %v256 = vld [vmem:[%s227 + $0x54] sm:$0xf]
        %v257 = vld [vmem:[%s227 + $0x58] sm:$0xf]
        %v258 = vld [vmem:[%s227 + $0x5c] sm:$0xf]
        %v259 = vld [vmem:[%s227 + $0x60] sm:$0xf]
        %v260 = vld [vmem:[%s227 + $0x64] sm:$0xf]
        %v261 = vld [vmem:[%s227 + $0x68] sm:$0xf]
        %v262 = vld [vmem:[%s227 + $0x6c] sm:$0xf]
        %v263 = vld [vmem:[%s227 + $0x70] sm:$0xf]
        %v264 = vld [vmem:[%s227 + $0x74] sm:$0xf]
        %v265 = vld [vmem:[%s227 + $0x78] sm:$0xf]
        %v266 = vld [vmem:[%s227 + $0x7c] sm:$0xf]
        %v267 = vld [vmem:[%s230] sm:$0x1]
        %v268 = vunpack.c.l.bf16 %v235
        %v269 = vunpack.c.l.bf16 %v236
        %v270 = vunpack.c.l.bf16 %v237
        %v271 = vunpack.c.l.bf16 %v238
        %v272 = vunpack.c.l.bf16 %v239
        %v273 = vunpack.c.l.bf16 %v240
        %v274 = vunpack.c.l.bf16 %v241
        %v275 = vunpack.c.l.bf16 %v242
        %v276 = vunpack.c.l.bf16 %v243
        %v277 = vunpack.c.l.bf16 %v244
        %v278 = vunpack.c.l.bf16 %v245
        %v279 = vunpack.c.l.bf16 %v246
        %v280 = vunpack.c.l.bf16 %v247
        %v281 = vunpack.c.l.bf16 %v248
        %v282 = vunpack.c.l.bf16 %v249
        %v283 = vunpack.c.l.bf16 %v250
        %v284 = vunpack.c.l.bf16 %v251
        %v285 = vunpack.c.l.bf16 %v252
        %v286 = vunpack.c.l.bf16 %v253
        %v287 = vunpack.c.l.bf16 %v254
        %v288 = vunpack.c.l.bf16 %v255
        %v289 = vunpack.c.l.bf16 %v256
        %v290 = vunpack.c.l.bf16 %v257
        %v291 = vunpack.c.l.bf16 %v258
        %v292 = vunpack.c.l.bf16 %v259
        %v293 = vunpack.c.l.bf16 %v260
        %v294 = vunpack.c.l.bf16 %v261
        %v295 = vunpack.c.l.bf16 %v262
        %v296 = vunpack.c.l.bf16 %v263
        %v297 = vunpack.c.l.bf16 %v264
        %v298 = vunpack.c.l.bf16 %v265
        %v299 = vunpack.c.l.bf16 %v266
        %v300 = vunpack.c.l.bf16 %v267
        %302 = vset.pattern.permute.xlu0 0
        %303 = vperm.xlu0 %302, %v268
        %v304 = vpop.permute.xlu0 %303
        %307 = vset.pattern.permute.xlu0 0
        %308 = vperm.xlu0 %307, %v269
        %v309 = vpop.permute.xlu0 %308
        %312 = vset.pattern.permute.xlu0 0
        %313 = vperm.xlu0 %312, %v270
        %v314 = vpop.permute.xlu0 %313
        %317 = vset.pattern.permute.xlu0 0
        %318 = vperm.xlu0 %317, %v271
        %v319 = vpop.permute.xlu0 %318
        %322 = vset.pattern.permute.xlu0 0
        %323 = vperm.xlu0 %322, %v272
        %v324 = vpop.permute.xlu0 %323
        %327 = vset.pattern.permute.xlu0 0
        %328 = vperm.xlu0 %327, %v273
        %v329 = vpop.permute.xlu0 %328
        %332 = vset.pattern.permute.xlu0 0
        %333 = vperm.xlu0 %332, %v274
        %v334 = vpop.permute.xlu0 %333
        %337 = vset.pattern.permute.xlu0 0
        %338 = vperm.xlu0 %337, %v275
        %v339 = vpop.permute.xlu0 %338
        %342 = vset.pattern.permute.xlu0 0
        %343 = vperm.xlu0 %342, %v276
        %v344 = vpop.permute.xlu0 %343
        %347 = vset.pattern.permute.xlu0 0
        %348 = vperm.xlu0 %347, %v277
        %v349 = vpop.permute.xlu0 %348
        %352 = vset.pattern.permute.xlu0 0
        %353 = vperm.xlu0 %352, %v278
        %v354 = vpop.permute.xlu0 %353
        %357 = vset.pattern.permute.xlu0 0
        %358 = vperm.xlu0 %357, %v279
        %v359 = vpop.permute.xlu0 %358
        %362 = vset.pattern.permute.xlu0 0
        %363 = vperm.xlu0 %362, %v280
        %v364 = vpop.permute.xlu0 %363
        %367 = vset.pattern.permute.xlu0 0
        %368 = vperm.xlu0 %367, %v281
        %v369 = vpop.permute.xlu0 %368
        %372 = vset.pattern.permute.xlu0 0
        %373 = vperm.xlu0 %372, %v282
        %v374 = vpop.permute.xlu0 %373
        %377 = vset.pattern.permute.xlu0 0
        %378 = vperm.xlu0 %377, %v283
        %v379 = vpop.permute.xlu0 %378
        %382 = vset.pattern.permute.xlu0 0
        %383 = vperm.xlu0 %382, %v284
        %v384 = vpop.permute.xlu0 %383
        %387 = vset.pattern.permute.xlu0 0
        %388 = vperm.xlu0 %387, %v285
        %v389 = vpop.permute.xlu0 %388
        %392 = vset.pattern.permute.xlu0 0
        %393 = vperm.xlu0 %392, %v286
        %v394 = vpop.permute.xlu0 %393
        %397 = vset.pattern.permute.xlu0 0
        %398 = vperm.xlu0 %397, %v287
        %v399 = vpop.permute.xlu0 %398
        %402 = vset.pattern.permute.xlu0 0
        %403 = vperm.xlu0 %402, %v288
        %v404 = vpop.permute.xlu0 %403
        %407 = vset.pattern.permute.xlu0 0
        %408 = vperm.xlu0 %407, %v289
        %v409 = vpop.permute.xlu0 %408
        %412 = vset.pattern.permute.xlu0 0
        %413 = vperm.xlu0 %412, %v290
        %v414 = vpop.permute.xlu0 %413
        %417 = vset.pattern.permute.xlu0 0
        %418 = vperm.xlu0 %417, %v291
        %v419 = vpop.permute.xlu0 %418
        %422 = vset.pattern.permute.xlu0 0
        %423 = vperm.xlu0 %422, %v292
        %v424 = vpop.permute.xlu0 %423
        %427 = vset.pattern.permute.xlu0 0
        %428 = vperm.xlu0 %427, %v293
        %v429 = vpop.permute.xlu0 %428
        %432 = vset.pattern.permute.xlu0 0
        %433 = vperm.xlu0 %432, %v294
        %v434 = vpop.permute.xlu0 %433
        %437 = vset.pattern.permute.xlu0 0
        %438 = vperm.xlu0 %437, %v295
        %v439 = vpop.permute.xlu0 %438
        %442 = vset.pattern.permute.xlu0 0
        %443 = vperm.xlu0 %442, %v296
        %v444 = vpop.permute.xlu0 %443
        %447 = vset.pattern.permute.xlu0 0
        %448 = vperm.xlu0 %447, %v297
        %v449 = vpop.permute.xlu0 %448
        %452 = vset.pattern.permute.xlu0 0
        %453 = vperm.xlu0 %452, %v298
        %v454 = vpop.permute.xlu0 %453
        %457 = vset.pattern.permute.xlu0 0
        %458 = vperm.xlu0 %457, %v299
        %v459 = vpop.permute.xlu0 %458
        %v461 = vperm.slane %v300, 0
        %v462 = vmul.f32 %v304, %v461
        %v463 = vmul.f32 %v309, %v461
        %v464 = vmul.f32 %v314, %v461
        %v465 = vmul.f32 %v319, %v461
        %v466 = vmul.f32 %v324, %v461
        %v467 = vmul.f32 %v329, %v461
        %v468 = vmul.f32 %v334, %v461
        %v469 = vmul.f32 %v339, %v461
        %v470 = vmul.f32 %v344, %v461
        %v471 = vmul.f32 %v349, %v461
        %v472 = vmul.f32 %v354, %v461
        %v473 = vmul.f32 %v359, %v461
        %v474 = vmul.f32 %v364, %v461
        %v475 = vmul.f32 %v369, %v461
        %v476 = vmul.f32 %v374, %v461
        %v477 = vmul.f32 %v379, %v461
        %v478 = vmul.f32 %v384, %v461
        %v479 = vmul.f32 %v389, %v461
        %v480 = vmul.f32 %v394, %v461
        %v481 = vmul.f32 %v399, %v461
        %v482 = vmul.f32 %v404, %v461
        %v483 = vmul.f32 %v409, %v461
        %v484 = vmul.f32 %v414, %v461
        %v485 = vmul.f32 %v419, %v461
        %v486 = vmul.f32 %v424, %v461
        %v487 = vmul.f32 %v429, %v461
        %v488 = vmul.f32 %v434, %v461
        %v489 = vmul.f32 %v439, %v461
        %v490 = vmul.f32 %v444, %v461
        %v491 = vmul.f32 %v449, %v461
        %v492 = vmul.f32 %v454, %v461
        %v493 = vmul.f32 %v459, %v461
        %v494 = vld [vmem:[%s227] sm:$0xf]
        %v495 = vld [vmem:[%s227 + $0x4] sm:$0xf]
        %v496 = vld [vmem:[%s227 + $0x8] sm:$0xf]
        %v497 = vld [vmem:[%s227 + $0xc] sm:$0xf]
        %v498 = vld [vmem:[%s227 + $0x10] sm:$0xf]
        %v499 = vld [vmem:[%s227 + $0x14] sm:$0xf]
        %v500 = vld [vmem:[%s227 + $0x18] sm:$0xf]
        %v501 = vld [vmem:[%s227 + $0x1c] sm:$0xf]
        %v502 = vld [vmem:[%s227 + $0x20] sm:$0xf]
        %v503 = vld [vmem:[%s227 + $0x24] sm:$0xf]
        %v504 = vld [vmem:[%s227 + $0x28] sm:$0xf]
        %v505 = vld [vmem:[%s227 + $0x2c] sm:$0xf]
        %v506 = vld [vmem:[%s227 + $0x30] sm:$0xf]
        %v507 = vld [vmem:[%s227 + $0x34] sm:$0xf]
        %v508 = vld [vmem:[%s227 + $0x38] sm:$0xf]
        %v509 = vld [vmem:[%s227 + $0x3c] sm:$0xf]
        %v510 = vld [vmem:[%s227 + $0x40] sm:$0xf]
        %v511 = vld [vmem:[%s227 + $0x44] sm:$0xf]
        %v512 = vld [vmem:[%s227 + $0x48] sm:$0xf]
        %v513 = vld [vmem:[%s227 + $0x4c] sm:$0xf]
        %v514 = vld [vmem:[%s227 + $0x50] sm:$0xf]
        %v515 = vld [vmem:[%s227 + $0x54] sm:$0xf]
        %v516 = vld [vmem:[%s227 + $0x58] sm:$0xf]
        %v517 = vld [vmem:[%s227 + $0x5c] sm:$0xf]
        %v518 = vld [vmem:[%s227 + $0x60] sm:$0xf]
        %v519 = vld [vmem:[%s227 + $0x64] sm:$0xf]
        %v520 = vld [vmem:[%s227 + $0x68] sm:$0xf]
        %v521 = vld [vmem:[%s227 + $0x6c] sm:$0xf]
        %v522 = vld [vmem:[%s227 + $0x70] sm:$0xf]
        %v523 = vld [vmem:[%s227 + $0x74] sm:$0xf]
        %v524 = vld [vmem:[%s227 + $0x78] sm:$0xf]
        %v525 = vld [vmem:[%s227 + $0x7c] sm:$0xf]
        %v526 = vld [vmem:[%s227 + $0x80] sm:$0x1]
        %s527 = scalar_lea.vmem %s230, 1
        %v528 = vld [vmem:[%s527] sm:$0x1]
        %v529 = vunpack.c.l.bf16 %v494
        %v530 = vunpack.c.l.bf16 %v495
        %v531 = vunpack.c.l.bf16 %v496
        %v532 = vunpack.c.l.bf16 %v497
        %v533 = vunpack.c.l.bf16 %v498
        %v534 = vunpack.c.l.bf16 %v499
        %v535 = vunpack.c.l.bf16 %v500
        %v536 = vunpack.c.l.bf16 %v501
        %v537 = vunpack.c.l.bf16 %v502
        %v538 = vunpack.c.l.bf16 %v503
        %v539 = vunpack.c.l.bf16 %v504
        %v540 = vunpack.c.l.bf16 %v505
        %v541 = vunpack.c.l.bf16 %v506
        %v542 = vunpack.c.l.bf16 %v507
        %v543 = vunpack.c.l.bf16 %v508
        %v544 = vunpack.c.l.bf16 %v509
        %v545 = vunpack.c.l.bf16 %v510
        %v546 = vunpack.c.l.bf16 %v511
        %v547 = vunpack.c.l.bf16 %v512
        %v548 = vunpack.c.l.bf16 %v513
        %v549 = vunpack.c.l.bf16 %v514
        %v550 = vunpack.c.l.bf16 %v515
        %v551 = vunpack.c.l.bf16 %v516
        %v552 = vunpack.c.l.bf16 %v517
        %v553 = vunpack.c.l.bf16 %v518
        %v554 = vunpack.c.l.bf16 %v519
        %v555 = vunpack.c.l.bf16 %v520
        %v556 = vunpack.c.l.bf16 %v521
        %v557 = vunpack.c.l.bf16 %v522
        %v558 = vunpack.c.l.bf16 %v523
        %v559 = vunpack.c.l.bf16 %v524
        %v560 = vunpack.c.l.bf16 %v525
        %v561 = vunpack.c.l.bf16 %v526
        %v562 = vunpack.c.l.bf16 %v528
        %564 = vset.pattern.permute.xlu0 0
        %565 = vperm.xlu0 %564, %v529
        %v566 = vpop.permute.xlu0 %565
        %569 = vset.pattern.permute.xlu0 0
        %570 = vperm.xlu0 %569, %v530
        %v571 = vpop.permute.xlu0 %570
        %574 = vset.pattern.permute.xlu0 0
        %575 = vperm.xlu0 %574, %v531
        %v576 = vpop.permute.xlu0 %575
        %579 = vset.pattern.permute.xlu0 0
        %580 = vperm.xlu0 %579, %v532
        %v581 = vpop.permute.xlu0 %580
        %584 = vset.pattern.permute.xlu0 0
        %585 = vperm.xlu0 %584, %v533
        %v586 = vpop.permute.xlu0 %585
        %589 = vset.pattern.permute.xlu0 0
        %590 = vperm.xlu0 %589, %v534
        %v591 = vpop.permute.xlu0 %590
        %594 = vset.pattern.permute.xlu0 0
        %595 = vperm.xlu0 %594, %v535
        %v596 = vpop.permute.xlu0 %595
        %599 = vset.pattern.permute.xlu0 0
        %600 = vperm.xlu0 %599, %v536
        %v601 = vpop.permute.xlu0 %600
        %604 = vset.pattern.permute.xlu0 0
        %605 = vperm.xlu0 %604, %v537
        %v606 = vpop.permute.xlu0 %605
        %609 = vset.pattern.permute.xlu0 0
        %610 = vperm.xlu0 %609, %v538
        %v611 = vpop.permute.xlu0 %610
        %614 = vset.pattern.permute.xlu0 0
        %615 = vperm.xlu0 %614, %v539
        %v616 = vpop.permute.xlu0 %615
        %619 = vset.pattern.permute.xlu0 0
        %620 = vperm.xlu0 %619, %v540
        %v621 = vpop.permute.xlu0 %620
        %624 = vset.pattern.permute.xlu0 0
        %625 = vperm.xlu0 %624, %v541
        %v626 = vpop.permute.xlu0 %625
        %629 = vset.pattern.permute.xlu0 0
        %630 = vperm.xlu0 %629, %v542
        %v631 = vpop.permute.xlu0 %630
        %634 = vset.pattern.permute.xlu0 0
        %635 = vperm.xlu0 %634, %v543
        %v636 = vpop.permute.xlu0 %635
        %639 = vset.pattern.permute.xlu0 0
        %640 = vperm.xlu0 %639, %v544
        %v641 = vpop.permute.xlu0 %640
        %644 = vset.pattern.permute.xlu0 0
        %645 = vperm.xlu0 %644, %v545
        %v646 = vpop.permute.xlu0 %645
        %649 = vset.pattern.permute.xlu0 0
        %650 = vperm.xlu0 %649, %v546
        %v651 = vpop.permute.xlu0 %650
        %654 = vset.pattern.permute.xlu0 0
        %655 = vperm.xlu0 %654, %v547
        %v656 = vpop.permute.xlu0 %655
        %659 = vset.pattern.permute.xlu0 0
        %660 = vperm.xlu0 %659, %v548
        %v661 = vpop.permute.xlu0 %660
        %664 = vset.pattern.permute.xlu0 0
        %665 = vperm.xlu0 %664, %v549
        %v666 = vpop.permute.xlu0 %665
        %669 = vset.pattern.permute.xlu0 0
        %670 = vperm.xlu0 %669, %v550
        %v671 = vpop.permute.xlu0 %670
        %674 = vset.pattern.permute.xlu0 0
        %675 = vperm.xlu0 %674, %v551
        %v676 = vpop.permute.xlu0 %675
        %679 = vset.pattern.permute.xlu0 0
        %680 = vperm.xlu0 %679, %v552
        %v681 = vpop.permute.xlu0 %680
        %684 = vset.pattern.permute.xlu0 0
        %685 = vperm.xlu0 %684, %v553
        %v686 = vpop.permute.xlu0 %685
        %689 = vset.pattern.permute.xlu0 0
        %690 = vperm.xlu0 %689, %v554
        %v691 = vpop.permute.xlu0 %690
        %694 = vset.pattern.permute.xlu0 0
        %695 = vperm.xlu0 %694, %v555
        %v696 = vpop.permute.xlu0 %695
        %699 = vset.pattern.permute.xlu0 0
        %700 = vperm.xlu0 %699, %v556
        %v701 = vpop.permute.xlu0 %700
        %704 = vset.pattern.permute.xlu0 0
        %705 = vperm.xlu0 %704, %v557
        %v706 = vpop.permute.xlu0 %705
        %709 = vset.pattern.permute.xlu0 0
        %710 = vperm.xlu0 %709, %v558
        %v711 = vpop.permute.xlu0 %710
        %714 = vset.pattern.permute.xlu0 0
        %715 = vperm.xlu0 %714, %v559
        %v716 = vpop.permute.xlu0 %715
        %719 = vset.pattern.permute.xlu0 0
        %720 = vperm.xlu0 %719, %v560
        %v721 = vpop.permute.xlu0 %720
        %724 = vset.pattern.permute.xlu0 0
        %725 = vperm.xlu0 %724, %v561
        %v726 = vpop.permute.xlu0 %725
        %v728 = vperm.slane %v562, 0
        %v729 = vmul.f32 %v566, %v728
        %v730 = vmul.f32 %v571, %v728
        %v731 = vmul.f32 %v576, %v728
        %v732 = vmul.f32 %v581, %v728
        %v733 = vmul.f32 %v586, %v728
        %v734 = vmul.f32 %v591, %v728
        %v735 = vmul.f32 %v596, %v728
        %v736 = vmul.f32 %v601, %v728
        %v737 = vmul.f32 %v606, %v728
        %v738 = vmul.f32 %v611, %v728
        %v739 = vmul.f32 %v616, %v728
        %v740 = vmul.f32 %v621, %v728
        %v741 = vmul.f32 %v626, %v728
        %v742 = vmul.f32 %v631, %v728
        %v743 = vmul.f32 %v636, %v728
        %v744 = vmul.f32 %v641, %v728
        %v745 = vmul.f32 %v646, %v728
        %v746 = vmul.f32 %v651, %v728
        %v747 = vmul.f32 %v656, %v728
        %v748 = vmul.f32 %v661, %v728
        %v749 = vmul.f32 %v666, %v728
        %v750 = vmul.f32 %v671, %v728
        %v751 = vmul.f32 %v676, %v728
        %v752 = vmul.f32 %v681, %v728
        %v753 = vmul.f32 %v686, %v728
        %v754 = vmul.f32 %v691, %v728
        %v755 = vmul.f32 %v696, %v728
        %v756 = vmul.f32 %v701, %v728
        %v757 = vmul.f32 %v706, %v728
        %v758 = vmul.f32 %v711, %v728
        %v759 = vmul.f32 %v716, %v728
        %v760 = vmul.f32 %v721, %v728
        %v761 = vmul.f32 %v726, %v728
        %vm795 = vcmask 1046528
        %v796 = vrot.slane %v729, 1
        %v797 = vrot.slane %v730, 1
        %v798 = vsel %vm795, %v796, %v797
        %v799 = vrot.slane %v731, 1
        %v800 = vsel %vm795, %v797, %v799
        %v801 = vrot.slane %v732, 1
        %v802 = vsel %vm795, %v799, %v801
        %v803 = vrot.slane %v733, 1
        %v804 = vsel %vm795, %v801, %v803
        %v805 = vrot.slane %v734, 1
        %v806 = vsel %vm795, %v803, %v805
        %v807 = vrot.slane %v735, 1
        %v808 = vsel %vm795, %v805, %v807
        %v809 = vrot.slane %v736, 1
        %v810 = vsel %vm795, %v807, %v809
        %v811 = vrot.slane %v737, 1
        %v812 = vsel %vm795, %v809, %v811
        %v813 = vrot.slane %v738, 1
        %v814 = vsel %vm795, %v811, %v813
        %v815 = vrot.slane %v739, 1
        %v816 = vsel %vm795, %v813, %v815
        %v817 = vrot.slane %v740, 1
        %v818 = vsel %vm795, %v815, %v817
        %v819 = vrot.slane %v741, 1
        %v820 = vsel %vm795, %v817, %v819
        %v821 = vrot.slane %v742, 1
        %v822 = vsel %vm795, %v819, %v821
        %v823 = vrot.slane %v743, 1
        %v824 = vsel %vm795, %v821, %v823
        %v825 = vrot.slane %v744, 1
        %v826 = vsel %vm795, %v823, %v825
        %v827 = vrot.slane %v745, 1
        %v828 = vsel %vm795, %v825, %v827
        %v829 = vrot.slane %v746, 1
        %v830 = vsel %vm795, %v827, %v829
        %v831 = vrot.slane %v747, 1
        %v832 = vsel %vm795, %v829, %v831
        %v833 = vrot.slane %v748, 1
        %v834 = vsel %vm795, %v831, %v833
        %v835 = vrot.slane %v749, 1
        %v836 = vsel %vm795, %v833, %v835
        %v837 = vrot.slane %v750, 1
        %v838 = vsel %vm795, %v835, %v837
        %v839 = vrot.slane %v751, 1
        %v840 = vsel %vm795, %v837, %v839
        %v841 = vrot.slane %v752, 1
        %v842 = vsel %vm795, %v839, %v841
        %v843 = vrot.slane %v753, 1
        %v844 = vsel %vm795, %v841, %v843
        %v845 = vrot.slane %v754, 1
        %v846 = vsel %vm795, %v843, %v845
        %v847 = vrot.slane %v755, 1
        %v848 = vsel %vm795, %v845, %v847
        %v849 = vrot.slane %v756, 1
        %v850 = vsel %vm795, %v847, %v849
        %v851 = vrot.slane %v757, 1
        %v852 = vsel %vm795, %v849, %v851
        %v853 = vrot.slane %v758, 1
        %v854 = vsel %vm795, %v851, %v853
        %v855 = vrot.slane %v759, 1
        %v856 = vsel %vm795, %v853, %v855
        %v857 = vrot.slane %v760, 1
        %v858 = vsel %vm795, %v855, %v857
        %v859 = vrot.slane %v761, 1
        %v860 = vsel %vm795, %v857, %v859
        %v893 = vadd.f32 %v462, %v798
        %v894 = vadd.f32 %v463, %v800
        %v895 = vadd.f32 %v464, %v802
        %v896 = vadd.f32 %v465, %v804
        %v897 = vadd.f32 %v466, %v806
        %v898 = vadd.f32 %v467, %v808
        %v899 = vadd.f32 %v468, %v810
        %v900 = vadd.f32 %v469, %v812
        %v901 = vadd.f32 %v470, %v814
        %v902 = vadd.f32 %v471, %v816
        %v903 = vadd.f32 %v472, %v818
        %v904 = vadd.f32 %v473, %v820
        %v905 = vadd.f32 %v474, %v822
        %v906 = vadd.f32 %v475, %v824
        %v907 = vadd.f32 %v476, %v826
        %v908 = vadd.f32 %v477, %v828
        %v909 = vadd.f32 %v478, %v830
        %v910 = vadd.f32 %v479, %v832
        %v911 = vadd.f32 %v480, %v834
        %v912 = vadd.f32 %v481, %v836
        %v913 = vadd.f32 %v482, %v838
        %v914 = vadd.f32 %v483, %v840
        %v915 = vadd.f32 %v484, %v842
        %v916 = vadd.f32 %v485, %v844
        %v917 = vadd.f32 %v486, %v846
        %v918 = vadd.f32 %v487, %v848
        %v919 = vadd.f32 %v488, %v850
        %v920 = vadd.f32 %v489, %v852
        %v921 = vadd.f32 %v490, %v854
        %v922 = vadd.f32 %v491, %v856
        %v923 = vadd.f32 %v492, %v858
        %v924 = vadd.f32 %v493, %v860
        %v925 = vld [vmem:[%s227] sm:$0xe]
        %s926 = scalar_lea.vmem %s230, 2
        %v927 = vld [vmem:[%s926] sm:$0x1]
        %v928 = vunpack.c.l.bf16 %v925
        %v929 = vunpack.c.l.bf16 %v927
        %931 = vset.pattern.permute.xlu0 0
        %932 = vperm.xlu0 %931, %v928
        %v933 = vpop.permute.xlu0 %932
        %v935 = vperm.slane %v929, 0
        %v936 = vmul.f32 %v933, %v935
        %v937 = vmul.f32 %v571, %v935
        %v938 = vmul.f32 %v576, %v935
        %v939 = vmul.f32 %v581, %v935
        %v940 = vmul.f32 %v586, %v935
        %v941 = vmul.f32 %v591, %v935
        %v942 = vmul.f32 %v596, %v935
        %v943 = vmul.f32 %v601, %v935
        %v944 = vmul.f32 %v606, %v935
        %v945 = vmul.f32 %v611, %v935
        %v946 = vmul.f32 %v616, %v935
        %v947 = vmul.f32 %v621, %v935
        %v948 = vmul.f32 %v626, %v935
        %v949 = vmul.f32 %v631, %v935
        %v950 = vmul.f32 %v636, %v935
        %v951 = vmul.f32 %v641, %v935
        %v952 = vmul.f32 %v646, %v935
        %v953 = vmul.f32 %v651, %v935
        %v954 = vmul.f32 %v656, %v935
        %v955 = vmul.f32 %v661, %v935
        %v956 = vmul.f32 %v666, %v935
        %v957 = vmul.f32 %v671, %v935
        %v958 = vmul.f32 %v676, %v935
        %v959 = vmul.f32 %v681, %v935
        %v960 = vmul.f32 %v686, %v935
        %v961 = vmul.f32 %v691, %v935
        %v962 = vmul.f32 %v696, %v935
        %v963 = vmul.f32 %v701, %v935
        %v964 = vmul.f32 %v706, %v935
        %v965 = vmul.f32 %v711, %v935
        %v966 = vmul.f32 %v716, %v935
        %v967 = vmul.f32 %v721, %v935
        %v968 = vmul.f32 %v726, %v935
        %vm1002 = vcmask 1045504
        %v1003 = vrot.slane %v936, 2
        %v1004 = vrot.slane %v937, 2
        %v1005 = vsel %vm1002, %v1003, %v1004
        %v1006 = vrot.slane %v938, 2
        %v1007 = vsel %vm1002, %v1004, %v1006
        %v1008 = vrot.slane %v939, 2
        %v1009 = vsel %vm1002, %v1006, %v1008
        %v1010 = vrot.slane %v940, 2
        %v1011 = vsel %vm1002, %v1008, %v1010
        %v1012 = vrot.slane %v941, 2
        %v1013 = vsel %vm1002, %v1010, %v1012
        %v1014 = vrot.slane %v942, 2
        %v1015 = vsel %vm1002, %v1012, %v1014
        %v1016 = vrot.slane %v943, 2
        %v1017 = vsel %vm1002, %v1014, %v1016
        %v1018 = vrot.slane %v944, 2
        %v1019 = vsel %vm1002, %v1016, %v1018
        %v1020 = vrot.slane %v945, 2
        %v1021 = vsel %vm1002, %v1018, %v1020
        %v1022 = vrot.slane %v946, 2
        %v1023 = vsel %vm1002, %v1020, %v1022
        %v1024 = vrot.slane %v947, 2
        %v1025 = vsel %vm1002, %v1022, %v1024
        %v1026 = vrot.slane %v948, 2
        %v1027 = vsel %vm1002, %v1024, %v1026
        %v1028 = vrot.slane %v949, 2
        %v1029 = vsel %vm1002, %v1026, %v1028
        %v1030 = vrot.slane %v950, 2
        %v1031 = vsel %vm1002, %v1028, %v1030
        %v1032 = vrot.slane %v951, 2
        %v1033 = vsel %vm1002, %v1030, %v1032
        %v1034 = vrot.slane %v952, 2
        %v1035 = vsel %vm1002, %v1032, %v1034
        %v1036 = vrot.slane %v953, 2
        %v1037 = vsel %vm1002, %v1034, %v1036
        %v1038 = vrot.slane %v954, 2
        %v1039 = vsel %vm1002, %v1036, %v1038
        %v1040 = vrot.slane %v955, 2
        %v1041 = vsel %vm1002, %v1038, %v1040
        %v1042 = vrot.slane %v956, 2
        %v1043 = vsel %vm1002, %v1040, %v1042
        %v1044 = vrot.slane %v957, 2
        %v1045 = vsel %vm1002, %v1042, %v1044
        %v1046 = vrot.slane %v958, 2
        %v1047 = vsel %vm1002, %v1044, %v1046
        %v1048 = vrot.slane %v959, 2
        %v1049 = vsel %vm1002, %v1046, %v1048
        %v1050 = vrot.slane %v960, 2
        %v1051 = vsel %vm1002, %v1048, %v1050
        %v1052 = vrot.slane %v961, 2
        %v1053 = vsel %vm1002, %v1050, %v1052
        %v1054 = vrot.slane %v962, 2
        %v1055 = vsel %vm1002, %v1052, %v1054
        %v1056 = vrot.slane %v963, 2
        %v1057 = vsel %vm1002, %v1054, %v1056
        %v1058 = vrot.slane %v964, 2
        %v1059 = vsel %vm1002, %v1056, %v1058
        %v1060 = vrot.slane %v965, 2
        %v1061 = vsel %vm1002, %v1058, %v1060
        %v1062 = vrot.slane %v966, 2
        %v1063 = vsel %vm1002, %v1060, %v1062
        %v1064 = vrot.slane %v967, 2
        %v1065 = vsel %vm1002, %v1062, %v1064
        %v1066 = vrot.slane %v968, 2
        %v1067 = vsel %vm1002, %v1064, %v1066
        %v1100 = vadd.f32 %v893, %v1005
        %v1101 = vadd.f32 %v894, %v1007
        %v1102 = vadd.f32 %v895, %v1009
        %v1103 = vadd.f32 %v896, %v1011
        %v1104 = vadd.f32 %v897, %v1013
        %v1105 = vadd.f32 %v898, %v1015
        %v1106 = vadd.f32 %v899, %v1017
        %v1107 = vadd.f32 %v900, %v1019
        %v1108 = vadd.f32 %v901, %v1021
        %v1109 = vadd.f32 %v902, %v1023
        %v1110 = vadd.f32 %v903, %v1025
        %v1111 = vadd.f32 %v904, %v1027
        %v1112 = vadd.f32 %v905, %v1029
        %v1113 = vadd.f32 %v906, %v1031
        %v1114 = vadd.f32 %v907, %v1033
        %v1115 = vadd.f32 %v908, %v1035
        %v1116 = vadd.f32 %v909, %v1037
        %v1117 = vadd.f32 %v910, %v1039
        %v1118 = vadd.f32 %v911, %v1041
        %v1119 = vadd.f32 %v912, %v1043
        %v1120 = vadd.f32 %v913, %v1045
        %v1121 = vadd.f32 %v914, %v1047
        %v1122 = vadd.f32 %v915, %v1049
        %v1123 = vadd.f32 %v916, %v1051
        %v1124 = vadd.f32 %v917, %v1053
        %v1125 = vadd.f32 %v918, %v1055
        %v1126 = vadd.f32 %v919, %v1057
        %v1127 = vadd.f32 %v920, %v1059
        %v1128 = vadd.f32 %v921, %v1061
        %v1129 = vadd.f32 %v922, %v1063
        %v1130 = vadd.f32 %v923, %v1065
        %v1131 = vadd.f32 %v924, %v1067
        %v1132 = vld [vmem:[%s227 + $0x80] sm:$0x3]
        %s1133 = scalar_lea.vmem %s230, 3
        %v1134 = vld [vmem:[%s1133] sm:$0x1]
        %v1135 = vunpack.c.l.bf16 %v1132
        %v1136 = vunpack.c.l.bf16 %v1134
        %1138 = vset.pattern.permute.xlu0 0
        %1139 = vperm.xlu0 %1138, %v1135
        %v1140 = vpop.permute.xlu0 %1139
        %v1142 = vperm.slane %v1136, 0
        %v1143 = vmul.f32 %v933, %v1142
        %v1144 = vmul.f32 %v571, %v1142
        %v1145 = vmul.f32 %v576, %v1142
        %v1146 = vmul.f32 %v581, %v1142
        %v1147 = vmul.f32 %v586, %v1142
        %v1148 = vmul.f32 %v591, %v1142
        %v1149 = vmul.f32 %v596, %v1142
        %v1150 = vmul.f32 %v601, %v1142
        %v1151 = vmul.f32 %v606, %v1142
        %v1152 = vmul.f32 %v611, %v1142
        %v1153 = vmul.f32 %v616, %v1142
        %v1154 = vmul.f32 %v621, %v1142
        %v1155 = vmul.f32 %v626, %v1142
        %v1156 = vmul.f32 %v631, %v1142
        %v1157 = vmul.f32 %v636, %v1142
        %v1158 = vmul.f32 %v641, %v1142
        %v1159 = vmul.f32 %v646, %v1142
        %v1160 = vmul.f32 %v651, %v1142
        %v1161 = vmul.f32 %v656, %v1142
        %v1162 = vmul.f32 %v661, %v1142
        %v1163 = vmul.f32 %v666, %v1142
        %v1164 = vmul.f32 %v671, %v1142
        %v1165 = vmul.f32 %v676, %v1142
        %v1166 = vmul.f32 %v681, %v1142
        %v1167 = vmul.f32 %v686, %v1142
        %v1168 = vmul.f32 %v691, %v1142
        %v1169 = vmul.f32 %v696, %v1142
        %v1170 = vmul.f32 %v701, %v1142
        %v1171 = vmul.f32 %v706, %v1142
        %v1172 = vmul.f32 %v711, %v1142
        %v1173 = vmul.f32 %v716, %v1142
        %v1174 = vmul.f32 %v721, %v1142
        %v1175 = vmul.f32 %v1140, %v1142
        %vm1209 = vcmask 1044480
        %v1210 = vrot.slane %v1143, 3
        %v1211 = vrot.slane %v1144, 3
        %v1212 = vsel %vm1209, %v1210, %v1211
        %v1213 = vrot.slane %v1145, 3
        %v1214 = vsel %vm1209, %v1211, %v1213
        %v1215 = vrot.slane %v1146, 3
        %v1216 = vsel %vm1209, %v1213, %v1215
        %v1217 = vrot.slane %v1147, 3
        %v1218 = vsel %vm1209, %v1215, %v1217
        %v1219 = vrot.slane %v1148, 3
        %v1220 = vsel %vm1209, %v1217, %v1219
        %v1221 = vrot.slane %v1149, 3
        %v1222 = vsel %vm1209, %v1219, %v1221
        %v1223 = vrot.slane %v1150, 3
        %v1224 = vsel %vm1209, %v1221, %v1223
        %v1225 = vrot.slane %v1151, 3
        %v1226 = vsel %vm1209, %v1223, %v1225
        %v1227 = vrot.slane %v1152, 3
        %v1228 = vsel %vm1209, %v1225, %v1227
        %v1229 = vrot.slane %v1153, 3
        %v1230 = vsel %vm1209, %v1227, %v1229
        %v1231 = vrot.slane %v1154, 3
        %v1232 = vsel %vm1209, %v1229, %v1231
        %v1233 = vrot.slane %v1155, 3
        %v1234 = vsel %vm1209, %v1231, %v1233
        %v1235 = vrot.slane %v1156, 3
        %v1236 = vsel %vm1209, %v1233, %v1235
        %v1237 = vrot.slane %v1157, 3
        %v1238 = vsel %vm1209, %v1235, %v1237
        %v1239 = vrot.slane %v1158, 3
        %v1240 = vsel %vm1209, %v1237, %v1239
        %v1241 = vrot.slane %v1159, 3
        %v1242 = vsel %vm1209, %v1239, %v1241
        %v1243 = vrot.slane %v1160, 3
        %v1244 = vsel %vm1209, %v1241, %v1243
        %v1245 = vrot.slane %v1161, 3
        %v1246 = vsel %vm1209, %v1243, %v1245
        %v1247 = vrot.slane %v1162, 3
        %v1248 = vsel %vm1209, %v1245, %v1247
        %v1249 = vrot.slane %v1163, 3
        %v1250 = vsel %vm1209, %v1247, %v1249
        %v1251 = vrot.slane %v1164, 3
        %v1252 = vsel %vm1209, %v1249, %v1251
        %v1253 = vrot.slane %v1165, 3
        %v1254 = vsel %vm1209, %v1251, %v1253
        %v1255 = vrot.slane %v1166, 3
        %v1256 = vsel %vm1209, %v1253, %v1255
        %v1257 = vrot.slane %v1167, 3
        %v1258 = vsel %vm1209, %v1255, %v1257
        %v1259 = vrot.slane %v1168, 3
        %v1260 = vsel %vm1209, %v1257, %v1259
        %v1261 = vrot.slane %v1169, 3
        %v1262 = vsel %vm1209, %v1259, %v1261
        %v1263 = vrot.slane %v1170, 3
        %v1264 = vsel %vm1209, %v1261, %v1263
        %v1265 = vrot.slane %v1171, 3
        %v1266 = vsel %vm1209, %v1263, %v1265
        %v1267 = vrot.slane %v1172, 3
        %v1268 = vsel %vm1209, %v1265, %v1267
        %v1269 = vrot.slane %v1173, 3
        %v1270 = vsel %vm1209, %v1267, %v1269
        %v1271 = vrot.slane %v1174, 3
        %v1272 = vsel %vm1209, %v1269, %v1271
        %v1273 = vrot.slane %v1175, 3
        %v1274 = vsel %vm1209, %v1271, %v1273
        %v1307 = vadd.f32 %v1100, %v1212
        %v1308 = vadd.f32 %v1101, %v1214
        %v1309 = vadd.f32 %v1102, %v1216
        %v1310 = vadd.f32 %v1103, %v1218
        %v1311 = vadd.f32 %v1104, %v1220
        %v1312 = vadd.f32 %v1105, %v1222
        %v1313 = vadd.f32 %v1106, %v1224
        %v1314 = vadd.f32 %v1107, %v1226
        %v1315 = vadd.f32 %v1108, %v1228
        %v1316 = vadd.f32 %v1109, %v1230
        %v1317 = vadd.f32 %v1110, %v1232
        %v1318 = vadd.f32 %v1111, %v1234
        %v1319 = vadd.f32 %v1112, %v1236
        %v1320 = vadd.f32 %v1113, %v1238
        %v1321 = vadd.f32 %v1114, %v1240
        %v1322 = vadd.f32 %v1115, %v1242
        %v1323 = vadd.f32 %v1116, %v1244
        %v1324 = vadd.f32 %v1117, %v1246
        %v1325 = vadd.f32 %v1118, %v1248
        %v1326 = vadd.f32 %v1119, %v1250
        %v1327 = vadd.f32 %v1120, %v1252
        %v1328 = vadd.f32 %v1121, %v1254
        %v1329 = vadd.f32 %v1122, %v1256
        %v1330 = vadd.f32 %v1123, %v1258
        %v1331 = vadd.f32 %v1124, %v1260
        %v1332 = vadd.f32 %v1125, %v1262
        %v1333 = vadd.f32 %v1126, %v1264
        %v1334 = vadd.f32 %v1127, %v1266
        %v1335 = vadd.f32 %v1128, %v1268
        %v1336 = vadd.f32 %v1129, %v1270
        %v1337 = vadd.f32 %v1130, %v1272
        %v1338 = vadd.f32 %v1131, %v1274
        %v1339 = vld [vmem:[%s227] sm:$0xc]
        %s1340 = scalar_lea.vmem %s230, 4
        %v1341 = vld [vmem:[%s1340] sm:$0x1]
        %v1342 = vunpack.c.l.bf16 %v1339
        %v1343 = vunpack.c.l.bf16 %v1341
        %1345 = vset.pattern.permute.xlu0 0
        %1346 = vperm.xlu0 %1345, %v1342
        %v1347 = vpop.permute.xlu0 %1346
        %v1349 = vperm.slane %v1343, 0
        %v1350 = vmul.f32 %v1347, %v1349
        %v1351 = vmul.f32 %v571, %v1349
        %v1352 = vmul.f32 %v576, %v1349
        %v1353 = vmul.f32 %v581, %v1349
        %v1354 = vmul.f32 %v586, %v1349
        %v1355 = vmul.f32 %v591, %v1349
        %v1356 = vmul.f32 %v596, %v1349
        %v1357 = vmul.f32 %v601, %v1349
        %v1358 = vmul.f32 %v606, %v1349
        %v1359 = vmul.f32 %v611, %v1349
        %v1360 = vmul.f32 %v616, %v1349
        %v1361 = vmul.f32 %v621, %v1349
        %v1362 = vmul.f32 %v626, %v1349
        %v1363 = vmul.f32 %v631, %v1349
        %v1364 = vmul.f32 %v636, %v1349
        %v1365 = vmul.f32 %v641, %v1349
        %v1366 = vmul.f32 %v646, %v1349
        %v1367 = vmul.f32 %v651, %v1349
        %v1368 = vmul.f32 %v656, %v1349
        %v1369 = vmul.f32 %v661, %v1349
        %v1370 = vmul.f32 %v666, %v1349
        %v1371 = vmul.f32 %v671, %v1349
        %v1372 = vmul.f32 %v676, %v1349
        %v1373 = vmul.f32 %v681, %v1349
        %v1374 = vmul.f32 %v686, %v1349
        %v1375 = vmul.f32 %v691, %v1349
        %v1376 = vmul.f32 %v696, %v1349
        %v1377 = vmul.f32 %v701, %v1349
        %v1378 = vmul.f32 %v706, %v1349
        %v1379 = vmul.f32 %v711, %v1349
        %v1380 = vmul.f32 %v716, %v1349
        %v1381 = vmul.f32 %v721, %v1349
        %v1382 = vmul.f32 %v1140, %v1349
        %vm1416 = vcmask 1043456
        %v1417 = vrot.slane %v1350, 4
        %v1418 = vrot.slane %v1351, 4
        %v1419 = vsel %vm1416, %v1417, %v1418
        %v1420 = vrot.slane %v1352, 4
        %v1421 = vsel %vm1416, %v1418, %v1420
        %v1422 = vrot.slane %v1353, 4
        %v1423 = vsel %vm1416, %v1420, %v1422
        %v1424 = vrot.slane %v1354, 4
        %v1425 = vsel %vm1416, %v1422, %v1424
        %v1426 = vrot.slane %v1355, 4
        %v1427 = vsel %vm1416, %v1424, %v1426
        %v1428 = vrot.slane %v1356, 4
        %v1429 = vsel %vm1416, %v1426, %v1428
        %v1430 = vrot.slane %v1357, 4
        %v1431 = vsel %vm1416, %v1428, %v1430
        %v1432 = vrot.slane %v1358, 4
        %v1433 = vsel %vm1416, %v1430, %v1432
        %v1434 = vrot.slane %v1359, 4
        %v1435 = vsel %vm1416, %v1432, %v1434
        %v1436 = vrot.slane %v1360, 4
        %v1437 = vsel %vm1416, %v1434, %v1436
        %v1438 = vrot.slane %v1361, 4
        %v1439 = vsel %vm1416, %v1436, %v1438
        %v1440 = vrot.slane %v1362, 4
        %v1441 = vsel %vm1416, %v1438, %v1440
        %v1442 = vrot.slane %v1363, 4
        %v1443 = vsel %vm1416, %v1440, %v1442
        %v1444 = vrot.slane %v1364, 4
        %v1445 = vsel %vm1416, %v1442, %v1444
        %v1446 = vrot.slane %v1365, 4
        %v1447 = vsel %vm1416, %v1444, %v1446
        %v1448 = vrot.slane %v1366, 4
        %v1449 = vsel %vm1416, %v1446, %v1448
        %v1450 = vrot.slane %v1367, 4
        %v1451 = vsel %vm1416, %v1448, %v1450
        %v1452 = vrot.slane %v1368, 4
        %v1453 = vsel %vm1416, %v1450, %v1452
        %v1454 = vrot.slane %v1369, 4
        %v1455 = vsel %vm1416, %v1452, %v1454
        %v1456 = vrot.slane %v1370, 4
        %v1457 = vsel %vm1416, %v1454, %v1456
        %v1458 = vrot.slane %v1371, 4
        %v1459 = vsel %vm1416, %v1456, %v1458
        %v1460 = vrot.slane %v1372, 4
        %v1461 = vsel %vm1416, %v1458, %v1460
        %v1462 = vrot.slane %v1373, 4
        %v1463 = vsel %vm1416, %v1460, %v1462
        %v1464 = vrot.slane %v1374, 4
        %v1465 = vsel %vm1416, %v1462, %v1464
        %v1466 = vrot.slane %v1375, 4
        %v1467 = vsel %vm1416, %v1464, %v1466
        %v1468 = vrot.slane %v1376, 4
        %v1469 = vsel %vm1416, %v1466, %v1468
        %v1470 = vrot.slane %v1377, 4
        %v1471 = vsel %vm1416, %v1468, %v1470
        %v1472 = vrot.slane %v1378, 4
        %v1473 = vsel %vm1416, %v1470, %v1472
        %v1474 = vrot.slane %v1379, 4
        %v1475 = vsel %vm1416, %v1472, %v1474
        %v1476 = vrot.slane %v1380, 4
        %v1477 = vsel %vm1416, %v1474, %v1476
        %v1478 = vrot.slane %v1381, 4
        %v1479 = vsel %vm1416, %v1476, %v1478
        %v1480 = vrot.slane %v1382, 4
        %v1481 = vsel %vm1416, %v1478, %v1480
        %v1514 = vadd.f32 %v1307, %v1419
        %v1515 = vadd.f32 %v1308, %v1421
        %v1516 = vadd.f32 %v1309, %v1423
        %v1517 = vadd.f32 %v1310, %v1425
        %v1518 = vadd.f32 %v1311, %v1427
        %v1519 = vadd.f32 %v1312, %v1429
        %v1520 = vadd.f32 %v1313, %v1431
        %v1521 = vadd.f32 %v1314, %v1433
        %v1522 = vadd.f32 %v1315, %v1435
        %v1523 = vadd.f32 %v1316, %v1437
        %v1524 = vadd.f32 %v1317, %v1439
        %v1525 = vadd.f32 %v1318, %v1441
        %v1526 = vadd.f32 %v1319, %v1443
        %v1527 = vadd.f32 %v1320, %v1445
        %v1528 = vadd.f32 %v1321, %v1447
        %v1529 = vadd.f32 %v1322, %v1449
        %v1530 = vadd.f32 %v1323, %v1451
        %v1531 = vadd.f32 %v1324, %v1453
        %v1532 = vadd.f32 %v1325, %v1455
        %v1533 = vadd.f32 %v1326, %v1457
        %v1534 = vadd.f32 %v1327, %v1459
        %v1535 = vadd.f32 %v1328, %v1461
        %v1536 = vadd.f32 %v1329, %v1463
        %v1537 = vadd.f32 %v1330, %v1465
        %v1538 = vadd.f32 %v1331, %v1467
        %v1539 = vadd.f32 %v1332, %v1469
        %v1540 = vadd.f32 %v1333, %v1471
        %v1541 = vadd.f32 %v1334, %v1473
        %v1542 = vadd.f32 %v1335, %v1475
        %v1543 = vadd.f32 %v1336, %v1477
        %v1544 = vadd.f32 %v1337, %v1479
        %v1545 = vadd.f32 %v1338, %v1481
        %v1546 = vld [vmem:[%s227 + $0x80] sm:$0x7]
        %s1547 = scalar_lea.vmem %s230, 5
        %v1548 = vld [vmem:[%s1547] sm:$0x1]
        %v1549 = vunpack.c.l.bf16 %v1546
        %v1550 = vunpack.c.l.bf16 %v1548
        %1552 = vset.pattern.permute.xlu0 0
        %1553 = vperm.xlu0 %1552, %v1549
        %v1554 = vpop.permute.xlu0 %1553
        %v1556 = vperm.slane %v1550, 0
        %v1557 = vmul.f32 %v1347, %v1556
        %v1558 = vmul.f32 %v571, %v1556
        %v1559 = vmul.f32 %v576, %v1556
        %v1560 = vmul.f32 %v581, %v1556
        %v1561 = vmul.f32 %v586, %v1556
        %v1562 = vmul.f32 %v591, %v1556
        %v1563 = vmul.f32 %v596, %v1556
        %v1564 = vmul.f32 %v601, %v1556
        %v1565 = vmul.f32 %v606, %v1556
        %v1566 = vmul.f32 %v611, %v1556
        %v1567 = vmul.f32 %v616, %v1556
        %v1568 = vmul.f32 %v621, %v1556
        %v1569 = vmul.f32 %v626, %v1556
        %v1570 = vmul.f32 %v631, %v1556
        %v1571 = vmul.f32 %v636, %v1556
        %v1572 = vmul.f32 %v641, %v1556
        %v1573 = vmul.f32 %v646, %v1556
        %v1574 = vmul.f32 %v651, %v1556
        %v1575 = vmul.f32 %v656, %v1556
        %v1576 = vmul.f32 %v661, %v1556
        %v1577 = vmul.f32 %v666, %v1556
        %v1578 = vmul.f32 %v671, %v1556
        %v1579 = vmul.f32 %v676, %v1556
        %v1580 = vmul.f32 %v681, %v1556
        %v1581 = vmul.f32 %v686, %v1556
        %v1582 = vmul.f32 %v691, %v1556
        %v1583 = vmul.f32 %v696, %v1556
        %v1584 = vmul.f32 %v701, %v1556
        %v1585 = vmul.f32 %v706, %v1556
        %v1586 = vmul.f32 %v711, %v1556
        %v1587 = vmul.f32 %v716, %v1556
        %v1588 = vmul.f32 %v721, %v1556
        %v1589 = vmul.f32 %v1554, %v1556
        %vm1623 = vcmask 1042432
        %v1624 = vrot.slane %v1557, 5
        %v1625 = vrot.slane %v1558, 5
        %v1626 = vsel %vm1623, %v1624, %v1625
        %v1627 = vrot.slane %v1559, 5
        %v1628 = vsel %vm1623, %v1625, %v1627
        %v1629 = vrot.slane %v1560, 5
        %v1630 = vsel %vm1623, %v1627, %v1629
        %v1631 = vrot.slane %v1561, 5
        %v1632 = vsel %vm1623, %v1629, %v1631
        %v1633 = vrot.slane %v1562, 5
        %v1634 = vsel %vm1623, %v1631, %v1633
        %v1635 = vrot.slane %v1563, 5
        %v1636 = vsel %vm1623, %v1633, %v1635
        %v1637 = vrot.slane %v1564, 5
        %v1638 = vsel %vm1623, %v1635, %v1637
        %v1639 = vrot.slane %v1565, 5
        %v1640 = vsel %vm1623, %v1637, %v1639
        %v1641 = vrot.slane %v1566, 5
        %v1642 = vsel %vm1623, %v1639, %v1641
        %v1643 = vrot.slane %v1567, 5
        %v1644 = vsel %vm1623, %v1641, %v1643
        %v1645 = vrot.slane %v1568, 5
        %v1646 = vsel %vm1623, %v1643, %v1645
        %v1647 = vrot.slane %v1569, 5
        %v1648 = vsel %vm1623, %v1645, %v1647
        %v1649 = vrot.slane %v1570, 5
        %v1650 = vsel %vm1623, %v1647, %v1649
        %v1651 = vrot.slane %v1571, 5
        %v1652 = vsel %vm1623, %v1649, %v1651
        %v1653 = vrot.slane %v1572, 5
        %v1654 = vsel %vm1623, %v1651, %v1653
        %v1655 = vrot.slane %v1573, 5
        %v1656 = vsel %vm1623, %v1653, %v1655
        %v1657 = vrot.slane %v1574, 5
        %v1658 = vsel %vm1623, %v1655, %v1657
        %v1659 = vrot.slane %v1575, 5
        %v1660 = vsel %vm1623, %v1657, %v1659
        %v1661 = vrot.slane %v1576, 5
        %v1662 = vsel %vm1623, %v1659, %v1661
        %v1663 = vrot.slane %v1577, 5
        %v1664 = vsel %vm1623, %v1661, %v1663
        %v1665 = vrot.slane %v1578, 5
        %v1666 = vsel %vm1623, %v1663, %v1665
        %v1667 = vrot.slane %v1579, 5
        %v1668 = vsel %vm1623, %v1665, %v1667
        %v1669 = vrot.slane %v1580, 5
        %v1670 = vsel %vm1623, %v1667, %v1669
        %v1671 = vrot.slane %v1581, 5
        %v1672 = vsel %vm1623, %v1669, %v1671
        %v1673 = vrot.slane %v1582, 5
        %v1674 = vsel %vm1623, %v1671, %v1673
        %v1675 = vrot.slane %v1583, 5
        %v1676 = vsel %vm1623, %v1673, %v1675
        %v1677 = vrot.slane %v1584, 5
        %v1678 = vsel %vm1623, %v1675, %v1677
        %v1679 = vrot.slane %v1585, 5
        %v1680 = vsel %vm1623, %v1677, %v1679
        %v1681 = vrot.slane %v1586, 5
        %v1682 = vsel %vm1623, %v1679, %v1681
        %v1683 = vrot.slane %v1587, 5
        %v1684 = vsel %vm1623, %v1681, %v1683
        %v1685 = vrot.slane %v1588, 5
        %v1686 = vsel %vm1623, %v1683, %v1685
        %v1687 = vrot.slane %v1589, 5
        %v1688 = vsel %vm1623, %v1685, %v1687
        %v1721 = vadd.f32 %v1514, %v1626
        %v1722 = vadd.f32 %v1515, %v1628
        %v1723 = vadd.f32 %v1516, %v1630
        %v1724 = vadd.f32 %v1517, %v1632
        %v1725 = vadd.f32 %v1518, %v1634
        %v1726 = vadd.f32 %v1519, %v1636
        %v1727 = vadd.f32 %v1520, %v1638
        %v1728 = vadd.f32 %v1521, %v1640
        %v1729 = vadd.f32 %v1522, %v1642
        %v1730 = vadd.f32 %v1523, %v1644
        %v1731 = vadd.f32 %v1524, %v1646
        %v1732 = vadd.f32 %v1525, %v1648
        %v1733 = vadd.f32 %v1526, %v1650
        %v1734 = vadd.f32 %v1527, %v1652
        %v1735 = vadd.f32 %v1528, %v1654
        %v1736 = vadd.f32 %v1529, %v1656
        %v1737 = vadd.f32 %v1530, %v1658
        %v1738 = vadd.f32 %v1531, %v1660
        %v1739 = vadd.f32 %v1532, %v1662
        %v1740 = vadd.f32 %v1533, %v1664
        %v1741 = vadd.f32 %v1534, %v1666
        %v1742 = vadd.f32 %v1535, %v1668
        %v1743 = vadd.f32 %v1536, %v1670
        %v1744 = vadd.f32 %v1537, %v1672
        %v1745 = vadd.f32 %v1538, %v1674
        %v1746 = vadd.f32 %v1539, %v1676
        %v1747 = vadd.f32 %v1540, %v1678
        %v1748 = vadd.f32 %v1541, %v1680
        %v1749 = vadd.f32 %v1542, %v1682
        %v1750 = vadd.f32 %v1543, %v1684
        %v1751 = vadd.f32 %v1544, %v1686
        %v1752 = vadd.f32 %v1545, %v1688
        %v1753 = vld [vmem:[%s227] sm:$0x8]
        %s1754 = scalar_lea.vmem %s230, 6
        %v1755 = vld [vmem:[%s1754] sm:$0x1]
        %v1756 = vunpack.c.l.bf16 %v1753
        %v1757 = vunpack.c.l.bf16 %v1755
        %1759 = vset.pattern.permute.xlu0 0
        %1760 = vperm.xlu0 %1759, %v1756
        %v1761 = vpop.permute.xlu0 %1760
        %v1763 = vperm.slane %v1757, 0
        %v1764 = vmul.f32 %v1761, %v1763
        %v1765 = vmul.f32 %v571, %v1763
        %v1766 = vmul.f32 %v576, %v1763
        %v1767 = vmul.f32 %v581, %v1763
        %v1768 = vmul.f32 %v586, %v1763
        %v1769 = vmul.f32 %v591, %v1763
        %v1770 = vmul.f32 %v596, %v1763
        %v1771 = vmul.f32 %v601, %v1763
        %v1772 = vmul.f32 %v606, %v1763
        %v1773 = vmul.f32 %v611, %v1763
        %v1774 = vmul.f32 %v616, %v1763
        %v1775 = vmul.f32 %v621, %v1763
        %v1776 = vmul.f32 %v626, %v1763
        %v1777 = vmul.f32 %v631, %v1763
        %v1778 = vmul.f32 %v636, %v1763
        %v1779 = vmul.f32 %v641, %v1763
        %v1780 = vmul.f32 %v646, %v1763
        %v1781 = vmul.f32 %v651, %v1763
        %v1782 = vmul.f32 %v656, %v1763
        %v1783 = vmul.f32 %v661, %v1763
        %v1784 = vmul.f32 %v666, %v1763
        %v1785 = vmul.f32 %v671, %v1763
        %v1786 = vmul.f32 %v676, %v1763
        %v1787 = vmul.f32 %v681, %v1763
        %v1788 = vmul.f32 %v686, %v1763
        %v1789 = vmul.f32 %v691, %v1763
        %v1790 = vmul.f32 %v696, %v1763
        %v1791 = vmul.f32 %v701, %v1763
        %v1792 = vmul.f32 %v706, %v1763
        %v1793 = vmul.f32 %v711, %v1763
        %v1794 = vmul.f32 %v716, %v1763
        %v1795 = vmul.f32 %v721, %v1763
        %v1796 = vmul.f32 %v1554, %v1763
        %vm1830 = vcmask 1041408
        %v1831 = vrot.slane %v1764, 6
        %v1832 = vrot.slane %v1765, 6
        %v1833 = vsel %vm1830, %v1831, %v1832
        %v1834 = vrot.slane %v1766, 6
        %v1835 = vsel %vm1830, %v1832, %v1834
        %v1836 = vrot.slane %v1767, 6
        %v1837 = vsel %vm1830, %v1834, %v1836
        %v1838 = vrot.slane %v1768, 6
        %v1839 = vsel %vm1830, %v1836, %v1838
        %v1840 = vrot.slane %v1769, 6
        %v1841 = vsel %vm1830, %v1838, %v1840
        %v1842 = vrot.slane %v1770, 6
        %v1843 = vsel %vm1830, %v1840, %v1842
        %v1844 = vrot.slane %v1771, 6
        %v1845 = vsel %vm1830, %v1842, %v1844
        %v1846 = vrot.slane %v1772, 6
        %v1847 = vsel %vm1830, %v1844, %v1846
        %v1848 = vrot.slane %v1773, 6
        %v1849 = vsel %vm1830, %v1846, %v1848
        %v1850 = vrot.slane %v1774, 6
        %v1851 = vsel %vm1830, %v1848, %v1850
        %v1852 = vrot.slane %v1775, 6
        %v1853 = vsel %vm1830, %v1850, %v1852
        %v1854 = vrot.slane %v1776, 6
        %v1855 = vsel %vm1830, %v1852, %v1854
        %v1856 = vrot.slane %v1777, 6
        %v1857 = vsel %vm1830, %v1854, %v1856
        %v1858 = vrot.slane %v1778, 6
        %v1859 = vsel %vm1830, %v1856, %v1858
        %v1860 = vrot.slane %v1779, 6
        %v1861 = vsel %vm1830, %v1858, %v1860
        %v1862 = vrot.slane %v1780, 6
        %v1863 = vsel %vm1830, %v1860, %v1862
        %v1864 = vrot.slane %v1781, 6
        %v1865 = vsel %vm1830, %v1862, %v1864
        %v1866 = vrot.slane %v1782, 6
        %v1867 = vsel %vm1830, %v1864, %v1866
        %v1868 = vrot.slane %v1783, 6
        %v1869 = vsel %vm1830, %v1866, %v1868
        %v1870 = vrot.slane %v1784, 6
        %v1871 = vsel %vm1830, %v1868, %v1870
        %v1872 = vrot.slane %v1785, 6
        %v1873 = vsel %vm1830, %v1870, %v1872
        %v1874 = vrot.slane %v1786, 6
        %v1875 = vsel %vm1830, %v1872, %v1874
        %v1876 = vrot.slane %v1787, 6
        %v1877 = vsel %vm1830, %v1874, %v1876
        %v1878 = vrot.slane %v1788, 6
        %v1879 = vsel %vm1830, %v1876, %v1878
        %v1880 = vrot.slane %v1789, 6
        %v1881 = vsel %vm1830, %v1878, %v1880
        %v1882 = vrot.slane %v1790, 6
        %v1883 = vsel %vm1830, %v1880, %v1882
        %v1884 = vrot.slane %v1791, 6
        %v1885 = vsel %vm1830, %v1882, %v1884
        %v1886 = vrot.slane %v1792, 6
        %v1887 = vsel %vm1830, %v1884, %v1886
        %v1888 = vrot.slane %v1793, 6
        %v1889 = vsel %vm1830, %v1886, %v1888
        %v1890 = vrot.slane %v1794, 6
        %v1891 = vsel %vm1830, %v1888, %v1890
        %v1892 = vrot.slane %v1795, 6
        %v1893 = vsel %vm1830, %v1890, %v1892
        %v1894 = vrot.slane %v1796, 6
        %v1895 = vsel %vm1830, %v1892, %v1894
        %v1928 = vadd.f32 %v1721, %v1833
        %v1929 = vadd.f32 %v1722, %v1835
        %v1930 = vadd.f32 %v1723, %v1837
        %v1931 = vadd.f32 %v1724, %v1839
        %v1932 = vadd.f32 %v1725, %v1841
        %v1933 = vadd.f32 %v1726, %v1843
        %v1934 = vadd.f32 %v1727, %v1845
        %v1935 = vadd.f32 %v1728, %v1847
        %v1936 = vadd.f32 %v1729, %v1849
        %v1937 = vadd.f32 %v1730, %v1851
        %v1938 = vadd.f32 %v1731, %v1853
        %v1939 = vadd.f32 %v1732, %v1855
        %v1940 = vadd.f32 %v1733, %v1857
        %v1941 = vadd.f32 %v1734, %v1859
        %v1942 = vadd.f32 %v1735, %v1861
        %v1943 = vadd.f32 %v1736, %v1863
        %v1944 = vadd.f32 %v1737, %v1865
        %v1945 = vadd.f32 %v1738, %v1867
        %v1946 = vadd.f32 %v1739, %v1869
        %v1947 = vadd.f32 %v1740, %v1871
        %v1948 = vadd.f32 %v1741, %v1873
        %v1949 = vadd.f32 %v1742, %v1875
        %v1950 = vadd.f32 %v1743, %v1877
        %v1951 = vadd.f32 %v1744, %v1879
        %v1952 = vadd.f32 %v1745, %v1881
        %v1953 = vadd.f32 %v1746, %v1883
        %v1954 = vadd.f32 %v1747, %v1885
        %v1955 = vadd.f32 %v1748, %v1887
        %v1956 = vadd.f32 %v1749, %v1889
        %v1957 = vadd.f32 %v1750, %v1891
        %v1958 = vadd.f32 %v1751, %v1893
        %v1959 = vadd.f32 %v1752, %v1895
        %v1960 = vld [vmem:[%s227 + $0x80] sm:$0xf]
        %s1961 = scalar_lea.vmem %s230, 7
        %v1962 = vld [vmem:[%s1961] sm:$0x1]
        %v1963 = vunpack.c.l.bf16 %v1960
        %v1964 = vunpack.c.l.bf16 %v1962
        %1966 = vset.pattern.permute.xlu0 0
        %1967 = vperm.xlu0 %1966, %v1963
        %v1968 = vpop.permute.xlu0 %1967
        %v1970 = vperm.slane %v1964, 0
        %v1971 = vmul.f32 %v1761, %v1970
        %v1972 = vmul.f32 %v571, %v1970
        %v1973 = vmul.f32 %v576, %v1970
        %v1974 = vmul.f32 %v581, %v1970
        %v1975 = vmul.f32 %v586, %v1970
        %v1976 = vmul.f32 %v591, %v1970
        %v1977 = vmul.f32 %v596, %v1970
        %v1978 = vmul.f32 %v601, %v1970
        %v1979 = vmul.f32 %v606, %v1970
        %v1980 = vmul.f32 %v611, %v1970
        %v1981 = vmul.f32 %v616, %v1970
        %v1982 = vmul.f32 %v621, %v1970
        %v1983 = vmul.f32 %v626, %v1970
        %v1984 = vmul.f32 %v631, %v1970
        %v1985 = vmul.f32 %v636, %v1970
        %v1986 = vmul.f32 %v641, %v1970
        %v1987 = vmul.f32 %v646, %v1970
        %v1988 = vmul.f32 %v651, %v1970
        %v1989 = vmul.f32 %v656, %v1970
        %v1990 = vmul.f32 %v661, %v1970
        %v1991 = vmul.f32 %v666, %v1970
        %v1992 = vmul.f32 %v671, %v1970
        %v1993 = vmul.f32 %v676, %v1970
        %v1994 = vmul.f32 %v681, %v1970
        %v1995 = vmul.f32 %v686, %v1970
        %v1996 = vmul.f32 %v691, %v1970
        %v1997 = vmul.f32 %v696, %v1970
        %v1998 = vmul.f32 %v701, %v1970
        %v1999 = vmul.f32 %v706, %v1970
        %v2000 = vmul.f32 %v711, %v1970
        %v2001 = vmul.f32 %v716, %v1970
        %v2002 = vmul.f32 %v721, %v1970
        %v2003 = vmul.f32 %v1968, %v1970
        %vm2037 = vcmask 1040384
        %v2038 = vrot.slane %v1971, 7
        %v2039 = vrot.slane %v1972, 7
        %v2040 = vsel %vm2037, %v2038, %v2039
        %v2041 = vrot.slane %v1973, 7
        %v2042 = vsel %vm2037, %v2039, %v2041
        %v2043 = vrot.slane %v1974, 7
        %v2044 = vsel %vm2037, %v2041, %v2043
        %v2045 = vrot.slane %v1975, 7
        %v2046 = vsel %vm2037, %v2043, %v2045
        %v2047 = vrot.slane %v1976, 7
        %v2048 = vsel %vm2037, %v2045, %v2047
        %v2049 = vrot.slane %v1977, 7
        %v2050 = vsel %vm2037, %v2047, %v2049
        %v2051 = vrot.slane %v1978, 7
        %v2052 = vsel %vm2037, %v2049, %v2051
        %v2053 = vrot.slane %v1979, 7
        %v2054 = vsel %vm2037, %v2051, %v2053
        %v2055 = vrot.slane %v1980, 7
        %v2056 = vsel %vm2037, %v2053, %v2055
        %v2057 = vrot.slane %v1981, 7
        %v2058 = vsel %vm2037, %v2055, %v2057
        %v2059 = vrot.slane %v1982, 7
        %v2060 = vsel %vm2037, %v2057, %v2059
        %v2061 = vrot.slane %v1983, 7
        %v2062 = vsel %vm2037, %v2059, %v2061
        %v2063 = vrot.slane %v1984, 7
        %v2064 = vsel %vm2037, %v2061, %v2063
        %v2065 = vrot.slane %v1985, 7
        %v2066 = vsel %vm2037, %v2063, %v2065
        %v2067 = vrot.slane %v1986, 7
        %v2068 = vsel %vm2037, %v2065, %v2067
        %v2069 = vrot.slane %v1987, 7
        %v2070 = vsel %vm2037, %v2067, %v2069
        %v2071 = vrot.slane %v1988, 7
        %v2072 = vsel %vm2037, %v2069, %v2071
        %v2073 = vrot.slane %v1989, 7
        %v2074 = vsel %vm2037, %v2071, %v2073
        %v2075 = vrot.slane %v1990, 7
        %v2076 = vsel %vm2037, %v2073, %v2075
        %v2077 = vrot.slane %v1991, 7
        %v2078 = vsel %vm2037, %v2075, %v2077
        %v2079 = vrot.slane %v1992, 7
        %v2080 = vsel %vm2037, %v2077, %v2079
        %v2081 = vrot.slane %v1993, 7
        %v2082 = vsel %vm2037, %v2079, %v2081
        %v2083 = vrot.slane %v1994, 7
        %v2084 = vsel %vm2037, %v2081, %v2083
        %v2085 = vrot.slane %v1995, 7
        %v2086 = vsel %vm2037, %v2083, %v2085
        %v2087 = vrot.slane %v1996, 7
        %v2088 = vsel %vm2037, %v2085, %v2087
        %v2089 = vrot.slane %v1997, 7
        %v2090 = vsel %vm2037, %v2087, %v2089
        %v2091 = vrot.slane %v1998, 7
        %v2092 = vsel %vm2037, %v2089, %v2091
        %v2093 = vrot.slane %v1999, 7
        %v2094 = vsel %vm2037, %v2091, %v2093
        %v2095 = vrot.slane %v2000, 7
        %v2096 = vsel %vm2037, %v2093, %v2095
        %v2097 = vrot.slane %v2001, 7
        %v2098 = vsel %vm2037, %v2095, %v2097
        %v2099 = vrot.slane %v2002, 7
        %v2100 = vsel %vm2037, %v2097, %v2099
        %v2101 = vrot.slane %v2003, 7
        %v2102 = vsel %vm2037, %v2099, %v2101
        %v2135 = vadd.f32 %v1928, %v2040
        %v2136 = vadd.f32 %v1929, %v2042
        %v2137 = vadd.f32 %v1930, %v2044
        %v2138 = vadd.f32 %v1931, %v2046
        %v2139 = vadd.f32 %v1932, %v2048
        %v2140 = vadd.f32 %v1933, %v2050
        %v2141 = vadd.f32 %v1934, %v2052
        %v2142 = vadd.f32 %v1935, %v2054
        %v2143 = vadd.f32 %v1936, %v2056
        %v2144 = vadd.f32 %v1937, %v2058
        %v2145 = vadd.f32 %v1938, %v2060
        %v2146 = vadd.f32 %v1939, %v2062
        %v2147 = vadd.f32 %v1940, %v2064
        %v2148 = vadd.f32 %v1941, %v2066
        %v2149 = vadd.f32 %v1942, %v2068
        %v2150 = vadd.f32 %v1943, %v2070
        %v2151 = vadd.f32 %v1944, %v2072
        %v2152 = vadd.f32 %v1945, %v2074
        %v2153 = vadd.f32 %v1946, %v2076
        %v2154 = vadd.f32 %v1947, %v2078
        %v2155 = vadd.f32 %v1948, %v2080
        %v2156 = vadd.f32 %v1949, %v2082
        %v2157 = vadd.f32 %v1950, %v2084
        %v2158 = vadd.f32 %v1951, %v2086
        %v2159 = vadd.f32 %v1952, %v2088
        %v2160 = vadd.f32 %v1953, %v2090
        %v2161 = vadd.f32 %v1954, %v2092
        %v2162 = vadd.f32 %v1955, %v2094
        %v2163 = vadd.f32 %v1956, %v2096
        %v2164 = vadd.f32 %v1957, %v2098
        %v2165 = vadd.f32 %v1958, %v2100
        %v2166 = vadd.f32 %v1959, %v2102
        %s2167 = scalar_lea.vmem %s230, 8
        %v2168 = vld [vmem:[%s2167] sm:$0x1]
        %v2169 = vunpack.c.l.bf16 %v2168
        %v2170 = vperm.slane %v2169, 0
        %v2171 = vmul.f32 %v571, %v2170
        %v2172 = vmul.f32 %v576, %v2170
        %v2173 = vmul.f32 %v581, %v2170
        %v2174 = vmul.f32 %v586, %v2170
        %v2175 = vmul.f32 %v591, %v2170
        %v2176 = vmul.f32 %v596, %v2170
        %v2177 = vmul.f32 %v601, %v2170
        %v2178 = vmul.f32 %v606, %v2170
        %v2179 = vmul.f32 %v611, %v2170
        %v2180 = vmul.f32 %v616, %v2170
        %v2181 = vmul.f32 %v621, %v2170
        %v2182 = vmul.f32 %v626, %v2170
        %v2183 = vmul.f32 %v631, %v2170
        %v2184 = vmul.f32 %v636, %v2170
        %v2185 = vmul.f32 %v641, %v2170
        %v2186 = vmul.f32 %v646, %v2170
        %v2187 = vmul.f32 %v651, %v2170
        %v2188 = vmul.f32 %v656, %v2170
        %v2189 = vmul.f32 %v661, %v2170
        %v2190 = vmul.f32 %v666, %v2170
        %v2191 = vmul.f32 %v671, %v2170
        %v2192 = vmul.f32 %v676, %v2170
        %v2193 = vmul.f32 %v681, %v2170
        %v2194 = vmul.f32 %v686, %v2170
        %v2195 = vmul.f32 %v691, %v2170
        %v2196 = vmul.f32 %v696, %v2170
        %v2197 = vmul.f32 %v701, %v2170
        %v2198 = vmul.f32 %v706, %v2170
        %v2199 = vmul.f32 %v711, %v2170
        %v2200 = vmul.f32 %v716, %v2170
        %v2201 = vmul.f32 %v721, %v2170
        %v2202 = vmul.f32 %v1968, %v2170
        %v2203 = vadd.f32 %v2135, %v2171
        %v2204 = vadd.f32 %v2136, %v2172
        %v2205 = vadd.f32 %v2137, %v2173
        %v2206 = vadd.f32 %v2138, %v2174
        %v2207 = vadd.f32 %v2139, %v2175
        %v2208 = vadd.f32 %v2140, %v2176
        %v2209 = vadd.f32 %v2141, %v2177
        %v2210 = vadd.f32 %v2142, %v2178
        %v2211 = vadd.f32 %v2143, %v2179
        %v2212 = vadd.f32 %v2144, %v2180
        %v2213 = vadd.f32 %v2145, %v2181
        %v2214 = vadd.f32 %v2146, %v2182
        %v2215 = vadd.f32 %v2147, %v2183
        %v2216 = vadd.f32 %v2148, %v2184
        %v2217 = vadd.f32 %v2149, %v2185
        %v2218 = vadd.f32 %v2150, %v2186
        %v2219 = vadd.f32 %v2151, %v2187
        %v2220 = vadd.f32 %v2152, %v2188
        %v2221 = vadd.f32 %v2153, %v2189
        %v2222 = vadd.f32 %v2154, %v2190
        %v2223 = vadd.f32 %v2155, %v2191
        %v2224 = vadd.f32 %v2156, %v2192
        %v2225 = vadd.f32 %v2157, %v2193
        %v2226 = vadd.f32 %v2158, %v2194
        %v2227 = vadd.f32 %v2159, %v2195
        %v2228 = vadd.f32 %v2160, %v2196
        %v2229 = vadd.f32 %v2161, %v2197
        %v2230 = vadd.f32 %v2162, %v2198
        %v2231 = vadd.f32 %v2163, %v2199
        %v2232 = vadd.f32 %v2164, %v2200
        %v2233 = vadd.f32 %v2165, %v2201
        %v2234 = vadd.f32 %v2166, %v2202
        %v2235 = vld [vmem:[%s227 + $0x4] sm:$0xf]
        %v2236 = vld [vmem:[%s227 + $0x8] sm:$0xf]
        %v2237 = vld [vmem:[%s227 + $0xc] sm:$0xf]
        %v2238 = vld [vmem:[%s227 + $0x10] sm:$0xf]
        %v2239 = vld [vmem:[%s227 + $0x14] sm:$0xf]
        %v2240 = vld [vmem:[%s227 + $0x18] sm:$0xf]
        %v2241 = vld [vmem:[%s227 + $0x1c] sm:$0xf]
        %v2242 = vld [vmem:[%s227 + $0x20] sm:$0xf]
        %v2243 = vld [vmem:[%s227 + $0x24] sm:$0xf]
        %v2244 = vld [vmem:[%s227 + $0x28] sm:$0xf]
        %v2245 = vld [vmem:[%s227 + $0x2c] sm:$0xf]
        %v2246 = vld [vmem:[%s227 + $0x30] sm:$0xf]
        %v2247 = vld [vmem:[%s227 + $0x34] sm:$0xf]
        %v2248 = vld [vmem:[%s227 + $0x38] sm:$0xf]
        %v2249 = vld [vmem:[%s227 + $0x3c] sm:$0xf]
        %v2250 = vld [vmem:[%s227 + $0x40] sm:$0xf]
        %v2251 = vld [vmem:[%s227 + $0x44] sm:$0xf]
        %v2252 = vld [vmem:[%s227 + $0x48] sm:$0xf]
        %v2253 = vld [vmem:[%s227 + $0x4c] sm:$0xf]
        %v2254 = vld [vmem:[%s227 + $0x50] sm:$0xf]
        %v2255 = vld [vmem:[%s227 + $0x54] sm:$0xf]
        %v2256 = vld [vmem:[%s227 + $0x58] sm:$0xf]
        %v2257 = vld [vmem:[%s227 + $0x5c] sm:$0xf]
        %v2258 = vld [vmem:[%s227 + $0x60] sm:$0xf]
        %v2259 = vld [vmem:[%s227 + $0x64] sm:$0xf]
        %v2260 = vld [vmem:[%s227 + $0x68] sm:$0xf]
        %v2261 = vld [vmem:[%s227 + $0x6c] sm:$0xf]
        %v2262 = vld [vmem:[%s227 + $0x70] sm:$0xf]
        %v2263 = vld [vmem:[%s227 + $0x74] sm:$0xf]
        %v2264 = vld [vmem:[%s227 + $0x78] sm:$0xf]
        %v2265 = vld [vmem:[%s227 + $0x7c] sm:$0xf]
        %v2266 = vld [vmem:[%s227 + $0x80] sm:$0xf]
        %v2267 = vld [vmem:[%s227 + $0x84] sm:$0x1]
        %s2268 = scalar_lea.vmem %s230, 9
        %v2269 = vld [vmem:[%s2268] sm:$0x1]
        %v2270 = vunpack.c.l.bf16 %v2235
        %v2271 = vunpack.c.l.bf16 %v2236
        %v2272 = vunpack.c.l.bf16 %v2237
        %v2273 = vunpack.c.l.bf16 %v2238
        %v2274 = vunpack.c.l.bf16 %v2239
        %v2275 = vunpack.c.l.bf16 %v2240
        %v2276 = vunpack.c.l.bf16 %v2241
        %v2277 = vunpack.c.l.bf16 %v2242
        %v2278 = vunpack.c.l.bf16 %v2243
        %v2279 = vunpack.c.l.bf16 %v2244
        %v2280 = vunpack.c.l.bf16 %v2245
        %v2281 = vunpack.c.l.bf16 %v2246
        %v2282 = vunpack.c.l.bf16 %v2247
        %v2283 = vunpack.c.l.bf16 %v2248
        %v2284 = vunpack.c.l.bf16 %v2249
        %v2285 = vunpack.c.l.bf16 %v2250
        %v2286 = vunpack.c.l.bf16 %v2251
        %v2287 = vunpack.c.l.bf16 %v2252
        %v2288 = vunpack.c.l.bf16 %v2253
        %v2289 = vunpack.c.l.bf16 %v2254
        %v2290 = vunpack.c.l.bf16 %v2255
        %v2291 = vunpack.c.l.bf16 %v2256
        %v2292 = vunpack.c.l.bf16 %v2257
        %v2293 = vunpack.c.l.bf16 %v2258
        %v2294 = vunpack.c.l.bf16 %v2259
        %v2295 = vunpack.c.l.bf16 %v2260
        %v2296 = vunpack.c.l.bf16 %v2261
        %v2297 = vunpack.c.l.bf16 %v2262
        %v2298 = vunpack.c.l.bf16 %v2263
        %v2299 = vunpack.c.l.bf16 %v2264
        %v2300 = vunpack.c.l.bf16 %v2265
        %v2301 = vunpack.c.l.bf16 %v2266
        %v2302 = vunpack.c.l.bf16 %v2267
        %v2303 = vunpack.c.l.bf16 %v2269
        %2305 = vset.pattern.permute.xlu0 0
        %2306 = vperm.xlu0 %2305, %v2270
        %v2307 = vpop.permute.xlu0 %2306
        %2310 = vset.pattern.permute.xlu0 0
        %2311 = vperm.xlu0 %2310, %v2271
        %v2312 = vpop.permute.xlu0 %2311
        %2315 = vset.pattern.permute.xlu0 0
        %2316 = vperm.xlu0 %2315, %v2272
        %v2317 = vpop.permute.xlu0 %2316
        %2320 = vset.pattern.permute.xlu0 0
        %2321 = vperm.xlu0 %2320, %v2273
        %v2322 = vpop.permute.xlu0 %2321
        %2325 = vset.pattern.permute.xlu0 0
        %2326 = vperm.xlu0 %2325, %v2274
        %v2327 = vpop.permute.xlu0 %2326
        %2330 = vset.pattern.permute.xlu0 0
        %2331 = vperm.xlu0 %2330, %v2275
        %v2332 = vpop.permute.xlu0 %2331
        %2335 = vset.pattern.permute.xlu0 0
        %2336 = vperm.xlu0 %2335, %v2276
        %v2337 = vpop.permute.xlu0 %2336
        %2340 = vset.pattern.permute.xlu0 0
        %2341 = vperm.xlu0 %2340, %v2277
        %v2342 = vpop.permute.xlu0 %2341
        %2345 = vset.pattern.permute.xlu0 0
        %2346 = vperm.xlu0 %2345, %v2278
        %v2347 = vpop.permute.xlu0 %2346
        %2350 = vset.pattern.permute.xlu0 0
        %2351 = vperm.xlu0 %2350, %v2279
        %v2352 = vpop.permute.xlu0 %2351
        %2355 = vset.pattern.permute.xlu0 0
        %2356 = vperm.xlu0 %2355, %v2280
        %v2357 = vpop.permute.xlu0 %2356
        %2360 = vset.pattern.permute.xlu0 0
        %2361 = vperm.xlu0 %2360, %v2281
        %v2362 = vpop.permute.xlu0 %2361
        %2365 = vset.pattern.permute.xlu0 0
        %2366 = vperm.xlu0 %2365, %v2282
        %v2367 = vpop.permute.xlu0 %2366
        %2370 = vset.pattern.permute.xlu0 0
        %2371 = vperm.xlu0 %2370, %v2283
        %v2372 = vpop.permute.xlu0 %2371
        %2375 = vset.pattern.permute.xlu0 0
        %2376 = vperm.xlu0 %2375, %v2284
        %v2377 = vpop.permute.xlu0 %2376
        %2380 = vset.pattern.permute.xlu0 0
        %2381 = vperm.xlu0 %2380, %v2285
        %v2382 = vpop.permute.xlu0 %2381
        %2385 = vset.pattern.permute.xlu0 0
        %2386 = vperm.xlu0 %2385, %v2286
        %v2387 = vpop.permute.xlu0 %2386
        %2390 = vset.pattern.permute.xlu0 0
        %2391 = vperm.xlu0 %2390, %v2287
        %v2392 = vpop.permute.xlu0 %2391
        %2395 = vset.pattern.permute.xlu0 0
        %2396 = vperm.xlu0 %2395, %v2288
        %v2397 = vpop.permute.xlu0 %2396
        %2400 = vset.pattern.permute.xlu0 0
        %2401 = vperm.xlu0 %2400, %v2289
        %v2402 = vpop.permute.xlu0 %2401
        %2405 = vset.pattern.permute.xlu0 0
        %2406 = vperm.xlu0 %2405, %v2290
        %v2407 = vpop.permute.xlu0 %2406
        %2410 = vset.pattern.permute.xlu0 0
        %2411 = vperm.xlu0 %2410, %v2291
        %v2412 = vpop.permute.xlu0 %2411
        %2415 = vset.pattern.permute.xlu0 0
        %2416 = vperm.xlu0 %2415, %v2292
        %v2417 = vpop.permute.xlu0 %2416
        %2420 = vset.pattern.permute.xlu0 0
        %2421 = vperm.xlu0 %2420, %v2293
        %v2422 = vpop.permute.xlu0 %2421
        %2425 = vset.pattern.permute.xlu0 0
        %2426 = vperm.xlu0 %2425, %v2294
        %v2427 = vpop.permute.xlu0 %2426
        %2430 = vset.pattern.permute.xlu0 0
        %2431 = vperm.xlu0 %2430, %v2295
        %v2432 = vpop.permute.xlu0 %2431
        %2435 = vset.pattern.permute.xlu0 0
        %2436 = vperm.xlu0 %2435, %v2296
        %v2437 = vpop.permute.xlu0 %2436
        %2440 = vset.pattern.permute.xlu0 0
        %2441 = vperm.xlu0 %2440, %v2297
        %v2442 = vpop.permute.xlu0 %2441
        %2445 = vset.pattern.permute.xlu0 0
        %2446 = vperm.xlu0 %2445, %v2298
        %v2447 = vpop.permute.xlu0 %2446
        %2450 = vset.pattern.permute.xlu0 0
        %2451 = vperm.xlu0 %2450, %v2299
        %v2452 = vpop.permute.xlu0 %2451
        %2455 = vset.pattern.permute.xlu0 0
        %2456 = vperm.xlu0 %2455, %v2300
        %v2457 = vpop.permute.xlu0 %2456
        %2460 = vset.pattern.permute.xlu0 0
        %2461 = vperm.xlu0 %2460, %v2301
        %v2462 = vpop.permute.xlu0 %2461
        %2465 = vset.pattern.permute.xlu0 0
        %2466 = vperm.xlu0 %2465, %v2302
        %v2467 = vpop.permute.xlu0 %2466
        %v2469 = vperm.slane %v2303, 0
        %v2470 = vmul.f32 %v2307, %v2469
        %v2471 = vmul.f32 %v2312, %v2469
        %v2472 = vmul.f32 %v2317, %v2469
        %v2473 = vmul.f32 %v2322, %v2469
        %v2474 = vmul.f32 %v2327, %v2469
        %v2475 = vmul.f32 %v2332, %v2469
        %v2476 = vmul.f32 %v2337, %v2469
        %v2477 = vmul.f32 %v2342, %v2469
        %v2478 = vmul.f32 %v2347, %v2469
        %v2479 = vmul.f32 %v2352, %v2469
        %v2480 = vmul.f32 %v2357, %v2469
        %v2481 = vmul.f32 %v2362, %v2469
        %v2482 = vmul.f32 %v2367, %v2469
        %v2483 = vmul.f32 %v2372, %v2469
        %v2484 = vmul.f32 %v2377, %v2469
        %v2485 = vmul.f32 %v2382, %v2469
        %v2486 = vmul.f32 %v2387, %v2469
        %v2487 = vmul.f32 %v2392, %v2469
        %v2488 = vmul.f32 %v2397, %v2469
        %v2489 = vmul.f32 %v2402, %v2469
        %v2490 = vmul.f32 %v2407, %v2469
        %v2491 = vmul.f32 %v2412, %v2469
        %v2492 = vmul.f32 %v2417, %v2469
        %v2493 = vmul.f32 %v2422, %v2469
        %v2494 = vmul.f32 %v2427, %v2469
        %v2495 = vmul.f32 %v2432, %v2469
        %v2496 = vmul.f32 %v2437, %v2469
        %v2497 = vmul.f32 %v2442, %v2469
        %v2498 = vmul.f32 %v2447, %v2469
        %v2499 = vmul.f32 %v2452, %v2469
        %v2500 = vmul.f32 %v2457, %v2469
        %v2501 = vmul.f32 %v2462, %v2469
        %v2502 = vmul.f32 %v2467, %v2469
        %v2536 = vrot.slane %v2470, 1
        %v2537 = vrot.slane %v2471, 1
        %v2538 = vsel %vm795, %v2536, %v2537
        %v2539 = vrot.slane %v2472, 1
        %v2540 = vsel %vm795, %v2537, %v2539
        %v2541 = vrot.slane %v2473, 1
        %v2542 = vsel %vm795, %v2539, %v2541
        %v2543 = vrot.slane %v2474, 1
        %v2544 = vsel %vm795, %v2541, %v2543
        %v2545 = vrot.slane %v2475, 1
        %v2546 = vsel %vm795, %v2543, %v2545
        %v2547 = vrot.slane %v2476, 1
        %v2548 = vsel %vm795, %v2545, %v2547
        %v2549 = vrot.slane %v2477, 1
        %v2550 = vsel %vm795, %v2547, %v2549
        %v2551 = vrot.slane %v2478, 1
        %v2552 = vsel %vm795, %v2549, %v2551
        %v2553 = vrot.slane %v2479, 1
        %v2554 = vsel %vm795, %v2551, %v2553
        %v2555 = vrot.slane %v2480, 1
        %v2556 = vsel %vm795, %v2553, %v2555
        %v2557 = vrot.slane %v2481, 1
        %v2558 = vsel %vm795, %v2555, %v2557
        %v2559 = vrot.slane %v2482, 1
        %v2560 = vsel %vm795, %v2557, %v2559
        %v2561 = vrot.slane %v2483, 1
        %v2562 = vsel %vm795, %v2559, %v2561
        %v2563 = vrot.slane %v2484, 1
        %v2564 = vsel %vm795, %v2561, %v2563
        %v2565 = vrot.slane %v2485, 1
        %v2566 = vsel %vm795, %v2563, %v2565
        %v2567 = vrot.slane %v2486, 1
        %v2568 = vsel %vm795, %v2565, %v2567
        %v2569 = vrot.slane %v2487, 1
        %v2570 = vsel %vm795, %v2567, %v2569
        %v2571 = vrot.slane %v2488, 1
        %v2572 = vsel %vm795, %v2569, %v2571
        %v2573 = vrot.slane %v2489, 1
        %v2574 = vsel %vm795, %v2571, %v2573
        %v2575 = vrot.slane %v2490, 1
        %v2576 = vsel %vm795, %v2573, %v2575
        %v2577 = vrot.slane %v2491, 1
        %v2578 = vsel %vm795, %v2575, %v2577
        %v2579 = vrot.slane %v2492, 1
        %v2580 = vsel %vm795, %v2577, %v2579
        %v2581 = vrot.slane %v2493, 1
        %v2582 = vsel %vm795, %v2579, %v2581
        %v2583 = vrot.slane %v2494, 1
        %v2584 = vsel %vm795, %v2581, %v2583
        %v2585 = vrot.slane %v2495, 1
        %v2586 = vsel %vm795, %v2583, %v2585
        %v2587 = vrot.slane %v2496, 1
        %v2588 = vsel %vm795, %v2585, %v2587
        %v2589 = vrot.slane %v2497, 1
        %v2590 = vsel %vm795, %v2587, %v2589
        %v2591 = vrot.slane %v2498, 1
        %v2592 = vsel %vm795, %v2589, %v2591
        %v2593 = vrot.slane %v2499, 1
        %v2594 = vsel %vm795, %v2591, %v2593
        %v2595 = vrot.slane %v2500, 1
        %v2596 = vsel %vm795, %v2593, %v2595
        %v2597 = vrot.slane %v2501, 1
        %v2598 = vsel %vm795, %v2595, %v2597
        %v2599 = vrot.slane %v2502, 1
        %v2600 = vsel %vm795, %v2597, %v2599
        %v2633 = vadd.f32 %v2203, %v2538
        %v2634 = vadd.f32 %v2204, %v2540
        %v2635 = vadd.f32 %v2205, %v2542
        %v2636 = vadd.f32 %v2206, %v2544
        %v2637 = vadd.f32 %v2207, %v2546
        %v2638 = vadd.f32 %v2208, %v2548
        %v2639 = vadd.f32 %v2209, %v2550
        %v2640 = vadd.f32 %v2210, %v2552
        %v2641 = vadd.f32 %v2211, %v2554
        %v2642 = vadd.f32 %v2212, %v2556
        %v2643 = vadd.f32 %v2213, %v2558
        %v2644 = vadd.f32 %v2214, %v2560
        %v2645 = vadd.f32 %v2215, %v2562
        %v2646 = vadd.f32 %v2216, %v2564
        %v2647 = vadd.f32 %v2217, %v2566
        %v2648 = vadd.f32 %v2218, %v2568
        %v2649 = vadd.f32 %v2219, %v2570
        %v2650 = vadd.f32 %v2220, %v2572
        %v2651 = vadd.f32 %v2221, %v2574
        %v2652 = vadd.f32 %v2222, %v2576
        %v2653 = vadd.f32 %v2223, %v2578
        %v2654 = vadd.f32 %v2224, %v2580
        %v2655 = vadd.f32 %v2225, %v2582
        %v2656 = vadd.f32 %v2226, %v2584
        %v2657 = vadd.f32 %v2227, %v2586
        %v2658 = vadd.f32 %v2228, %v2588
        %v2659 = vadd.f32 %v2229, %v2590
        %v2660 = vadd.f32 %v2230, %v2592
        %v2661 = vadd.f32 %v2231, %v2594
        %v2662 = vadd.f32 %v2232, %v2596
        %v2663 = vadd.f32 %v2233, %v2598
        %v2664 = vadd.f32 %v2234, %v2600
        %v2665 = vld [vmem:[%s227 + $0x4] sm:$0xe]
        %s2666 = scalar_lea.vmem %s230, 10
        %v2667 = vld [vmem:[%s2666] sm:$0x1]
        %v2668 = vunpack.c.l.bf16 %v2665
        %v2669 = vunpack.c.l.bf16 %v2667
        %2671 = vset.pattern.permute.xlu0 0
        %2672 = vperm.xlu0 %2671, %v2668
        %v2673 = vpop.permute.xlu0 %2672
        %v2675 = vperm.slane %v2669, 0
        %v2676 = vmul.f32 %v2673, %v2675
        %v2677 = vmul.f32 %v2312, %v2675
        %v2678 = vmul.f32 %v2317, %v2675
        %v2679 = vmul.f32 %v2322, %v2675
        %v2680 = vmul.f32 %v2327, %v2675
        %v2681 = vmul.f32 %v2332, %v2675
        %v2682 = vmul.f32 %v2337, %v2675
        %v2683 = vmul.f32 %v2342, %v2675
        %v2684 = vmul.f32 %v2347, %v2675
        %v2685 = vmul.f32 %v2352, %v2675
        %v2686 = vmul.f32 %v2357, %v2675
        %v2687 = vmul.f32 %v2362, %v2675
        %v2688 = vmul.f32 %v2367, %v2675
        %v2689 = vmul.f32 %v2372, %v2675
        %v2690 = vmul.f32 %v2377, %v2675
        %v2691 = vmul.f32 %v2382, %v2675
        %v2692 = vmul.f32 %v2387, %v2675
        %v2693 = vmul.f32 %v2392, %v2675
        %v2694 = vmul.f32 %v2397, %v2675
        %v2695 = vmul.f32 %v2402, %v2675
        %v2696 = vmul.f32 %v2407, %v2675
        %v2697 = vmul.f32 %v2412, %v2675
        %v2698 = vmul.f32 %v2417, %v2675
        %v2699 = vmul.f32 %v2422, %v2675
        %v2700 = vmul.f32 %v2427, %v2675
        %v2701 = vmul.f32 %v2432, %v2675
        %v2702 = vmul.f32 %v2437, %v2675
        %v2703 = vmul.f32 %v2442, %v2675
        %v2704 = vmul.f32 %v2447, %v2675
        %v2705 = vmul.f32 %v2452, %v2675
        %v2706 = vmul.f32 %v2457, %v2675
        %v2707 = vmul.f32 %v2462, %v2675
        %v2708 = vmul.f32 %v2467, %v2675
        %v2742 = vrot.slane %v2676, 2
        %v2743 = vrot.slane %v2677, 2
        %v2744 = vsel %vm1002, %v2742, %v2743
        %v2745 = vrot.slane %v2678, 2
        %v2746 = vsel %vm1002, %v2743, %v2745
        %v2747 = vrot.slane %v2679, 2
        %v2748 = vsel %vm1002, %v2745, %v2747
        %v2749 = vrot.slane %v2680, 2
        %v2750 = vsel %vm1002, %v2747, %v2749
        %v2751 = vrot.slane %v2681, 2
        %v2752 = vsel %vm1002, %v2749, %v2751
        %v2753 = vrot.slane %v2682, 2
        %v2754 = vsel %vm1002, %v2751, %v2753
        %v2755 = vrot.slane %v2683, 2
        %v2756 = vsel %vm1002, %v2753, %v2755
        %v2757 = vrot.slane %v2684, 2
        %v2758 = vsel %vm1002, %v2755, %v2757
        %v2759 = vrot.slane %v2685, 2
        %v2760 = vsel %vm1002, %v2757, %v2759
        %v2761 = vrot.slane %v2686, 2
        %v2762 = vsel %vm1002, %v2759, %v2761
        %v2763 = vrot.slane %v2687, 2
        %v2764 = vsel %vm1002, %v2761, %v2763
        %v2765 = vrot.slane %v2688, 2
        %v2766 = vsel %vm1002, %v2763, %v2765
        %v2767 = vrot.slane %v2689, 2
        %v2768 = vsel %vm1002, %v2765, %v2767
        %v2769 = vrot.slane %v2690, 2
        %v2770 = vsel %vm1002, %v2767, %v2769
        %v2771 = vrot.slane %v2691, 2
        %v2772 = vsel %vm1002, %v2769, %v2771
        %v2773 = vrot.slane %v2692, 2
        %v2774 = vsel %vm1002, %v2771, %v2773
        %v2775 = vrot.slane %v2693, 2
        %v2776 = vsel %vm1002, %v2773, %v2775
        %v2777 = vrot.slane %v2694, 2
        %v2778 = vsel %vm1002, %v2775, %v2777
        %v2779 = vrot.slane %v2695, 2
        %v2780 = vsel %vm1002, %v2777, %v2779
        %v2781 = vrot.slane %v2696, 2
        %v2782 = vsel %vm1002, %v2779, %v2781
        %v2783 = vrot.slane %v2697, 2
        %v2784 = vsel %vm1002, %v2781, %v2783
        %v2785 = vrot.slane %v2698, 2
        %v2786 = vsel %vm1002, %v2783, %v2785
        %v2787 = vrot.slane %v2699, 2
        %v2788 = vsel %vm1002, %v2785, %v2787
        %v2789 = vrot.slane %v2700, 2
        %v2790 = vsel %vm1002, %v2787, %v2789
        %v2791 = vrot.slane %v2701, 2
        %v2792 = vsel %vm1002, %v2789, %v2791
        %v2793 = vrot.slane %v2702, 2
        %v2794 = vsel %vm1002, %v2791, %v2793
        %v2795 = vrot.slane %v2703, 2
        %v2796 = vsel %vm1002, %v2793, %v2795
        %v2797 = vrot.slane %v2704, 2
        %v2798 = vsel %vm1002, %v2795, %v2797
        %v2799 = vrot.slane %v2705, 2
        %v2800 = vsel %vm1002, %v2797, %v2799
        %v2801 = vrot.slane %v2706, 2
        %v2802 = vsel %vm1002, %v2799, %v2801
        %v2803 = vrot.slane %v2707, 2
        %v2804 = vsel %vm1002, %v2801, %v2803
        %v2805 = vrot.slane %v2708, 2
        %v2806 = vsel %vm1002, %v2803, %v2805
        %v2839 = vadd.f32 %v2633, %v2744
        %v2840 = vadd.f32 %v2634, %v2746
        %v2841 = vadd.f32 %v2635, %v2748
        %v2842 = vadd.f32 %v2636, %v2750
        %v2843 = vadd.f32 %v2637, %v2752
        %v2844 = vadd.f32 %v2638, %v2754
        %v2845 = vadd.f32 %v2639, %v2756
        %v2846 = vadd.f32 %v2640, %v2758
        %v2847 = vadd.f32 %v2641, %v2760
        %v2848 = vadd.f32 %v2642, %v2762
        %v2849 = vadd.f32 %v2643, %v2764
        %v2850 = vadd.f32 %v2644, %v2766
        %v2851 = vadd.f32 %v2645, %v2768
        %v2852 = vadd.f32 %v2646, %v2770
        %v2853 = vadd.f32 %v2647, %v2772
        %v2854 = vadd.f32 %v2648, %v2774
        %v2855 = vadd.f32 %v2649, %v2776
        %v2856 = vadd.f32 %v2650, %v2778
        %v2857 = vadd.f32 %v2651, %v2780
        %v2858 = vadd.f32 %v2652, %v2782
        %v2859 = vadd.f32 %v2653, %v2784
        %v2860 = vadd.f32 %v2654, %v2786
        %v2861 = vadd.f32 %v2655, %v2788
        %v2862 = vadd.f32 %v2656, %v2790
        %v2863 = vadd.f32 %v2657, %v2792
        %v2864 = vadd.f32 %v2658, %v2794
        %v2865 = vadd.f32 %v2659, %v2796
        %v2866 = vadd.f32 %v2660, %v2798
        %v2867 = vadd.f32 %v2661, %v2800
        %v2868 = vadd.f32 %v2662, %v2802
        %v2869 = vadd.f32 %v2663, %v2804
        %v2870 = vadd.f32 %v2664, %v2806
        %v2871 = vld [vmem:[%s227 + $0x84] sm:$0x3]
        %s2872 = scalar_lea.vmem %s230, 11
        %v2873 = vld [vmem:[%s2872] sm:$0x1]
        %v2874 = vunpack.c.l.bf16 %v2871
        %v2875 = vunpack.c.l.bf16 %v2873
        %2877 = vset.pattern.permute.xlu0 0
        %2878 = vperm.xlu0 %2877, %v2874
        %v2879 = vpop.permute.xlu0 %2878
        %v2881 = vperm.slane %v2875, 0
        %v2882 = vmul.f32 %v2673, %v2881
        %v2883 = vmul.f32 %v2312, %v2881
        %v2884 = vmul.f32 %v2317, %v2881
        %v2885 = vmul.f32 %v2322, %v2881
        %v2886 = vmul.f32 %v2327, %v2881
        %v2887 = vmul.f32 %v2332, %v2881
        %v2888 = vmul.f32 %v2337, %v2881
        %v2889 = vmul.f32 %v2342, %v2881
        %v2890 = vmul.f32 %v2347, %v2881
        %v2891 = vmul.f32 %v2352, %v2881
        %v2892 = vmul.f32 %v2357, %v2881
        %v2893 = vmul.f32 %v2362, %v2881
        %v2894 = vmul.f32 %v2367, %v2881
        %v2895 = vmul.f32 %v2372, %v2881
        %v2896 = vmul.f32 %v2377, %v2881
        %v2897 = vmul.f32 %v2382, %v2881
        %v2898 = vmul.f32 %v2387, %v2881
        %v2899 = vmul.f32 %v2392, %v2881
        %v2900 = vmul.f32 %v2397, %v2881
        %v2901 = vmul.f32 %v2402, %v2881
        %v2902 = vmul.f32 %v2407, %v2881
        %v2903 = vmul.f32 %v2412, %v2881
        %v2904 = vmul.f32 %v2417, %v2881
        %v2905 = vmul.f32 %v2422, %v2881
        %v2906 = vmul.f32 %v2427, %v2881
        %v2907 = vmul.f32 %v2432, %v2881
        %v2908 = vmul.f32 %v2437, %v2881
        %v2909 = vmul.f32 %v2442, %v2881
        %v2910 = vmul.f32 %v2447, %v2881
        %v2911 = vmul.f32 %v2452, %v2881
        %v2912 = vmul.f32 %v2457, %v2881
        %v2913 = vmul.f32 %v2462, %v2881
        %v2914 = vmul.f32 %v2879, %v2881
        %v2948 = vrot.slane %v2882, 3
        %v2949 = vrot.slane %v2883, 3
        %v2950 = vsel %vm1209, %v2948, %v2949
        %v2951 = vrot.slane %v2884, 3
        %v2952 = vsel %vm1209, %v2949, %v2951
        %v2953 = vrot.slane %v2885, 3
        %v2954 = vsel %vm1209, %v2951, %v2953
        %v2955 = vrot.slane %v2886, 3
        %v2956 = vsel %vm1209, %v2953, %v2955
        %v2957 = vrot.slane %v2887, 3
        %v2958 = vsel %vm1209, %v2955, %v2957
        %v2959 = vrot.slane %v2888, 3
        %v2960 = vsel %vm1209, %v2957, %v2959
        %v2961 = vrot.slane %v2889, 3
        %v2962 = vsel %vm1209, %v2959, %v2961
        %v2963 = vrot.slane %v2890, 3
        %v2964 = vsel %vm1209, %v2961, %v2963
        %v2965 = vrot.slane %v2891, 3
        %v2966 = vsel %vm1209, %v2963, %v2965
        %v2967 = vrot.slane %v2892, 3
        %v2968 = vsel %vm1209, %v2965, %v2967
        %v2969 = vrot.slane %v2893, 3
        %v2970 = vsel %vm1209, %v2967, %v2969
        %v2971 = vrot.slane %v2894, 3
        %v2972 = vsel %vm1209, %v2969, %v2971
        %v2973 = vrot.slane %v2895, 3
        %v2974 = vsel %vm1209, %v2971, %v2973
        %v2975 = vrot.slane %v2896, 3
        %v2976 = vsel %vm1209, %v2973, %v2975
        %v2977 = vrot.slane %v2897, 3
        %v2978 = vsel %vm1209, %v2975, %v2977
        %v2979 = vrot.slane %v2898, 3
        %v2980 = vsel %vm1209, %v2977, %v2979
        %v2981 = vrot.slane %v2899, 3
        %v2982 = vsel %vm1209, %v2979, %v2981
        %v2983 = vrot.slane %v2900, 3
        %v2984 = vsel %vm1209, %v2981, %v2983
        %v2985 = vrot.slane %v2901, 3
        %v2986 = vsel %vm1209, %v2983, %v2985
        %v2987 = vrot.slane %v2902, 3
        %v2988 = vsel %vm1209, %v2985, %v2987
        %v2989 = vrot.slane %v2903, 3
        %v2990 = vsel %vm1209, %v2987, %v2989
        %v2991 = vrot.slane %v2904, 3
        %v2992 = vsel %vm1209, %v2989, %v2991
        %v2993 = vrot.slane %v2905, 3
        %v2994 = vsel %vm1209, %v2991, %v2993
        %v2995 = vrot.slane %v2906, 3
        %v2996 = vsel %vm1209, %v2993, %v2995
        %v2997 = vrot.slane %v2907, 3
        %v2998 = vsel %vm1209, %v2995, %v2997
        %v2999 = vrot.slane %v2908, 3
        %v3000 = vsel %vm1209, %v2997, %v2999
        %v3001 = vrot.slane %v2909, 3
        %v3002 = vsel %vm1209, %v2999, %v3001
        %v3003 = vrot.slane %v2910, 3
        %v3004 = vsel %vm1209, %v3001, %v3003
        %v3005 = vrot.slane %v2911, 3
        %v3006 = vsel %vm1209, %v3003, %v3005
        %v3007 = vrot.slane %v2912, 3
        %v3008 = vsel %vm1209, %v3005, %v3007
        %v3009 = vrot.slane %v2913, 3
        %v3010 = vsel %vm1209, %v3007, %v3009
        %v3011 = vrot.slane %v2914, 3
        %v3012 = vsel %vm1209, %v3009, %v3011
        %v3045 = vadd.f32 %v2839, %v2950
        %v3046 = vadd.f32 %v2840, %v2952
        %v3047 = vadd.f32 %v2841, %v2954
        %v3048 = vadd.f32 %v2842, %v2956
        %v3049 = vadd.f32 %v2843, %v2958
        %v3050 = vadd.f32 %v2844, %v2960
        %v3051 = vadd.f32 %v2845, %v2962
        %v3052 = vadd.f32 %v2846, %v2964
        %v3053 = vadd.f32 %v2847, %v2966
        %v3054 = vadd.f32 %v2848, %v2968
        %v3055 = vadd.f32 %v2849, %v2970
        %v3056 = vadd.f32 %v2850, %v2972
        %v3057 = vadd.f32 %v2851, %v2974
        %v3058 = vadd.f32 %v2852, %v2976
        %v3059 = vadd.f32 %v2853, %v2978
        %v3060 = vadd.f32 %v2854, %v2980
        %v3061 = vadd.f32 %v2855, %v2982
        %v3062 = vadd.f32 %v2856, %v2984
        %v3063 = vadd.f32 %v2857, %v2986
        %v3064 = vadd.f32 %v2858, %v2988
        %v3065 = vadd.f32 %v2859, %v2990
        %v3066 = vadd.f32 %v2860, %v2992
        %v3067 = vadd.f32 %v2861, %v2994
        %v3068 = vadd.f32 %v2862, %v2996
        %v3069 = vadd.f32 %v2863, %v2998
        %v3070 = vadd.f32 %v2864, %v3000
        %v3071 = vadd.f32 %v2865, %v3002
        %v3072 = vadd.f32 %v2866, %v3004
        %v3073 = vadd.f32 %v2867, %v3006
        %v3074 = vadd.f32 %v2868, %v3008
        %v3075 = vadd.f32 %v2869, %v3010
        %v3076 = vadd.f32 %v2870, %v3012
        %v3077 = vld [vmem:[%s227 + $0x4] sm:$0xc]
        %s3078 = scalar_lea.vmem %s230, 12
        %v3079 = vld [vmem:[%s3078] sm:$0x1]
        %v3080 = vunpack.c.l.bf16 %v3077
        %v3081 = vunpack.c.l.bf16 %v3079
        %3083 = vset.pattern.permute.xlu0 0
        %3084 = vperm.xlu0 %3083, %v3080
        %v3085 = vpop.permute.xlu0 %3084
        %v3087 = vperm.slane %v3081, 0
        %v3088 = vmul.f32 %v3085, %v3087
        %v3089 = vmul.f32 %v2312, %v3087
        %v3090 = vmul.f32 %v2317, %v3087
        %v3091 = vmul.f32 %v2322, %v3087
        %v3092 = vmul.f32 %v2327, %v3087
        %v3093 = vmul.f32 %v2332, %v3087
        %v3094 = vmul.f32 %v2337, %v3087
        %v3095 = vmul.f32 %v2342, %v3087
        %v3096 = vmul.f32 %v2347, %v3087
        %v3097 = vmul.f32 %v2352, %v3087
        %v3098 = vmul.f32 %v2357, %v3087
        %v3099 = vmul.f32 %v2362, %v3087
        %v3100 = vmul.f32 %v2367, %v3087
        %v3101 = vmul.f32 %v2372, %v3087
        %v3102 = vmul.f32 %v2377, %v3087
        %v3103 = vmul.f32 %v2382, %v3087
        %v3104 = vmul.f32 %v2387, %v3087
        %v3105 = vmul.f32 %v2392, %v3087
        %v3106 = vmul.f32 %v2397, %v3087
        %v3107 = vmul.f32 %v2402, %v3087
        %v3108 = vmul.f32 %v2407, %v3087
        %v3109 = vmul.f32 %v2412, %v3087
        %v3110 = vmul.f32 %v2417, %v3087
        %v3111 = vmul.f32 %v2422, %v3087
        %v3112 = vmul.f32 %v2427, %v3087
        %v3113 = vmul.f32 %v2432, %v3087
        %v3114 = vmul.f32 %v2437, %v3087
        %v3115 = vmul.f32 %v2442, %v3087
        %v3116 = vmul.f32 %v2447, %v3087
        %v3117 = vmul.f32 %v2452, %v3087
        %v3118 = vmul.f32 %v2457, %v3087
        %v3119 = vmul.f32 %v2462, %v3087
        %v3120 = vmul.f32 %v2879, %v3087
        %v3154 = vrot.slane %v3088, 4
        %v3155 = vrot.slane %v3089, 4
        %v3156 = vsel %vm1416, %v3154, %v3155
        %v3157 = vrot.slane %v3090, 4
        %v3158 = vsel %vm1416, %v3155, %v3157
        %v3159 = vrot.slane %v3091, 4
        %v3160 = vsel %vm1416, %v3157, %v3159
        %v3161 = vrot.slane %v3092, 4
        %v3162 = vsel %vm1416, %v3159, %v3161
        %v3163 = vrot.slane %v3093, 4
        %v3164 = vsel %vm1416, %v3161, %v3163
        %v3165 = vrot.slane %v3094, 4
        %v3166 = vsel %vm1416, %v3163, %v3165
        %v3167 = vrot.slane %v3095, 4
        %v3168 = vsel %vm1416, %v3165, %v3167
        %v3169 = vrot.slane %v3096, 4
        %v3170 = vsel %vm1416, %v3167, %v3169
        %v3171 = vrot.slane %v3097, 4
        %v3172 = vsel %vm1416, %v3169, %v3171
        %v3173 = vrot.slane %v3098, 4
        %v3174 = vsel %vm1416, %v3171, %v3173
        %v3175 = vrot.slane %v3099, 4
        %v3176 = vsel %vm1416, %v3173, %v3175
        %v3177 = vrot.slane %v3100, 4
        %v3178 = vsel %vm1416, %v3175, %v3177
        %v3179 = vrot.slane %v3101, 4
        %v3180 = vsel %vm1416, %v3177, %v3179
        %v3181 = vrot.slane %v3102, 4
        %v3182 = vsel %vm1416, %v3179, %v3181
        %v3183 = vrot.slane %v3103, 4
        %v3184 = vsel %vm1416, %v3181, %v3183
        %v3185 = vrot.slane %v3104, 4
        %v3186 = vsel %vm1416, %v3183, %v3185
        %v3187 = vrot.slane %v3105, 4
        %v3188 = vsel %vm1416, %v3185, %v3187
        %v3189 = vrot.slane %v3106, 4
        %v3190 = vsel %vm1416, %v3187, %v3189
        %v3191 = vrot.slane %v3107, 4
        %v3192 = vsel %vm1416, %v3189, %v3191
        %v3193 = vrot.slane %v3108, 4
        %v3194 = vsel %vm1416, %v3191, %v3193
        %v3195 = vrot.slane %v3109, 4
        %v3196 = vsel %vm1416, %v3193, %v3195
        %v3197 = vrot.slane %v3110, 4
        %v3198 = vsel %vm1416, %v3195, %v3197
        %v3199 = vrot.slane %v3111, 4
        %v3200 = vsel %vm1416, %v3197, %v3199
        %v3201 = vrot.slane %v3112, 4
        %v3202 = vsel %vm1416, %v3199, %v3201
        %v3203 = vrot.slane %v3113, 4
        %v3204 = vsel %vm1416, %v3201, %v3203
        %v3205 = vrot.slane %v3114, 4
        %v3206 = vsel %vm1416, %v3203, %v3205
        %v3207 = vrot.slane %v3115, 4
        %v3208 = vsel %vm1416, %v3205, %v3207
        %v3209 = vrot.slane %v3116, 4
        %v3210 = vsel %vm1416, %v3207, %v3209
        %v3211 = vrot.slane %v3117, 4
        %v3212 = vsel %vm1416, %v3209, %v3211
        %v3213 = vrot.slane %v3118, 4
        %v3214 = vsel %vm1416, %v3211, %v3213
        %v3215 = vrot.slane %v3119, 4
        %v3216 = vsel %vm1416, %v3213, %v3215
        %v3217 = vrot.slane %v3120, 4
        %v3218 = vsel %vm1416, %v3215, %v3217
        %v3251 = vadd.f32 %v3045, %v3156
        %v3252 = vadd.f32 %v3046, %v3158
        %v3253 = vadd.f32 %v3047, %v3160
        %v3254 = vadd.f32 %v3048, %v3162
        %v3255 = vadd.f32 %v3049, %v3164
        %v3256 = vadd.f32 %v3050, %v3166
        %v3257 = vadd.f32 %v3051, %v3168
        %v3258 = vadd.f32 %v3052, %v3170
        %v3259 = vadd.f32 %v3053, %v3172
        %v3260 = vadd.f32 %v3054, %v3174
        %v3261 = vadd.f32 %v3055, %v3176
        %v3262 = vadd.f32 %v3056, %v3178
        %v3263 = vadd.f32 %v3057, %v3180
        %v3264 = vadd.f32 %v3058, %v3182
        %v3265 = vadd.f32 %v3059, %v3184
        %v3266 = vadd.f32 %v3060, %v3186
        %v3267 = vadd.f32 %v3061, %v3188
        %v3268 = vadd.f32 %v3062, %v3190
        %v3269 = vadd.f32 %v3063, %v3192
        %v3270 = vadd.f32 %v3064, %v3194
        %v3271 = vadd.f32 %v3065, %v3196
        %v3272 = vadd.f32 %v3066, %v3198
        %v3273 = vadd.f32 %v3067, %v3200
        %v3274 = vadd.f32 %v3068, %v3202
        %v3275 = vadd.f32 %v3069, %v3204
        %v3276 = vadd.f32 %v3070, %v3206
        %v3277 = vadd.f32 %v3071, %v3208
        %v3278 = vadd.f32 %v3072, %v3210
        %v3279 = vadd.f32 %v3073, %v3212
        %v3280 = vadd.f32 %v3074, %v3214
        %v3281 = vadd.f32 %v3075, %v3216
        %v3282 = vadd.f32 %v3076, %v3218
        %v3283 = vld [vmem:[%s227 + $0x84] sm:$0x7]
        %s3284 = scalar_lea.vmem %s230, 13
        %v3285 = vld [vmem:[%s3284] sm:$0x1]
        %v3286 = vunpack.c.l.bf16 %v3283
        %v3287 = vunpack.c.l.bf16 %v3285
        %3289 = vset.pattern.permute.xlu0 0
        %3290 = vperm.xlu0 %3289, %v3286
        %v3291 = vpop.permute.xlu0 %3290
        %v3293 = vperm.slane %v3287, 0
        %v3294 = vmul.f32 %v3085, %v3293
        %v3295 = vmul.f32 %v2312, %v3293
        %v3296 = vmul.f32 %v2317, %v3293
        %v3297 = vmul.f32 %v2322, %v3293
        %v3298 = vmul.f32 %v2327, %v3293
        %v3299 = vmul.f32 %v2332, %v3293
        %v3300 = vmul.f32 %v2337, %v3293
        %v3301 = vmul.f32 %v2342, %v3293
        %v3302 = vmul.f32 %v2347, %v3293
        %v3303 = vmul.f32 %v2352, %v3293
        %v3304 = vmul.f32 %v2357, %v3293
        %v3305 = vmul.f32 %v2362, %v3293
        %v3306 = vmul.f32 %v2367, %v3293
        %v3307 = vmul.f32 %v2372, %v3293
        %v3308 = vmul.f32 %v2377, %v3293
        %v3309 = vmul.f32 %v2382, %v3293
        %v3310 = vmul.f32 %v2387, %v3293
        %v3311 = vmul.f32 %v2392, %v3293
        %v3312 = vmul.f32 %v2397, %v3293
        %v3313 = vmul.f32 %v2402, %v3293
        %v3314 = vmul.f32 %v2407, %v3293
        %v3315 = vmul.f32 %v2412, %v3293
        %v3316 = vmul.f32 %v2417, %v3293
        %v3317 = vmul.f32 %v2422, %v3293
        %v3318 = vmul.f32 %v2427, %v3293
        %v3319 = vmul.f32 %v2432, %v3293
        %v3320 = vmul.f32 %v2437, %v3293
        %v3321 = vmul.f32 %v2442, %v3293
        %v3322 = vmul.f32 %v2447, %v3293
        %v3323 = vmul.f32 %v2452, %v3293
        %v3324 = vmul.f32 %v2457, %v3293
        %v3325 = vmul.f32 %v2462, %v3293
        %v3326 = vmul.f32 %v3291, %v3293
        %v3360 = vrot.slane %v3294, 5
        %v3361 = vrot.slane %v3295, 5
        %v3362 = vsel %vm1623, %v3360, %v3361
        %v3363 = vrot.slane %v3296, 5
        %v3364 = vsel %vm1623, %v3361, %v3363
        %v3365 = vrot.slane %v3297, 5
        %v3366 = vsel %vm1623, %v3363, %v3365
        %v3367 = vrot.slane %v3298, 5
        %v3368 = vsel %vm1623, %v3365, %v3367
        %v3369 = vrot.slane %v3299, 5
        %v3370 = vsel %vm1623, %v3367, %v3369
        %v3371 = vrot.slane %v3300, 5
        %v3372 = vsel %vm1623, %v3369, %v3371
        %v3373 = vrot.slane %v3301, 5
        %v3374 = vsel %vm1623, %v3371, %v3373
        %v3375 = vrot.slane %v3302, 5
        %v3376 = vsel %vm1623, %v3373, %v3375
        %v3377 = vrot.slane %v3303, 5
        %v3378 = vsel %vm1623, %v3375, %v3377
        %v3379 = vrot.slane %v3304, 5
        %v3380 = vsel %vm1623, %v3377, %v3379
        %v3381 = vrot.slane %v3305, 5
        %v3382 = vsel %vm1623, %v3379, %v3381
        %v3383 = vrot.slane %v3306, 5
        %v3384 = vsel %vm1623, %v3381, %v3383
        %v3385 = vrot.slane %v3307, 5
        %v3386 = vsel %vm1623, %v3383, %v3385
        %v3387 = vrot.slane %v3308, 5
        %v3388 = vsel %vm1623, %v3385, %v3387
        %v3389 = vrot.slane %v3309, 5
        %v3390 = vsel %vm1623, %v3387, %v3389
        %v3391 = vrot.slane %v3310, 5
        %v3392 = vsel %vm1623, %v3389, %v3391
        %v3393 = vrot.slane %v3311, 5
        %v3394 = vsel %vm1623, %v3391, %v3393
        %v3395 = vrot.slane %v3312, 5
        %v3396 = vsel %vm1623, %v3393, %v3395
        %v3397 = vrot.slane %v3313, 5
        %v3398 = vsel %vm1623, %v3395, %v3397
        %v3399 = vrot.slane %v3314, 5
        %v3400 = vsel %vm1623, %v3397, %v3399
        %v3401 = vrot.slane %v3315, 5
        %v3402 = vsel %vm1623, %v3399, %v3401
        %v3403 = vrot.slane %v3316, 5
        %v3404 = vsel %vm1623, %v3401, %v3403
        %v3405 = vrot.slane %v3317, 5
        %v3406 = vsel %vm1623, %v3403, %v3405
        %v3407 = vrot.slane %v3318, 5
        %v3408 = vsel %vm1623, %v3405, %v3407
        %v3409 = vrot.slane %v3319, 5
        %v3410 = vsel %vm1623, %v3407, %v3409
        %v3411 = vrot.slane %v3320, 5
        %v3412 = vsel %vm1623, %v3409, %v3411
        %v3413 = vrot.slane %v3321, 5
        %v3414 = vsel %vm1623, %v3411, %v3413
        %v3415 = vrot.slane %v3322, 5
        %v3416 = vsel %vm1623, %v3413, %v3415
        %v3417 = vrot.slane %v3323, 5
        %v3418 = vsel %vm1623, %v3415, %v3417
        %v3419 = vrot.slane %v3324, 5
        %v3420 = vsel %vm1623, %v3417, %v3419
        %v3421 = vrot.slane %v3325, 5
        %v3422 = vsel %vm1623, %v3419, %v3421
        %v3423 = vrot.slane %v3326, 5
        %v3424 = vsel %vm1623, %v3421, %v3423
        %v3457 = vadd.f32 %v3251, %v3362
        %v3458 = vadd.f32 %v3252, %v3364
        %v3459 = vadd.f32 %v3253, %v3366
        %v3460 = vadd.f32 %v3254, %v3368
        %v3461 = vadd.f32 %v3255, %v3370
        %v3462 = vadd.f32 %v3256, %v3372
        %v3463 = vadd.f32 %v3257, %v3374
        %v3464 = vadd.f32 %v3258, %v3376
        %v3465 = vadd.f32 %v3259, %v3378
        %v3466 = vadd.f32 %v3260, %v3380
        %v3467 = vadd.f32 %v3261, %v3382
        %v3468 = vadd.f32 %v3262, %v3384
        %v3469 = vadd.f32 %v3263, %v3386
        %v3470 = vadd.f32 %v3264, %v3388
        %v3471 = vadd.f32 %v3265, %v3390
        %v3472 = vadd.f32 %v3266, %v3392
        %v3473 = vadd.f32 %v3267, %v3394
        %v3474 = vadd.f32 %v3268, %v3396
        %v3475 = vadd.f32 %v3269, %v3398
        %v3476 = vadd.f32 %v3270, %v3400
        %v3477 = vadd.f32 %v3271, %v3402
        %v3478 = vadd.f32 %v3272, %v3404
        %v3479 = vadd.f32 %v3273, %v3406
        %v3480 = vadd.f32 %v3274, %v3408
        %v3481 = vadd.f32 %v3275, %v3410
        %v3482 = vadd.f32 %v3276, %v3412
        %v3483 = vadd.f32 %v3277, %v3414
        %v3484 = vadd.f32 %v3278, %v3416
        %v3485 = vadd.f32 %v3279, %v3418
        %v3486 = vadd.f32 %v3280, %v3420
        %v3487 = vadd.f32 %v3281, %v3422
        %v3488 = vadd.f32 %v3282, %v3424
        %v3489 = vld [vmem:[%s227 + $0x4] sm:$0x8]
        %s3490 = scalar_lea.vmem %s230, 14
        %v3491 = vld [vmem:[%s3490] sm:$0x1]
        %v3492 = vunpack.c.l.bf16 %v3489
        %v3493 = vunpack.c.l.bf16 %v3491
        %3495 = vset.pattern.permute.xlu0 0
        %3496 = vperm.xlu0 %3495, %v3492
        %v3497 = vpop.permute.xlu0 %3496
        %v3499 = vperm.slane %v3493, 0
        %v3500 = vmul.f32 %v3497, %v3499
        %v3501 = vmul.f32 %v2312, %v3499
        %v3502 = vmul.f32 %v2317, %v3499
        %v3503 = vmul.f32 %v2322, %v3499
        %v3504 = vmul.f32 %v2327, %v3499
        %v3505 = vmul.f32 %v2332, %v3499
        %v3506 = vmul.f32 %v2337, %v3499
        %v3507 = vmul.f32 %v2342, %v3499
        %v3508 = vmul.f32 %v2347, %v3499
        %v3509 = vmul.f32 %v2352, %v3499
        %v3510 = vmul.f32 %v2357, %v3499
        %v3511 = vmul.f32 %v2362, %v3499
        %v3512 = vmul.f32 %v2367, %v3499
        %v3513 = vmul.f32 %v2372, %v3499
        %v3514 = vmul.f32 %v2377, %v3499
        %v3515 = vmul.f32 %v2382, %v3499
        %v3516 = vmul.f32 %v2387, %v3499
        %v3517 = vmul.f32 %v2392, %v3499
        %v3518 = vmul.f32 %v2397, %v3499
        %v3519 = vmul.f32 %v2402, %v3499
        %v3520 = vmul.f32 %v2407, %v3499
        %v3521 = vmul.f32 %v2412, %v3499
        %v3522 = vmul.f32 %v2417, %v3499
        %v3523 = vmul.f32 %v2422, %v3499
        %v3524 = vmul.f32 %v2427, %v3499
        %v3525 = vmul.f32 %v2432, %v3499
        %v3526 = vmul.f32 %v2437, %v3499
        %v3527 = vmul.f32 %v2442, %v3499
        %v3528 = vmul.f32 %v2447, %v3499
        %v3529 = vmul.f32 %v2452, %v3499
        %v3530 = vmul.f32 %v2457, %v3499
        %v3531 = vmul.f32 %v2462, %v3499
        %v3532 = vmul.f32 %v3291, %v3499
        %v3566 = vrot.slane %v3500, 6
        %v3567 = vrot.slane %v3501, 6
        %v3568 = vsel %vm1830, %v3566, %v3567
        %v3569 = vrot.slane %v3502, 6
        %v3570 = vsel %vm1830, %v3567, %v3569
        %v3571 = vrot.slane %v3503, 6
        %v3572 = vsel %vm1830, %v3569, %v3571
        %v3573 = vrot.slane %v3504, 6
        %v3574 = vsel %vm1830, %v3571, %v3573
        %v3575 = vrot.slane %v3505, 6
        %v3576 = vsel %vm1830, %v3573, %v3575
        %v3577 = vrot.slane %v3506, 6
        %v3578 = vsel %vm1830, %v3575, %v3577
        %v3579 = vrot.slane %v3507, 6
        %v3580 = vsel %vm1830, %v3577, %v3579
        %v3581 = vrot.slane %v3508, 6
        %v3582 = vsel %vm1830, %v3579, %v3581
        %v3583 = vrot.slane %v3509, 6
        %v3584 = vsel %vm1830, %v3581, %v3583
        %v3585 = vrot.slane %v3510, 6
        %v3586 = vsel %vm1830, %v3583, %v3585
        %v3587 = vrot.slane %v3511, 6
        %v3588 = vsel %vm1830, %v3585, %v3587
        %v3589 = vrot.slane %v3512, 6
        %v3590 = vsel %vm1830, %v3587, %v3589
        %v3591 = vrot.slane %v3513, 6
        %v3592 = vsel %vm1830, %v3589, %v3591
        %v3593 = vrot.slane %v3514, 6
        %v3594 = vsel %vm1830, %v3591, %v3593
        %v3595 = vrot.slane %v3515, 6
        %v3596 = vsel %vm1830, %v3593, %v3595
        %v3597 = vrot.slane %v3516, 6
        %v3598 = vsel %vm1830, %v3595, %v3597
        %v3599 = vrot.slane %v3517, 6
        %v3600 = vsel %vm1830, %v3597, %v3599
        %v3601 = vrot.slane %v3518, 6
        %v3602 = vsel %vm1830, %v3599, %v3601
        %v3603 = vrot.slane %v3519, 6
        %v3604 = vsel %vm1830, %v3601, %v3603
        %v3605 = vrot.slane %v3520, 6
        %v3606 = vsel %vm1830, %v3603, %v3605
        %v3607 = vrot.slane %v3521, 6
        %v3608 = vsel %vm1830, %v3605, %v3607
        %v3609 = vrot.slane %v3522, 6
        %v3610 = vsel %vm1830, %v3607, %v3609
        %v3611 = vrot.slane %v3523, 6
        %v3612 = vsel %vm1830, %v3609, %v3611
        %v3613 = vrot.slane %v3524, 6
        %v3614 = vsel %vm1830, %v3611, %v3613
        %v3615 = vrot.slane %v3525, 6
        %v3616 = vsel %vm1830, %v3613, %v3615
        %v3617 = vrot.slane %v3526, 6
        %v3618 = vsel %vm1830, %v3615, %v3617
        %v3619 = vrot.slane %v3527, 6
        %v3620 = vsel %vm1830, %v3617, %v3619
        %v3621 = vrot.slane %v3528, 6
        %v3622 = vsel %vm1830, %v3619, %v3621
        %v3623 = vrot.slane %v3529, 6
        %v3624 = vsel %vm1830, %v3621, %v3623
        %v3625 = vrot.slane %v3530, 6
        %v3626 = vsel %vm1830, %v3623, %v3625
        %v3627 = vrot.slane %v3531, 6
        %v3628 = vsel %vm1830, %v3625, %v3627
        %v3629 = vrot.slane %v3532, 6
        %v3630 = vsel %vm1830, %v3627, %v3629
        %v3663 = vadd.f32 %v3457, %v3568
        %v3664 = vadd.f32 %v3458, %v3570
        %v3665 = vadd.f32 %v3459, %v3572
        %v3666 = vadd.f32 %v3460, %v3574
        %v3667 = vadd.f32 %v3461, %v3576
        %v3668 = vadd.f32 %v3462, %v3578
        %v3669 = vadd.f32 %v3463, %v3580
        %v3670 = vadd.f32 %v3464, %v3582
        %v3671 = vadd.f32 %v3465, %v3584
        %v3672 = vadd.f32 %v3466, %v3586
        %v3673 = vadd.f32 %v3467, %v3588
        %v3674 = vadd.f32 %v3468, %v3590
        %v3675 = vadd.f32 %v3469, %v3592
        %v3676 = vadd.f32 %v3470, %v3594
        %v3677 = vadd.f32 %v3471, %v3596
        %v3678 = vadd.f32 %v3472, %v3598
        %v3679 = vadd.f32 %v3473, %v3600
        %v3680 = vadd.f32 %v3474, %v3602
        %v3681 = vadd.f32 %v3475, %v3604
        %v3682 = vadd.f32 %v3476, %v3606
        %v3683 = vadd.f32 %v3477, %v3608
        %v3684 = vadd.f32 %v3478, %v3610
        %v3685 = vadd.f32 %v3479, %v3612
        %v3686 = vadd.f32 %v3480, %v3614
        %v3687 = vadd.f32 %v3481, %v3616
        %v3688 = vadd.f32 %v3482, %v3618
        %v3689 = vadd.f32 %v3483, %v3620
        %v3690 = vadd.f32 %v3484, %v3622
        %v3691 = vadd.f32 %v3485, %v3624
        %v3692 = vadd.f32 %v3486, %v3626
        %v3693 = vadd.f32 %v3487, %v3628
        %v3694 = vadd.f32 %v3488, %v3630
        %v3695 = vld [vmem:[%s233] sm:$0x1]
        %v3697 = vperm.slane %v3695, 0
        %v3699 = vadd.f32 %v3663, %v3697
        %v3700 = vadd.f32 %v3664, %v3697
        %v3701 = vadd.f32 %v3665, %v3697
        %v3702 = vadd.f32 %v3666, %v3697
        %v3703 = vadd.f32 %v3667, %v3697
        %v3704 = vadd.f32 %v3668, %v3697
        %v3705 = vadd.f32 %v3669, %v3697
        %v3706 = vadd.f32 %v3670, %v3697
        %v3707 = vadd.f32 %v3671, %v3697
        %v3708 = vadd.f32 %v3672, %v3697
        %v3709 = vadd.f32 %v3673, %v3697
        %v3710 = vadd.f32 %v3674, %v3697
        %v3711 = vadd.f32 %v3675, %v3697
        %v3712 = vadd.f32 %v3676, %v3697
        %v3713 = vadd.f32 %v3677, %v3697
        %v3714 = vadd.f32 %v3678, %v3697
        %v3715 = vadd.f32 %v3679, %v3697
        %v3716 = vadd.f32 %v3680, %v3697
        %v3717 = vadd.f32 %v3681, %v3697
        %v3718 = vadd.f32 %v3682, %v3697
        %v3719 = vadd.f32 %v3683, %v3697
        %v3720 = vadd.f32 %v3684, %v3697
        %v3721 = vadd.f32 %v3685, %v3697
        %v3722 = vadd.f32 %v3686, %v3697
        %v3723 = vadd.f32 %v3687, %v3697
        %v3724 = vadd.f32 %v3688, %v3697
        %v3725 = vadd.f32 %v3689, %v3697
        %v3726 = vadd.f32 %v3690, %v3697
        %v3727 = vadd.f32 %v3691, %v3697
        %v3728 = vadd.f32 %v3692, %v3697
        %v3729 = vadd.f32 %v3693, %v3697
        %v3730 = vadd.f32 %v3694, %v3697
        %vm3731 = vcmp.gt.f32.partialorder %v3699, 0.0
        %vm3732 = vcmp.gt.f32.partialorder %v3700, 0.0
        %vm3733 = vcmp.gt.f32.partialorder %v3701, 0.0
        %vm3734 = vcmp.gt.f32.partialorder %v3702, 0.0
        %vm3735 = vcmp.gt.f32.partialorder %v3703, 0.0
        %vm3736 = vcmp.gt.f32.partialorder %v3704, 0.0
        %vm3737 = vcmp.gt.f32.partialorder %v3705, 0.0
        %vm3738 = vcmp.gt.f32.partialorder %v3706, 0.0
        %vm3739 = vcmp.gt.f32.partialorder %v3707, 0.0
        %vm3740 = vcmp.gt.f32.partialorder %v3708, 0.0
        %vm3741 = vcmp.gt.f32.partialorder %v3709, 0.0
        %vm3742 = vcmp.gt.f32.partialorder %v3710, 0.0
        %vm3743 = vcmp.gt.f32.partialorder %v3711, 0.0
        %vm3744 = vcmp.gt.f32.partialorder %v3712, 0.0
        %vm3745 = vcmp.gt.f32.partialorder %v3713, 0.0
        %vm3746 = vcmp.gt.f32.partialorder %v3714, 0.0
        %vm3747 = vcmp.gt.f32.partialorder %v3715, 0.0
        %vm3748 = vcmp.gt.f32.partialorder %v3716, 0.0
        %vm3749 = vcmp.gt.f32.partialorder %v3717, 0.0
        %vm3750 = vcmp.gt.f32.partialorder %v3718, 0.0
        %vm3751 = vcmp.gt.f32.partialorder %v3719, 0.0
        %vm3752 = vcmp.gt.f32.partialorder %v3720, 0.0
        %vm3753 = vcmp.gt.f32.partialorder %v3721, 0.0
        %vm3754 = vcmp.gt.f32.partialorder %v3722, 0.0
        %vm3755 = vcmp.gt.f32.partialorder %v3723, 0.0
        %vm3756 = vcmp.gt.f32.partialorder %v3724, 0.0
        %vm3757 = vcmp.gt.f32.partialorder %v3725, 0.0
        %vm3758 = vcmp.gt.f32.partialorder %v3726, 0.0
        %vm3759 = vcmp.gt.f32.partialorder %v3727, 0.0
        %vm3760 = vcmp.gt.f32.partialorder %v3728, 0.0
        %vm3761 = vcmp.gt.f32.partialorder %v3729, 0.0
        %vm3762 = vcmp.gt.f32.partialorder %v3730, 0.0
        %v3763 = vmul.f32 %v3699, 0.1
        %v3764 = vmul.f32 %v3700, 0.1
        %v3765 = vmul.f32 %v3701, 0.1
        %v3766 = vmul.f32 %v3702, 0.1
        %v3767 = vmul.f32 %v3703, 0.1
        %v3768 = vmul.f32 %v3704, 0.1
        %v3769 = vmul.f32 %v3705, 0.1
        %v3770 = vmul.f32 %v3706, 0.1
        %v3771 = vmul.f32 %v3707, 0.1
        %v3772 = vmul.f32 %v3708, 0.1
        %v3773 = vmul.f32 %v3709, 0.1
        %v3774 = vmul.f32 %v3710, 0.1
        %v3775 = vmul.f32 %v3711, 0.1
        %v3776 = vmul.f32 %v3712, 0.1
        %v3777 = vmul.f32 %v3713, 0.1
        %v3778 = vmul.f32 %v3714, 0.1
        %v3779 = vmul.f32 %v3715, 0.1
        %v3780 = vmul.f32 %v3716, 0.1
        %v3781 = vmul.f32 %v3717, 0.1
        %v3782 = vmul.f32 %v3718, 0.1
        %v3783 = vmul.f32 %v3719, 0.1
        %v3784 = vmul.f32 %v3720, 0.1
        %v3785 = vmul.f32 %v3721, 0.1
        %v3786 = vmul.f32 %v3722, 0.1
        %v3787 = vmul.f32 %v3723, 0.1
        %v3788 = vmul.f32 %v3724, 0.1
        %v3789 = vmul.f32 %v3725, 0.1
        %v3790 = vmul.f32 %v3726, 0.1
        %v3791 = vmul.f32 %v3727, 0.1
        %v3792 = vmul.f32 %v3728, 0.1
        %v3793 = vmul.f32 %v3729, 0.1
        %v3794 = vmul.f32 %v3730, 0.1
        %v3795 = vsel %vm3731, %v3699, %v3763
        %v3796 = vsel %vm3732, %v3700, %v3764
        %v3797 = vsel %vm3733, %v3701, %v3765
        %v3798 = vsel %vm3734, %v3702, %v3766
        %v3799 = vsel %vm3735, %v3703, %v3767
        %v3800 = vsel %vm3736, %v3704, %v3768
        %v3801 = vsel %vm3737, %v3705, %v3769
        %v3802 = vsel %vm3738, %v3706, %v3770
        %v3803 = vsel %vm3739, %v3707, %v3771
        %v3804 = vsel %vm3740, %v3708, %v3772
        %v3805 = vsel %vm3741, %v3709, %v3773
        %v3806 = vsel %vm3742, %v3710, %v3774
        %v3807 = vsel %vm3743, %v3711, %v3775
        %v3808 = vsel %vm3744, %v3712, %v3776
        %v3809 = vsel %vm3745, %v3713, %v3777
        %v3810 = vsel %vm3746, %v3714, %v3778
        %v3811 = vsel %vm3747, %v3715, %v3779
        %v3812 = vsel %vm3748, %v3716, %v3780
        %v3813 = vsel %vm3749, %v3717, %v3781
        %v3814 = vsel %vm3750, %v3718, %v3782
        %v3815 = vsel %vm3751, %v3719, %v3783
        %v3816 = vsel %vm3752, %v3720, %v3784
        %v3817 = vsel %vm3753, %v3721, %v3785
        %v3818 = vsel %vm3754, %v3722, %v3786
        %v3819 = vsel %vm3755, %v3723, %v3787
        %v3820 = vsel %vm3756, %v3724, %v3788
        %v3821 = vsel %vm3757, %v3725, %v3789
        %v3822 = vsel %vm3758, %v3726, %v3790
        %v3823 = vsel %vm3759, %v3727, %v3791
        %v3824 = vsel %vm3760, %v3728, %v3792
        %v3825 = vsel %vm3761, %v3729, %v3793
        %v3826 = vsel %vm3762, %v3730, %v3794
        %3827 = vst [vmem:[%s218] sm:$0xff] %v3795
        %3828 = vst [vmem:[%s218 + $0x8] sm:$0xff] %v3796
        %3829 = vst [vmem:[%s218 + $0x10] sm:$0xff] %v3797
        %3830 = vst [vmem:[%s218 + $0x18] sm:$0xff] %v3798
        %3831 = vst [vmem:[%s218 + $0x20] sm:$0xff] %v3799
        %3832 = vst [vmem:[%s218 + $0x28] sm:$0xff] %v3800
        %3833 = vst [vmem:[%s218 + $0x30] sm:$0xff] %v3801
        %3834 = vst [vmem:[%s218 + $0x38] sm:$0xff] %v3802
        %3835 = vst [vmem:[%s218 + $0x40] sm:$0xff] %v3803
        %3836 = vst [vmem:[%s218 + $0x48] sm:$0xff] %v3804
        %3837 = vst [vmem:[%s218 + $0x50] sm:$0xff] %v3805
        %3838 = vst [vmem:[%s218 + $0x58] sm:$0xff] %v3806
        %3839 = vst [vmem:[%s218 + $0x60] sm:$0xff] %v3807
        %3840 = vst [vmem:[%s218 + $0x68] sm:$0xff] %v3808
        %3841 = vst [vmem:[%s218 + $0x70] sm:$0xff] %v3809
        %3842 = vst [vmem:[%s218 + $0x78] sm:$0xff] %v3810
        %3843 = vst [vmem:[%s218 + $0x80] sm:$0xff] %v3811
        %3844 = vst [vmem:[%s218 + $0x88] sm:$0xff] %v3812
        %3845 = vst [vmem:[%s218 + $0x90] sm:$0xff] %v3813
        %3846 = vst [vmem:[%s218 + $0x98] sm:$0xff] %v3814
        %3847 = vst [vmem:[%s218 + $0xa0] sm:$0xff] %v3815
        %3848 = vst [vmem:[%s218 + $0xa8] sm:$0xff] %v3816
        %3849 = vst [vmem:[%s218 + $0xb0] sm:$0xff] %v3817
        %3850 = vst [vmem:[%s218 + $0xb8] sm:$0xff] %v3818
        %3851 = vst [vmem:[%s218 + $0xc0] sm:$0xff] %v3819
        %3852 = vst [vmem:[%s218 + $0xc8] sm:$0xff] %v3820
        %3853 = vst [vmem:[%s218 + $0xd0] sm:$0xff] %v3821
        %3854 = vst [vmem:[%s218 + $0xd8] sm:$0xff] %v3822
        %3855 = vst [vmem:[%s218 + $0xe0] sm:$0xff] %v3823
        %3856 = vst [vmem:[%s218 + $0xe8] sm:$0xff] %v3824
        %3857 = vst [vmem:[%s218 + $0xf0] sm:$0xff] %v3825
        %3858 = vst [vmem:[%s218 + $0xf8] sm:$0xff] %v3826
        %s3859 = sand.u32 %s128, 1
        %s3860 = scalar_lea.sflag [#allocation3], %s3859
        %s3861 = sand.u32 %s128, 1
        %s3862 = smul.addr %s3861, 256
        %s3863 = scalar_lea.vmem [#allocation2], %s3862
        // Predicated region
        $region33: #{tpu_custom_call.1} parent=31 // pred_check
          %p3864 = pneg %p138
        $region34: #{tpu_custom_call.1} parent=31 // pred_check_branch
          %3866 = sbr.rel (%p3864) target = $region36
        $region35: #{tpu_custom_call.1} parent=31 // pred_region
          %s3867 = smul.u32 32, %s24
          %3869 = vsyncadd %s3860, 0
          %s3870 = sadd.s32 %s23, %s3867
          %s3871 = smul.addr %s22, 64
          %s3872 = sadd.s32 %s3870, %s3871
          %s3873 = smul.addr %s3872, 8
          %s3874 = scalar_lea.hbm %s3, %s3873
          %s3875 = sshll.u32 %s3863, 4
          %s3876 = int_to_ptr.vmem [resolvable:$true] %s3875
          %s3877 = sshll.u32 %s3874, 4
          %s3878 = int_to_ptr.hbm [resolvable:$true] %s3877
          %3883 = dma.vmem_to_hbm [thread:$0]  %s3876, 4096, %s3878, %s3860, 128, 128, 8
        $region36: #{tpu_custom_call.1} parent=31 // pred_fallthru
          _
      $region32: #{tpu_custom_call.1} parent=5 // pred_fallthru
        _
      %p3884 = scmp.le.s32.totalorder 2, %s12
      // Predicated region
      $region37: #{tpu_custom_call.1} parent=5 // pred_check
        %p3885 = pneg %p3884
      $region38: #{tpu_custom_call.1} parent=5 // pred_check_branch
        %3887 = sbr.rel (%p3885) target = $region40
      $region39: #{tpu_custom_call.1} parent=5 // pred_region
        %s3888 = ssub.s32 %s12, 2
        // Predicated region
        $region41: #{tpu_custom_call.1} parent=39 // pred_check
          %p3889 = pneg %p144
        $region42: #{tpu_custom_call.1} parent=39 // pred_check_branch
          %3891 = sbr.rel (%p3889) target = $region44
        $region43: #{tpu_custom_call.1} parent=39 // pred_region
          %s3892 = sand.u32 %s129, 1
          %s3893 = scalar_lea.sflag [#allocation3], %s3892
          %s3894 = sand.u32 %s129, 1
          %s3895 = smul.addr %s3894, 256
          %s3896 = scalar_lea.vmem [#allocation2], %s3895
          %3898 = dma.done %s3893, 4096
        $region44: #{tpu_custom_call.1} parent=39 // pred_fallthru
          _
      $region40: #{tpu_custom_call.1} parent=5 // pred_fallthru
        _
    $region6: #{tpu_custom_call.1} parent=1 // loop_footer
      %s16 = sadd.s32 1, %s12
    $region7: #{tpu_custom_call.1} parent=1 // loop_footer_branch
      %11 = sbr.rel target = $region3
    $region8: #{tpu_custom_call.1} parent=1 // loop_exit
      _
    %3899 = vsyncpa [#allocation3], 1
    %s3900 = scalar_lea.sflag [#allocation3], 1
    %3901 = vsyncpa %s3900, 1

</llo_original>
